<compile_context>
chip_gen: v6e
topology: v6e:2x2x1
jax: 0.10.0
libtpu: 0.0.40
codegen_flags: <defaults>
</compile_context>

<pallas_src>
import jax
import jax.numpy as jnp
from jax import lax
from jax.experimental import pallas as pl
from jax.experimental.pallas import tpu as pltpu

KH = KW = 5            # filter_size = 5
PAD = (KH - 1) // 2    # padding = 2
CPAD = 16              # channel padding (real channel counts are 1/10/10/5/1)
NLAYERS = 4


# ----------------------------- Pallas kernel -------------------------------

def make_fused_kernel(H, W, nb):
    WC = W * CPAD
    M = nb * H

    def kernel(x_ref, e_ref, w_ref, b_ref, out_ref, act_ref, lhs_ref):
        # x_ref  : (nb, H, W)            f32   nb images, single real input channel
        # e_ref  : (W, WC)               f32   0/1 embedding: pixel w -> lane w*CPAD
        # w_ref  : (NLAYERS, KH*WC, WC)  bf16  per-layer fused banded weights
        # b_ref  : (NLAYERS, 1, WC)      f32   per-layer bias tiled across width groups
        # out_ref: (nb, H, WC)           f32
        # act_ref: (nb, H+2*PAD, WC)     f32   height-padded activations (VMEM)
        # lhs_ref: (nb*H, KH*WC)         bf16  staged concatenated LHS (VMEM)

        # Lane-dense embedding of the input (channel 0 of each width group);
        # this value is also the residual term for the last layer.
        x0 = jnp.dot(x_ref[...].reshape(M, W), e_ref[...],
                     preferred_element_type=jnp.float32)          # (M, WC)

        # Only the 2*PAD border rows need zeroing ("same" padding along H);
        # the interior is fully overwritten right below.  No program_id gate
        # (each TensorCore has its own scratch under "parallel" semantics).
        act_ref[:, :PAD, :] = jnp.zeros((nb, PAD, WC), jnp.float32)
        act_ref[:, PAD + H:, :] = jnp.zeros((nb, PAD, WC), jnp.float32)
        act_ref[:, PAD:PAD + H, :] = x0.reshape(nb, H, WC)

        for layer in range(NLAYERS):
            # Stage the KH vertical taps side by side so the whole layer is a
            # single MXU matmul with K = KH*WC (one launch per layer instead
            # of KH, aligned LHS reads for the MXU push).
            for b in range(nb):
                for kh in range(KH):
                    lhs_ref[b * H:(b + 1) * H, kh * WC:(kh + 1) * WC] = (
                        act_ref[b, kh:kh + H, :].astype(jnp.bfloat16))
            acc = jnp.dot(lhs_ref[...], w_ref[layer],
                          preferred_element_type=jnp.float32)     # (M, WC)
            acc = acc + b_ref[layer]
            if layer < NLAYERS - 1:
                act_ref[:, PAD:PAD + H, :] = (
                    jnp.maximum(acc, 0.0).reshape(nb, H, WC))
            else:
                out_ref[...] = (acc + x0).reshape(nb, H, WC)      # x + conv4(x1)

    return kernel


# ---------------------------- parameter prep --------------------------------

def _banded_weight(w_oihw, W):
    """(Cout, Cin, KH, KW) -> (KH, W*CPAD, W*CPAD) banded matrices.

    M[kh, wi*CPAD + ci, wo*CPAD + co] = w[co, ci, kh, wi - wo + PAD]
    (zero outside the band / real channel counts), so a matmul of a padded
    row-slab (H, W*CPAD) with M[kh] performs the kw and ci contractions of
    the conv with "same" padding along W built in.
    """
    cout, cin, _, _ = w_oihw.shape
    wt = jnp.transpose(w_oihw, (2, 3, 1, 0)).astype(jnp.float32)    # (KH,KW,Cin,Cout)
    wp = jnp.zeros((KH, KW, CPAD, CPAD), jnp.float32)
    wp = wp.at[:, :, :cin, :cout].set(wt)
    wi = jnp.arange(W)[:, None]
    wo = jnp.arange(W)[None, :]
    kw = wi - wo + PAD                                              # (W, W)
    valid = ((kw >= 0) & (kw < KW)).astype(jnp.float32)
    blocks = wp[:, jnp.clip(kw, 0, KW - 1)]                         # (KH,W,W,CPAD,CPAD)
    blocks = blocks * valid[None, :, :, None, None]
    return jnp.transpose(blocks, (0, 1, 3, 2, 4)).reshape(KH, W * CPAD, W * CPAD)


def _tiled_bias(b, W):
    cout = b.shape[0]
    bp = jnp.zeros((CPAD,), jnp.float32).at[:cout].set(b)
    return jnp.tile(bp, W).reshape(1, W * CPAD)


def prepare_params(raw_params, W):
    """Build kernel-side parameter tensors once (amortized across calls)."""
    names = ("conv1", "conv2", "conv3", "conv4")
    WC = W * CPAD
    # Fused-per-layer banded weights: (NLAYERS, KH*WC, WC), bf16 (halves the
    # dominant weight DMA; accumulation stays f32 on the MXU).
    ws = jnp.stack(
        [_banded_weight(raw_params[n][0], W).reshape(KH * WC, WC) for n in names],
        axis=0).astype(jnp.bfloat16)
    bs = jnp.stack([_tiled_bias(raw_params[n][1], W) for n in names], 0)
    emb = jnp.zeros((W, WC), jnp.float32)
    emb = emb.at[jnp.arange(W), jnp.arange(W) * CPAD].set(1.0)
    return ws, bs, emb


def _pick_nb(N, H):
    """Images per grid step: target M = nb*H ~ 128 MXU rows, divide N evenly,
    and keep at least two grid steps (v7x megacore) whenever possible."""
    target = max(1, 128 // max(H, 1))
    best = 1
    for nb in range(1, N + 1):
        if N % nb:
            continue
        if nb > target:
            break
        if N >= 2 and N // nb < 2:
            continue
        best = nb
    return best


# ------------------------------ JAX wrapper ---------------------------------

def convnet3_forward(x_nchw, prepped):
    ws, bs, emb = prepped
    N, C, H, W = x_nchw.shape          # C == 1 (conv1 expects one input channel)
    assert C == 1
    WC = W * CPAD
    nb = _pick_nb(N, H)
    x_nhw = x_nchw[:, 0, :, :].astype(jnp.float32)

    flops = 2 * N * H * (NLAYERS * (KH * WC) * WC + W * WC)
    bytes_accessed = (int(ws.size) * 2 + int(emb.size) * 4 + int(bs.size) * 4
                      + N * H * W * 4 + N * H * WC * 4)

    out = pl.pallas_call(
        make_fused_kernel(H, W, nb),
        out_shape=jax.ShapeDtypeStruct((N, H, WC), jnp.float32),
        grid=(N // nb,),
        in_specs=[
            pl.BlockSpec((nb, H, W), lambda n: (n, 0, 0)),               # x (nb images)
            pl.BlockSpec((W, WC), lambda n: (0, 0)),                     # embedding
            pl.BlockSpec((NLAYERS, KH * WC, WC), lambda n: (0, 0, 0)),   # weights (bf16)
            pl.BlockSpec((NLAYERS, 1, WC), lambda n: (0, 0, 0)),         # biases
        ],
        out_specs=pl.BlockSpec((nb, H, WC), lambda n: (n, 0, 0)),
        scratch_shapes=[
            pltpu.VMEM((nb, H + 2 * PAD, WC), jnp.float32),   # padded activations
            pltpu.VMEM((nb * H, KH * WC), jnp.bfloat16),      # staged fused-K LHS
        ],
        compiler_params=pltpu.CompilerParams(
            dimension_semantics=("parallel",),
            vmem_limit_bytes=16 * 1024 * 1024),
        cost_estimate=pl.CostEstimate(flops=flops, transcendentals=0,
                                      bytes_accessed=bytes_accessed),
    )(x_nhw, emb, ws, bs)

    # Lane-dense (N, H, W*CPAD) -> NCHW (N, 1, H, W): keep real channel 0.
    out_nhwc = out.reshape(N, H, W, CPAD)
    return jnp.transpose(out_nhwc[..., :1], (0, 3, 1, 2))


# -------------------------- pure-JAX reference ------------------------------

def ref_forward(x_nchw, raw_params):
    def conv(x, w, b):
        y = lax.conv_general_dilated(
            x, w, window_strides=(1, 1), padding=[(PAD, PAD), (PAD, PAD)],
            dimension_numbers=("NCHW", "OIHW", "NCHW"))
        return y + b.reshape(1, -1, 1, 1)

    h = jax.nn.relu(conv(x_nchw, *raw_params["conv1"]))
    h = jax.nn.relu(conv(h, *raw_params["conv2"]))
    h = jax.nn.relu(conv(h, *raw_params["conv3"]))
    return x_nchw + conv(h, *raw_params["conv4"])


# ---------------------------------- main -------------------------------------

def init_conv_params(key, cout, cin):
    kw_key, b_key = jax.random.split(key)
    fan_in = cin * KH * KW
    bound = 1.0 / jnp.sqrt(fan_in)
    w = jax.random.uniform(kw_key, (cout, cin, KH, KW), jnp.float32, -bound, bound)
    b = jax.random.uniform(b_key, (cout,), jnp.float32, -bound, bound)
    return w, b


if __name__ == "__main__":
    key = jax.random.PRNGKey(0)
    k_x, k_x2, k1, k2, k3, k4 = jax.random.split(key, 6)

    n_filters = 10
    raw_params = {
        "conv1": init_conv_params(k1, n_filters, 1),
        "conv2": init_conv_params(k2, n_filters, n_filters),
        "conv3": init_conv_params(k3, n_filters // 2, n_filters),
        "conv4": init_conv_params(k4, 1, n_filters // 2),
    }

    prepped = prepare_params(raw_params, 16)   # built once, reused
    fwd = jax.jit(convnet3_forward)

    # Primary test (nb=1, 2 grid steps) + a batch-folded test (nb>1).
    for xkey, batch in ((k_x, 2), (k_x2, 8)):
        x = jax.random.normal(xkey, (batch, 1, 16, 16), jnp.float32)
        out = jax.block_until_ready(fwd(x, prepped))
        ref = jax.block_until_ready(ref_forward(x, raw_params))
        assert out.shape == ref.shape == (batch, 1, 16, 16)
        err = float(jnp.max(jnp.abs(out - ref)))
        # bf16 weights/activations with f32 accumulation -> loosened tolerance.
        assert err < 5e-2, f"max abs err {err} (batch={batch})"

    print("KERNEL_OK")
</pallas_src>

<mosaic_0001>
module attributes {stable_mosaic.version = 11 : i64} {
  func.func @kernel(%arg0: i32, %arg1: memref<1x16x16xf32, #tpu.memory_space<vmem>>, %arg2: memref<16x256xf32, #tpu.memory_space<vmem>>, %arg3: memref<4x1280x256xbf16, #tpu.memory_space<vmem>>, %arg4: memref<4x1x256xf32, #tpu.memory_space<vmem>>, %arg5: memref<1x16x256xf32, #tpu.memory_space<vmem>>, %arg6: memref<1x20x256xf32, #tpu.memory_space<vmem>>, %arg7: memref<16x1280xbf16, #tpu.memory_space<vmem>>) attributes {dimension_semantics = [#tpu.dimension_semantics<parallel>], iteration_bounds = array<i64: 2>, scalar_prefetch = 0 : i64, scratch_operands = 2 : i64, tpu.core_type = #tpu.core_type<tc>, window_params = [{transform_indices = @transform_0, window_bounds = array<i64: 1, 16, 16>}, {pipeline_mode = #tpu.pipeline_mode<synchronous>, transform_indices = @transform_1, window_bounds = array<i64: 16, 256>}, {pipeline_mode = #tpu.pipeline_mode<synchronous>, transform_indices = @transform_2, window_bounds = array<i64: 4, 1280, 256>}, {pipeline_mode = #tpu.pipeline_mode<synchronous>, transform_indices = @transform_3, window_bounds = array<i64: 4, 1, 256>}, {transform_indices = @transform_4, window_bounds = array<i64: 1, 16, 256>}]} {
    %c0 = arith.constant 0 : index
    %c0_0 = arith.constant 0 : index
    %c0_1 = arith.constant 0 : index
    %0 = vector.load %arg1[%c0, %c0_0, %c0_1] : memref<1x16x16xf32, #tpu.memory_space<vmem>>, vector<1x16x16xf32>
    %1 = vector.shape_cast %0 : vector<1x16x16xf32> to vector<16x16xf32>
    %c0_2 = arith.constant 0 : index
    %c0_3 = arith.constant 0 : index
    %2 = vector.load %arg2[%c0_2, %c0_3] : memref<16x256xf32, #tpu.memory_space<vmem>>, vector<16x256xf32>
    %cst = arith.constant dense<0.000000e+00> : vector<16x256xf32>
    %3 = tpu.matmul %1, %2, %cst {dimension_numbers = #tpu.dot_dimension_numbers<[1], [0], [0], [1], [0, 0, 1, 1], [], []>} : vector<16x16xf32>, vector<16x256xf32>, vector<16x256xf32> -> vector<16x256xf32>
    %cst_4 = arith.constant 0.000000e+00 : f32
    %4 = vector.broadcast %cst_4 : f32 to vector<1x2x256xf32>
    %c0_5 = arith.constant 0 : index
    %c0_6 = arith.constant 0 : index
    %c0_7 = arith.constant 0 : index
    %5 = vector.load %arg6[%c0_5, %c0_6, %c0_7] : memref<1x20x256xf32, #tpu.memory_space<vmem>>, vector<1x2x256xf32>
    tpu.vector_store %arg6[%c0_5, %c0_6, %c0_7], %4 {strides = array<i32>} : memref<1x20x256xf32, #tpu.memory_space<vmem>>, vector<1x2x256xf32>,
    %cst_8 = arith.constant 0.000000e+00 : f32
    %6 = vector.broadcast %cst_8 : f32 to vector<1x2x256xf32>
    %c0_9 = arith.constant 0 : index
    %c18 = arith.constant 18 : index
    %c0_10 = arith.constant 0 : index
    %7 = vector.load %arg6[%c0_9, %c18, %c0_10] : memref<1x20x256xf32, #tpu.memory_space<vmem>>, vector<1x2x256xf32>
    tpu.vector_store %arg6[%c0_9, %c18, %c0_10], %6 {strides = array<i32>} : memref<1x20x256xf32, #tpu.memory_space<vmem>>, vector<1x2x256xf32>,
    %8 = vector.shape_cast %3 : vector<16x256xf32> to vector<1x16x256xf32>
    %c0_11 = arith.constant 0 : index
    %c2 = arith.constant 2 : index
    %c0_12 = arith.constant 0 : index
    %9 = vector.load %arg6[%c0_11, %c2, %c0_12] : memref<1x20x256xf32, #tpu.memory_space<vmem>>, vector<1x16x256xf32>
    tpu.vector_store %arg6[%c0_11, %c2, %c0_12], %8 {strides = array<i32>} : memref<1x20x256xf32, #tpu.memory_space<vmem>>, vector<1x16x256xf32>,
    %c0_13 = arith.constant 0 : index
    %c0_14 = arith.constant 0 : index
    %c0_15 = arith.constant 0 : index
    %10 = vector.load %arg6[%c0_13, %c0_14, %c0_15] : memref<1x20x256xf32, #tpu.memory_space<vmem>>, vector<1x16x256xf32>
    %11 = vector.shape_cast %10 : vector<1x16x256xf32> to vector<16x256xf32>
    %12 = arith.truncf %11 : vector<16x256xf32> to vector<16x256xbf16>
    %c0_16 = arith.constant 0 : index
    %c0_17 = arith.constant 0 : index
    %13 = vector.load %arg7[%c0_16, %c0_17] : memref<16x1280xbf16, #tpu.memory_space<vmem>>, vector<16x256xbf16>
    tpu.vector_store %arg7[%c0_16, %c0_17], %12 {strides = array<i32>} : memref<16x1280xbf16, #tpu.memory_space<vmem>>, vector<16x256xbf16>,
    %c0_18 = arith.constant 0 : index
    %c1 = arith.constant 1 : index
    %c0_19 = arith.constant 0 : index
    %14 = vector.load %arg6[%c0_18, %c1, %c0_19] : memref<1x20x256xf32, #tpu.memory_space<vmem>>, vector<1x16x256xf32>
    %15 = vector.shape_cast %14 : vector<1x16x256xf32> to vector<16x256xf32>
    %16 = arith.truncf %15 : vector<16x256xf32> to vector<16x256xbf16>
    %c0_20 = arith.constant 0 : index
    %c256 = arith.constant 256 : index
    %17 = vector.load %arg7[%c0_20, %c256] : memref<16x1280xbf16, #tpu.memory_space<vmem>>, vector<16x256xbf16>
    tpu.vector_store %arg7[%c0_20, %c256], %16 {strides = array<i32>} : memref<16x1280xbf16, #tpu.memory_space<vmem>>, vector<16x256xbf16>,
    %c0_21 = arith.constant 0 : index
    %c2_22 = arith.constant 2 : index
    %c0_23 = arith.constant 0 : index
    %18 = vector.load %arg6[%c0_21, %c2_22, %c0_23] : memref<1x20x256xf32, #tpu.memory_space<vmem>>, vector<1x16x256xf32>
    %19 = vector.shape_cast %18 : vector<1x16x256xf32> to vector<16x256xf32>
    %20 = arith.truncf %19 : vector<16x256xf32> to vector<16x256xbf16>
    %c0_24 = arith.constant 0 : index
    %c512 = arith.constant 512 : index
    %21 = vector.load %arg7[%c0_24, %c512] : memref<16x1280xbf16, #tpu.memory_space<vmem>>, vector<16x256xbf16>
    tpu.vector_store %arg7[%c0_24, %c512], %20 {strides = array<i32>} : memref<16x1280xbf16, #tpu.memory_space<vmem>>, vector<16x256xbf16>,
    %c0_25 = arith.constant 0 : index
    %c3 = arith.constant 3 : index
    %c0_26 = arith.constant 0 : index
    %22 = vector.load %arg6[%c0_25, %c3, %c0_26] : memref<1x20x256xf32, #tpu.memory_space<vmem>>, vector<1x16x256xf32>
    %23 = vector.shape_cast %22 : vector<1x16x256xf32> to vector<16x256xf32>
    %24 = arith.truncf %23 : vector<16x256xf32> to vector<16x256xbf16>
    %c0_27 = arith.constant 0 : index
    %c768 = arith.constant 768 : index
    %25 = vector.load %arg7[%c0_27, %c768] : memref<16x1280xbf16, #tpu.memory_space<vmem>>, vector<16x256xbf16>
    tpu.vector_store %arg7[%c0_27, %c768], %24 {strides = array<i32>} : memref<16x1280xbf16, #tpu.memory_space<vmem>>, vector<16x256xbf16>,
    %c0_28 = arith.constant 0 : index
    %c4 = arith.constant 4 : index
    %c0_29 = arith.constant 0 : index
    %26 = vector.load %arg6[%c0_28, %c4, %c0_29] : memref<1x20x256xf32, #tpu.memory_space<vmem>>, vector<1x16x256xf32>
    %27 = vector.shape_cast %26 : vector<1x16x256xf32> to vector<16x256xf32>
    %28 = arith.truncf %27 : vector<16x256xf32> to vector<16x256xbf16>
    %c0_30 = arith.constant 0 : index
    %c1024 = arith.constant 1024 : index
    %29 = vector.load %arg7[%c0_30, %c1024] : memref<16x1280xbf16, #tpu.memory_space<vmem>>, vector<16x256xbf16>
    tpu.vector_store %arg7[%c0_30, %c1024], %28 {strides = array<i32>} : memref<16x1280xbf16, #tpu.memory_space<vmem>>, vector<16x256xbf16>,
    %c0_31 = arith.constant 0 : index
    %c0_32 = arith.constant 0 : index
    %30 = vector.load %arg7[%c0_31, %c0_32] : memref<16x1280xbf16, #tpu.memory_space<vmem>>, vector<16x1280xbf16>
    %c0_33 = arith.constant 0 : index
    %c0_34 = arith.constant 0 : index
    %c0_35 = arith.constant 0 : index
    %31 = vector.load %arg3[%c0_33, %c0_34, %c0_35] : memref<4x1280x256xbf16, #tpu.memory_space<vmem>>, vector<1x1280x256xbf16>
    %32 = vector.shape_cast %31 : vector<1x1280x256xbf16> to vector<1280x256xbf16>
    %cst_36 = arith.constant dense<0.000000e+00> : vector<16x256xf32>
    %33 = tpu.matmul %30, %32, %cst_36 {dimension_numbers = #tpu.dot_dimension_numbers<[1], [0], [0], [1], [0, 0, 1, 1], [], []>} : vector<16x1280xbf16>, vector<1280x256xbf16>, vector<16x256xf32> -> vector<16x256xf32>
    %c0_37 = arith.constant 0 : index
    %c0_38 = arith.constant 0 : index
    %c0_39 = arith.constant 0 : index
    %34 = vector.load %arg4[%c0_37, %c0_38, %c0_39] : memref<4x1x256xf32, #tpu.memory_space<vmem>>, vector<1x1x256xf32>
    %35 = vector.shape_cast %34 : vector<1x1x256xf32> to vector<1x256xf32>
    %36 = vector.broadcast %35 : vector<1x256xf32> to vector<16x256xf32>
    %37 = arith.addf %33, %36 : vector<16x256xf32>
    %cst_40 = arith.constant 0.000000e+00 : f32
    %38 = vector.broadcast %cst_40 : f32 to vector<16x256xf32>
    %39 = arith.maximumf %37, %38 : vector<16x256xf32>
    %40 = vector.shape_cast %39 : vector<16x256xf32> to vector<1x16x256xf32>
    %c0_41 = arith.constant 0 : index
    %c2_42 = arith.constant 2 : index
    %c0_43 = arith.constant 0 : index
    %41 = vector.load %arg6[%c0_41, %c2_42, %c0_43] : memref<1x20x256xf32, #tpu.memory_space<vmem>>, vector<1x16x256xf32>
    tpu.vector_store %arg6[%c0_41, %c2_42, %c0_43], %40 {strides = array<i32>} : memref<1x20x256xf32, #tpu.memory_space<vmem>>, vector<1x16x256xf32>,
    %c0_44 = arith.constant 0 : index
    %c0_45 = arith.constant 0 : index
    %c0_46 = arith.constant 0 : index
    %42 = vector.load %arg6[%c0_44, %c0_45, %c0_46] : memref<1x20x256xf32, #tpu.memory_space<vmem>>, vector<1x16x256xf32>
    %43 = vector.shape_cast %42 : vector<1x16x256xf32> to vector<16x256xf32>
    %44 = arith.truncf %43 : vector<16x256xf32> to vector<16x256xbf16>
    %c0_47 = arith.constant 0 : index
    %c0_48 = arith.constant 0 : index
    %45 = vector.load %arg7[%c0_47, %c0_48] : memref<16x1280xbf16, #tpu.memory_space<vmem>>, vector<16x256xbf16>
    tpu.vector_store %arg7[%c0_47, %c0_48], %44 {strides = array<i32>} : memref<16x1280xbf16, #tpu.memory_space<vmem>>, vector<16x256xbf16>,
    %c0_49 = arith.constant 0 : index
    %c1_50 = arith.constant 1 : index
    %c0_51 = arith.constant 0 : index
    %46 = vector.load %arg6[%c0_49, %c1_50, %c0_51] : memref<1x20x256xf32, #tpu.memory_space<vmem>>, vector<1x16x256xf32>
    %47 = vector.shape_cast %46 : vector<1x16x256xf32> to vector<16x256xf32>
    %48 = arith.truncf %47 : vector<16x256xf32> to vector<16x256xbf16>
    %c0_52 = arith.constant 0 : index
    %c256_53 = arith.constant 256 : index
    %49 = vector.load %arg7[%c0_52, %c256_53] : memref<16x1280xbf16, #tpu.memory_space<vmem>>, vector<16x256xbf16>
    tpu.vector_store %arg7[%c0_52, %c256_53], %48 {strides = array<i32>} : memref<16x1280xbf16, #tpu.memory_space<vmem>>, vector<16x256xbf16>,
    %c0_54 = arith.constant 0 : index
    %c2_55 = arith.constant 2 : index
    %c0_56 = arith.constant 0 : index
    %50 = vector.load %arg6[%c0_54, %c2_55, %c0_56] : memref<1x20x256xf32, #tpu.memory_space<vmem>>, vector<1x16x256xf32>
    %51 = vector.shape_cast %50 : vector<1x16x256xf32> to vector<16x256xf32>
    %52 = arith.truncf %51 : vector<16x256xf32> to vector<16x256xbf16>
    %c0_57 = arith.constant 0 : index
    %c512_58 = arith.constant 512 : index
    %53 = vector.load %arg7[%c0_57, %c512_58] : memref<16x1280xbf16, #tpu.memory_space<vmem>>, vector<16x256xbf16>
    tpu.vector_store %arg7[%c0_57, %c512_58], %52 {strides = array<i32>} : memref<16x1280xbf16, #tpu.memory_space<vmem>>, vector<16x256xbf16>,
    %c0_59 = arith.constant 0 : index
    %c3_60 = arith.constant 3 : index
    %c0_61 = arith.constant 0 : index
    %54 = vector.load %arg6[%c0_59, %c3_60, %c0_61] : memref<1x20x256xf32, #tpu.memory_space<vmem>>, vector<1x16x256xf32>
    %55 = vector.shape_cast %54 : vector<1x16x256xf32> to vector<16x256xf32>
    %56 = arith.truncf %55 : vector<16x256xf32> to vector<16x256xbf16>
    %c0_62 = arith.constant 0 : index
    %c768_63 = arith.constant 768 : index
    %57 = vector.load %arg7[%c0_62, %c768_63] : memref<16x1280xbf16, #tpu.memory_space<vmem>>, vector<16x256xbf16>
    tpu.vector_store %arg7[%c0_62, %c768_63], %56 {strides = array<i32>} : memref<16x1280xbf16, #tpu.memory_space<vmem>>, vector<16x256xbf16>,
    %c0_64 = arith.constant 0 : index
    %c4_65 = arith.constant 4 : index
    %c0_66 = arith.constant 0 : index
    %58 = vector.load %arg6[%c0_64, %c4_65, %c0_66] : memref<1x20x256xf32, #tpu.memory_space<vmem>>, vector<1x16x256xf32>
    %59 = vector.shape_cast %58 : vector<1x16x256xf32> to vector<16x256xf32>
    %60 = arith.truncf %59 : vector<16x256xf32> to vector<16x256xbf16>
    %c0_67 = arith.constant 0 : index
    %c1024_68 = arith.constant 1024 : index
    %61 = vector.load %arg7[%c0_67, %c1024_68] : memref<16x1280xbf16, #tpu.memory_space<vmem>>, vector<16x256xbf16>
    tpu.vector_store %arg7[%c0_67, %c1024_68], %60 {strides = array<i32>} : memref<16x1280xbf16, #tpu.memory_space<vmem>>, vector<16x256xbf16>,
    %c0_69 = arith.constant 0 : index
    %c0_70 = arith.constant 0 : index
    %62 = vector.load %arg7[%c0_69, %c0_70] : memref<16x1280xbf16, #tpu.memory_space<vmem>>, vector<16x1280xbf16>
    %c1_71 = arith.constant 1 : index
    %c0_72 = arith.constant 0 : index
    %c0_73 = arith.constant 0 : index
    %63 = vector.load %arg3[%c1_71, %c0_72, %c0_73] : memref<4x1280x256xbf16, #tpu.memory_space<vmem>>, vector<1x1280x256xbf16>
    %64 = vector.shape_cast %63 : vector<1x1280x256xbf16> to vector<1280x256xbf16>
    %cst_74 = arith.constant dense<0.000000e+00> : vector<16x256xf32>
    %65 = tpu.matmul %62, %64, %cst_74 {dimension_numbers = #tpu.dot_dimension_numbers<[1], [0], [0], [1], [0, 0, 1, 1], [], []>} : vector<16x1280xbf16>, vector<1280x256xbf16>, vector<16x256xf32> -> vector<16x256xf32>
    %c1_75 = arith.constant 1 : index
    %c0_76 = arith.constant 0 : index
    %c0_77 = arith.constant 0 : index
    %66 = vector.load %arg4[%c1_75, %c0_76, %c0_77] : memref<4x1x256xf32, #tpu.memory_space<vmem>>, vector<1x1x256xf32>
    %67 = vector.shape_cast %66 : vector<1x1x256xf32> to vector<1x256xf32>
    %68 = vector.broadcast %67 : vector<1x256xf32> to vector<16x256xf32>
    %69 = arith.addf %65, %68 : vector<16x256xf32>
    %cst_78 = arith.constant 0.000000e+00 : f32
    %70 = vector.broadcast %cst_78 : f32 to vector<16x256xf32>
    %71 = arith.maximumf %69, %70 : vector<16x256xf32>
    %72 = vector.shape_cast %71 : vector<16x256xf32> to vector<1x16x256xf32>
    %c0_79 = arith.constant 0 : index
    %c2_80 = arith.constant 2 : index
    %c0_81 = arith.constant 0 : index
    %73 = vector.load %arg6[%c0_79, %c2_80, %c0_81] : memref<1x20x256xf32, #tpu.memory_space<vmem>>, vector<1x16x256xf32>
    tpu.vector_store %arg6[%c0_79, %c2_80, %c0_81], %72 {strides = array<i32>} : memref<1x20x256xf32, #tpu.memory_space<vmem>>, vector<1x16x256xf32>,
    %c0_82 = arith.constant 0 : index
    %c0_83 = arith.constant 0 : index
    %c0_84 = arith.constant 0 : index
    %74 = vector.load %arg6[%c0_82, %c0_83, %c0_84] : memref<1x20x256xf32, #tpu.memory_space<vmem>>, vector<1x16x256xf32>
    %75 = vector.shape_cast %74 : vector<1x16x256xf32> to vector<16x256xf32>
    %76 = arith.truncf %75 : vector<16x256xf32> to vector<16x256xbf16>
    %c0_85 = arith.constant 0 : index
    %c0_86 = arith.constant 0 : index
    %77 = vector.load %arg7[%c0_85, %c0_86] : memref<16x1280xbf16, #tpu.memory_space<vmem>>, vector<16x256xbf16>
    tpu.vector_store %arg7[%c0_85, %c0_86], %76 {strides = array<i32>} : memref<16x1280xbf16, #tpu.memory_space<vmem>>, vector<16x256xbf16>,
    %c0_87 = arith.constant 0 : index
    %c1_88 = arith.constant 1 : index
    %c0_89 = arith.constant 0 : index
    %78 = vector.load %arg6[%c0_87, %c1_88, %c0_89] : memref<1x20x256xf32, #tpu.memory_space<vmem>>, vector<1x16x256xf32>
    %79 = vector.shape_cast %78 : vector<1x16x256xf32> to vector<16x256xf32>
    %80 = arith.truncf %79 : vector<16x256xf32> to vector<16x256xbf16>
    %c0_90 = arith.constant 0 : index
    %c256_91 = arith.constant 256 : index
    %81 = vector.load %arg7[%c0_90, %c256_91] : memref<16x1280xbf16, #tpu.memory_space<vmem>>, vector<16x256xbf16>
    tpu.vector_store %arg7[%c0_90, %c256_91], %80 {strides = array<i32>} : memref<16x1280xbf16, #tpu.memory_space<vmem>>, vector<16x256xbf16>,
    %c0_92 = arith.constant 0 : index
    %c2_93 = arith.constant 2 : index
    %c0_94 = arith.constant 0 : index
    %82 = vector.load %arg6[%c0_92, %c2_93, %c0_94] : memref<1x20x256xf32, #tpu.memory_space<vmem>>, vector<1x16x256xf32>
    %83 = vector.shape_cast %82 : vector<1x16x256xf32> to vector<16x256xf32>
    %84 = arith.truncf %83 : vector<16x256xf32> to vector<16x256xbf16>
    %c0_95 = arith.constant 0 : index
    %c512_96 = arith.constant 512 : index
    %85 = vector.load %arg7[%c0_95, %c512_96] : memref<16x1280xbf16, #tpu.memory_space<vmem>>, vector<16x256xbf16>
    tpu.vector_store %arg7[%c0_95, %c512_96], %84 {strides = array<i32>} : memref<16x1280xbf16, #tpu.memory_space<vmem>>, vector<16x256xbf16>,
    %c0_97 = arith.constant 0 : index
    %c3_98 = arith.constant 3 : index
    %c0_99 = arith.constant 0 : index
    %86 = vector.load %arg6[%c0_97, %c3_98, %c0_99] : memref<1x20x256xf32, #tpu.memory_space<vmem>>, vector<1x16x256xf32>
    %87 = vector.shape_cast %86 : vector<1x16x256xf32> to vector<16x256xf32>
    %88 = arith.truncf %87 : vector<16x256xf32> to vector<16x256xbf16>
    %c0_100 = arith.constant 0 : index
    %c768_101 = arith.constant 768 : index
    %89 = vector.load %arg7[%c0_100, %c768_101] : memref<16x1280xbf16, #tpu.memory_space<vmem>>, vector<16x256xbf16>
    tpu.vector_store %arg7[%c0_100, %c768_101], %88 {strides = array<i32>} : memref<16x1280xbf16, #tpu.memory_space<vmem>>, vector<16x256xbf16>,
    %c0_102 = arith.constant 0 : index
    %c4_103 = arith.constant 4 : index
    %c0_104 = arith.constant 0 : index
    %90 = vector.load %arg6[%c0_102, %c4_103, %c0_104] : memref<1x20x256xf32, #tpu.memory_space<vmem>>, vector<1x16x256xf32>
    %91 = vector.shape_cast %90 : vector<1x16x256xf32> to vector<16x256xf32>
    %92 = arith.truncf %91 : vector<16x256xf32> to vector<16x256xbf16>
    %c0_105 = arith.constant 0 : index
    %c1024_106 = arith.constant 1024 : index
    %93 = vector.load %arg7[%c0_105, %c1024_106] : memref<16x1280xbf16, #tpu.memory_space<vmem>>, vector<16x256xbf16>
    tpu.vector_store %arg7[%c0_105, %c1024_106], %92 {strides = array<i32>} : memref<16x1280xbf16, #tpu.memory_space<vmem>>, vector<16x256xbf16>,
    %c0_107 = arith.constant 0 : index
    %c0_108 = arith.constant 0 : index
    %94 = vector.load %arg7[%c0_107, %c0_108] : memref<16x1280xbf16, #tpu.memory_space<vmem>>, vector<16x1280xbf16>
    %c2_109 = arith.constant 2 : index
    %c0_110 = arith.constant 0 : index
    %c0_111 = arith.constant 0 : index
    %95 = vector.load %arg3[%c2_109, %c0_110, %c0_111] : memref<4x1280x256xbf16, #tpu.memory_space<vmem>>, vector<1x1280x256xbf16>
    %96 = vector.shape_cast %95 : vector<1x1280x256xbf16> to vector<1280x256xbf16>
    %cst_112 = arith.constant dense<0.000000e+00> : vector<16x256xf32>
    %97 = tpu.matmul %94, %96, %cst_112 {dimension_numbers = #tpu.dot_dimension_numbers<[1], [0], [0], [1], [0, 0, 1, 1], [], []>} : vector<16x1280xbf16>, vector<1280x256xbf16>, vector<16x256xf32> -> vector<16x256xf32>
    %c2_113 = arith.constant 2 : index
    %c0_114 = arith.constant 0 : index
    %c0_115 = arith.constant 0 : index
    %98 = vector.load %arg4[%c2_113, %c0_114, %c0_115] : memref<4x1x256xf32, #tpu.memory_space<vmem>>, vector<1x1x256xf32>
    %99 = vector.shape_cast %98 : vector<1x1x256xf32> to vector<1x256xf32>
    %100 = vector.broadcast %99 : vector<1x256xf32> to vector<16x256xf32>
    %101 = arith.addf %97, %100 : vector<16x256xf32>
    %cst_116 = arith.constant 0.000000e+00 : f32
    %102 = vector.broadcast %cst_116 : f32 to vector<16x256xf32>
    %103 = arith.maximumf %101, %102 : vector<16x256xf32>
    %104 = vector.shape_cast %103 : vector<16x256xf32> to vector<1x16x256xf32>
    %c0_117 = arith.constant 0 : index
    %c2_118 = arith.constant 2 : index
    %c0_119 = arith.constant 0 : index
    %105 = vector.load %arg6[%c0_117, %c2_118, %c0_119] : memref<1x20x256xf32, #tpu.memory_space<vmem>>, vector<1x16x256xf32>
    tpu.vector_store %arg6[%c0_117, %c2_118, %c0_119], %104 {strides = array<i32>} : memref<1x20x256xf32, #tpu.memory_space<vmem>>, vector<1x16x256xf32>,
    %c0_120 = arith.constant 0 : index
    %c0_121 = arith.constant 0 : index
    %c0_122 = arith.constant 0 : index
    %106 = vector.load %arg6[%c0_120, %c0_121, %c0_122] : memref<1x20x256xf32, #tpu.memory_space<vmem>>, vector<1x16x256xf32>
    %107 = vector.shape_cast %106 : vector<1x16x256xf32> to vector<16x256xf32>
    %108 = arith.truncf %107 : vector<16x256xf32> to vector<16x256xbf16>
    %c0_123 = arith.constant 0 : index
    %c0_124 = arith.constant 0 : index
    %109 = vector.load %arg7[%c0_123, %c0_124] : memref<16x1280xbf16, #tpu.memory_space<vmem>>, vector<16x256xbf16>
    tpu.vector_store %arg7[%c0_123, %c0_124], %108 {strides = array<i32>} : memref<16x1280xbf16, #tpu.memory_space<vmem>>, vector<16x256xbf16>,
    %c0_125 = arith.constant 0 : index
    %c1_126 = arith.constant 1 : index
    %c0_127 = arith.constant 0 : index
    %110 = vector.load %arg6[%c0_125, %c1_126, %c0_127] : memref<1x20x256xf32, #tpu.memory_space<vmem>>, vector<1x16x256xf32>
    %111 = vector.shape_cast %110 : vector<1x16x256xf32> to vector<16x256xf32>
    %112 = arith.truncf %111 : vector<16x256xf32> to vector<16x256xbf16>
    %c0_128 = arith.constant 0 : index
    %c256_129 = arith.constant 256 : index
    %113 = vector.load %arg7[%c0_128, %c256_129] : memref<16x1280xbf16, #tpu.memory_space<vmem>>, vector<16x256xbf16>
    tpu.vector_store %arg7[%c0_128, %c256_129], %112 {strides = array<i32>} : memref<16x1280xbf16, #tpu.memory_space<vmem>>, vector<16x256xbf16>,
    %c0_130 = arith.constant 0 : index
    %c2_131 = arith.constant 2 : index
    %c0_132 = arith.constant 0 : index
    %114 = vector.load %arg6[%c0_130, %c2_131, %c0_132] : memref<1x20x256xf32, #tpu.memory_space<vmem>>, vector<1x16x256xf32>
    %115 = vector.shape_cast %114 : vector<1x16x256xf32> to vector<16x256xf32>
    %116 = arith.truncf %115 : vector<16x256xf32> to vector<16x256xbf16>
    %c0_133 = arith.constant 0 : index
    %c512_134 = arith.constant 512 : index
    %117 = vector.load %arg7[%c0_133, %c512_134] : memref<16x1280xbf16, #tpu.memory_space<vmem>>, vector<16x256xbf16>
    tpu.vector_store %arg7[%c0_133, %c512_134], %116 {strides = array<i32>} : memref<16x1280xbf16, #tpu.memory_space<vmem>>, vector<16x256xbf16>,
    %c0_135 = arith.constant 0 : index
    %c3_136 = arith.constant 3 : index
    %c0_137 = arith.constant 0 : index
    %118 = vector.load %arg6[%c0_135, %c3_136, %c0_137] : memref<1x20x256xf32, #tpu.memory_space<vmem>>, vector<1x16x256xf32>
    %119 = vector.shape_cast %118 : vector<1x16x256xf32> to vector<16x256xf32>
    %120 = arith.truncf %119 : vector<16x256xf32> to vector<16x256xbf16>
    %c0_138 = arith.constant 0 : index
    %c768_139 = arith.constant 768 : index
    %121 = vector.load %arg7[%c0_138, %c768_139] : memref<16x1280xbf16, #tpu.memory_space<vmem>>, vector<16x256xbf16>
    tpu.vector_store %arg7[%c0_138, %c768_139], %120 {strides = array<i32>} : memref<16x1280xbf16, #tpu.memory_space<vmem>>, vector<16x256xbf16>,
    %c0_140 = arith.constant 0 : index
    %c4_141 = arith.constant 4 : index
    %c0_142 = arith.constant 0 : index
    %122 = vector.load %arg6[%c0_140, %c4_141, %c0_142] : memref<1x20x256xf32, #tpu.memory_space<vmem>>, vector<1x16x256xf32>
    %123 = vector.shape_cast %122 : vector<1x16x256xf32> to vector<16x256xf32>
    %124 = arith.truncf %123 : vector<16x256xf32> to vector<16x256xbf16>
    %c0_143 = arith.constant 0 : index
    %c1024_144 = arith.constant 1024 : index
    %125 = vector.load %arg7[%c0_143, %c1024_144] : memref<16x1280xbf16, #tpu.memory_space<vmem>>, vector<16x256xbf16>
    tpu.vector_store %arg7[%c0_143, %c1024_144], %124 {strides = array<i32>} : memref<16x1280xbf16, #tpu.memory_space<vmem>>, vector<16x256xbf16>,
    %c0_145 = arith.constant 0 : index
    %c0_146 = arith.constant 0 : index
    %126 = vector.load %arg7[%c0_145, %c0_146] : memref<16x1280xbf16, #tpu.memory_space<vmem>>, vector<16x1280xbf16>
    %c3_147 = arith.constant 3 : index
    %c0_148 = arith.constant 0 : index
    %c0_149 = arith.constant 0 : index
    %127 = vector.load %arg3[%c3_147, %c0_148, %c0_149] : memref<4x1280x256xbf16, #tpu.memory_space<vmem>>, vector<1x1280x256xbf16>
    %128 = vector.shape_cast %127 : vector<1x1280x256xbf16> to vector<1280x256xbf16>
    %cst_150 = arith.constant dense<0.000000e+00> : vector<16x256xf32>
    %129 = tpu.matmul %126, %128, %cst_150 {dimension_numbers = #tpu.dot_dimension_numbers<[1], [0], [0], [1], [0, 0, 1, 1], [], []>} : vector<16x1280xbf16>, vector<1280x256xbf16>, vector<16x256xf32> -> vector<16x256xf32>
    %c3_151 = arith.constant 3 : index
    %c0_152 = arith.constant 0 : index
    %c0_153 = arith.constant 0 : index
    %130 = vector.load %arg4[%c3_151, %c0_152, %c0_153] : memref<4x1x256xf32, #tpu.memory_space<vmem>>, vector<1x1x256xf32>
    %131 = vector.shape_cast %130 : vector<1x1x256xf32> to vector<1x256xf32>
    %132 = vector.broadcast %131 : vector<1x256xf32> to vector<16x256xf32>
    %133 = arith.addf %129, %132 : vector<16x256xf32>
    %134 = arith.addf %133, %3 : vector<16x256xf32>
    %135 = vector.shape_cast %134 : vector<16x256xf32> to vector<1x16x256xf32>
    %c0_154 = arith.constant 0 : index
    %c0_155 = arith.constant 0 : index
    %c0_156 = arith.constant 0 : index
    %136 = vector.load %arg5[%c0_154, %c0_155, %c0_156] : memref<1x16x256xf32, #tpu.memory_space<vmem>>, vector<1x16x256xf32>
    tpu.vector_store %arg5[%c0_154, %c0_155, %c0_156], %135 {strides = array<i32>} : memref<1x16x256xf32, #tpu.memory_space<vmem>>, vector<1x16x256xf32>,
    return
  }
  func.func @transform_0(%arg0: i32) -> (i32, i32, i32) {
    %c0_i32 = arith.constant 0 : i32
    %c0_i32_0 = arith.constant 0 : i32
    %c0_i32_1 = arith.constant 0 : i32
    return %arg0, %c0_i32, %c0_i32_0 : i32, i32, i32
  }
  func.func @transform_1(%arg0: i32) -> (i32, i32) {
    %c0_i32 = arith.constant 0 : i32
    %c0_i32_0 = arith.constant 0 : i32
    %c0_i32_1 = arith.constant 0 : i32
    return %c0_i32, %c0_i32_0 : i32, i32
  }
  func.func @transform_2(%arg0: i32) -> (i32, i32, i32) {
    %c0_i32 = arith.constant 0 : i32
    %c0_i32_0 = arith.constant 0 : i32
    %c0_i32_1 = arith.constant 0 : i32
    %c0_i32_2 = arith.constant 0 : i32
    return %c0_i32, %c0_i32_0, %c0_i32_1 : i32, i32, i32
  }
  func.func @transform_3(%arg0: i32) -> (i32, i32, i32) {
    %c0_i32 = arith.constant 0 : i32
    %c0_i32_0 = arith.constant 0 : i32
    %c0_i32_1 = arith.constant 0 : i32
    %c0_i32_2 = arith.constant 0 : i32
    return %c0_i32, %c0_i32_0, %c0_i32_1 : i32, i32, i32
  }
  func.func @transform_4(%arg0: i32) -> (i32, i32, i32) {
    %c0_i32 = arith.constant 0 : i32
    %c0_i32_0 = arith.constant 0 : i32
    %c0_i32_1 = arith.constant 0 : i32
    return %arg0, %c0_i32, %c0_i32_0 : i32, i32, i32
  }
}

</mosaic_0001>

<llo_original>
// kernel: convnet3_forward.1
$region0: #{convnet3_forward.1}
  #allocation0 [shape = 'u32[]', space=smem, size = 0x4, offset = 0x4, fixed_abs, tag = 'smem constant byte address 0x4 - core index']
  #allocation1 [shape = 'u32[144,128]{1,0:T(1,128)}', space=vmem, size = 0x12000, scoped, tag = 'internal scratch']
  #allocation2 [shape = 'f32[1,20,256]{2,1,0:T(8,128)}', space=vmem, size = 0x6000, scoped, tag = 'scratch operand']
  #allocation3 [shape = 'bf16[16,1280]{1,0:T(8,128)(2,1)}', space=vmem, size = 0xa000, scoped, tag = 'scratch operand']
  %s0 = inlined_call_operand.hbm [shape: f32[2,16,16], index: 0, kind: input, shape index: {}]
  %s1 = inlined_call_operand.hbm [shape: f32[16,256], index: 1, kind: input, shape index: {}]
  %s2 = inlined_call_operand.hbm [shape: bf16[4,1280,256], index: 2, kind: input, shape index: {}]
  %s3 = inlined_call_operand.hbm [shape: f32[4,1,256], index: 3, kind: input, shape index: {}]
  %s4 = inlined_call_operand.vmem [shape: f32[2,16,256], index: 4, kind: output, shape index: {}]
  %s5 = sld [smem:[#allocation0]]
  $region65: #{convnet3_forward.1} parent=0
    _
  %s7 = ssub.s32 1, %s5
  %s8 = scalar_select 0, %s7, %s5
  $region1: #{convnet3_forward.1} parent=0
    #allocation4 [shape = 'u8[16384]{0}', space=vmem, size = 0x4000, scoped, tag = 'input window, operand 0']
    #allocation5 [shape = 's32[2]{0}', space=sflag, size = 0x8, scoped, tag = 'scoped memory for convnet3_forward.1']
    #allocation6 [shape = 'u8[16384]{0}', space=vmem, size = 0x4000, scoped, tag = 'input window, operand 1, single buffered']
    #allocation7 [shape = 's32[1]{0}', space=sflag, size = 0x4, scoped, tag = 'scoped memory for convnet3_forward.1']
    #allocation8 [shape = 'u8[2621440]{0}', space=vmem, size = 0x280000, scoped, tag = 'input window, operand 2, single buffered']
    #allocation9 [shape = 'u8[4096]{0}', space=vmem, size = 0x1000, scoped, tag = 'input window, operand 3, single buffered']
    #allocation10 [shape = 's32[1]{0}', space=sflag, size = 0x4, scoped, tag = 'scoped memory for convnet3_forward.1']
    %9 = vsyncpa [#allocation5], 0
    %s10 = scalar_lea.sflag [#allocation5], 1
    %11 = vsyncpa %s10, 0
    %12 = vsyncpa [#allocation7], 0
    %13 = vsyncpa [#allocation10], 0
    loop: start=0, step=1, limit=4
    $region2: #{convnet3_forward.1} parent=1 // loop_pre_header
      _
    $region3: #{convnet3_forward.1} parent=1 // loop_header
      %s15 = sphi 0, %s19
      %p16 = scmp.ge.s32.totalorder %s15, 4
      %s25 = sphi 0, %s27
      %s28 = sphi 0, %s25
      %s29 = sphi 0, %s28
      %s45 = sphi 0, %s29
      %s49 = sphi 0, %s49
      %s51 = sphi 0, %s49
      %s52 = sphi 0, %s51
      %s66 = sphi 0, %s52
      %s70 = sphi 0, %s70
      %s72 = sphi 0, %s70
      %s73 = sphi 0, %s72
      %s87 = sphi 0, %s73
      %s91 = sphi 0, %s91
      %s93 = sphi 0, %s91
      %s94 = sphi 0, %s93
      %s108 = sphi 0, %s94
      %s114 = sphi 0, %s116
      %s117 = sphi 0, %s114
      %s118 = sphi 0, %s117
      %s134 = sphi 0, %s118
    $region4: #{convnet3_forward.1} parent=1 // loop_header_branch
      %18 = sbr.rel (%p16) target = $region8
    $region5: #{convnet3_forward.1} parent=1 // loop_body
      %s20 = ssub.s32 %s15, 1
      %s21 = ssub.s32 %s15, 2
      %s22 = sadd.s32 %s15, 1
      %s23 = ssub.s32 %s15, %s22
      %p24 = scmp.eq.s32.totalorder %s23, 0
      %s26 = sadd.s32 %s25, 1
      %s27 = scalar_select %p24, %s25, %s26
      %p30 = pneg %p24
      %p31 = scmp.eq.s32.totalorder %s15, 1
      %p32 = por %p30, %p31
      %p33 = scmp.ne.s32.totalorder %s25, %s28
      %p34 = scmp.eq.s32.totalorder %s15, 0
      %p35 = por %p33, %p34
      %p36 = scmp.ne.s32.totalorder %s25, %s28
      %p37 = scmp.eq.s32.totalorder %s20, 1
      %p38 = por %p36, %p37
      %p39 = scmp.ne.s32.totalorder %s28, %s29
      %p40 = scmp.eq.s32.totalorder %s20, 0
      %p41 = por %p39, %p40
      %p42 = scmp.ne.s32.totalorder %s28, %s29
      %p43 = scmp.eq.s32.totalorder %s21, 1
      %p44 = por %p42, %p43
      %p46 = scmp.ne.s32.totalorder %s29, %s45
      %p47 = scmp.eq.s32.totalorder %s21, 0
      %p48 = por %p46, %p47
      %s50 = sadd.s32 %s49, 1
      %p53 = scmp.eq.s32.totalorder %s15, 1
      %p54 = scmp.ne.s32.totalorder %s49, %s51
      %p55 = scmp.eq.s32.totalorder %s15, 0
      %p56 = por %p54, %p55
      %p57 = scmp.ne.s32.totalorder %s49, %s51
      %p58 = scmp.eq.s32.totalorder %s20, 1
      %p59 = por %p57, %p58
      %p60 = scmp.ne.s32.totalorder %s51, %s52
      %p61 = scmp.eq.s32.totalorder %s20, 0
      %p62 = por %p60, %p61
      %p63 = scmp.ne.s32.totalorder %s51, %s52
      %p64 = scmp.eq.s32.totalorder %s21, 1
      %p65 = por %p63, %p64
      %p67 = scmp.ne.s32.totalorder %s52, %s66
      %p68 = scmp.eq.s32.totalorder %s21, 0
      %p69 = por %p67, %p68
      %s71 = sadd.s32 %s70, 1
      %p74 = scmp.eq.s32.totalorder %s15, 1
      %p75 = scmp.ne.s32.totalorder %s70, %s72
      %p76 = scmp.eq.s32.totalorder %s15, 0
      %p77 = por %p75, %p76
      %p78 = scmp.ne.s32.totalorder %s70, %s72
      %p79 = scmp.eq.s32.totalorder %s20, 1
      %p80 = por %p78, %p79
      %p81 = scmp.ne.s32.totalorder %s72, %s73
      %p82 = scmp.eq.s32.totalorder %s20, 0
      %p83 = por %p81, %p82
      %p84 = scmp.ne.s32.totalorder %s72, %s73
      %p85 = scmp.eq.s32.totalorder %s21, 1
      %p86 = por %p84, %p85
      %p88 = scmp.ne.s32.totalorder %s73, %s87
      %p89 = scmp.eq.s32.totalorder %s21, 0
      %p90 = por %p88, %p89
      %s92 = sadd.s32 %s91, 1
      %p95 = scmp.eq.s32.totalorder %s15, 1
      %p96 = scmp.ne.s32.totalorder %s91, %s93
      %p97 = scmp.eq.s32.totalorder %s15, 0
      %p98 = por %p96, %p97
      %p99 = scmp.ne.s32.totalorder %s91, %s93
      %p100 = scmp.eq.s32.totalorder %s20, 1
      %p101 = por %p99, %p100
      %p102 = scmp.ne.s32.totalorder %s93, %s94
      %p103 = scmp.eq.s32.totalorder %s20, 0
      %p104 = por %p102, %p103
      %p105 = scmp.ne.s32.totalorder %s93, %s94
      %p106 = scmp.eq.s32.totalorder %s21, 1
      %p107 = por %p105, %p106
      %p109 = scmp.ne.s32.totalorder %s94, %s108
      %p110 = scmp.eq.s32.totalorder %s21, 0
      %p111 = por %p109, %p110
      %s112 = ssub.s32 %s15, %s22
      %p113 = scmp.eq.s32.totalorder %s112, 0
      %s115 = sadd.s32 %s114, 1
      %s116 = scalar_select %p113, %s114, %s115
      %p119 = pneg %p113
      %p120 = scmp.eq.s32.totalorder %s15, 1
      %p121 = por %p119, %p120
      %p122 = scmp.ne.s32.totalorder %s114, %s117
      %p123 = scmp.eq.s32.totalorder %s15, 0
      %p124 = por %p122, %p123
      %p125 = scmp.ne.s32.totalorder %s114, %s117
      %p126 = scmp.eq.s32.totalorder %s20, 1
      %p127 = por %p125, %p126
      %p128 = scmp.ne.s32.totalorder %s117, %s118
      %p129 = scmp.eq.s32.totalorder %s20, 0
      %p130 = por %p128, %p129
      %p131 = scmp.ne.s32.totalorder %s117, %s118
      %p132 = scmp.eq.s32.totalorder %s21, 1
      %p133 = por %p131, %p132
      %p135 = scmp.ne.s32.totalorder %s118, %s134
      %p136 = scmp.eq.s32.totalorder %s21, 0
      %p137 = por %p135, %p136
      %p138 = scmp.le.s32.totalorder 1, %s15
      %p139 = scmp.lt.s32.totalorder %s15, 3
      %p140 = pnand %p138, %p139
      %p141 = pneg %p140
      // Predicated region
      $region9: #{convnet3_forward.1} parent=5 // pred_check
        _
      $region10: #{convnet3_forward.1} parent=5 // pred_check_branch
        %143 = sbr.rel (%p140) target = $region12
      $region11: #{convnet3_forward.1} parent=5 // pred_region
        %s144 = ssub.s32 %s15, 1
        // Predicated region
        $region13: #{convnet3_forward.1} parent=11 // pred_check
          %p145 = pneg %p62
        $region14: #{convnet3_forward.1} parent=11 // pred_check_branch
          %147 = sbr.rel (%p145) target = $region16
        $region15: #{convnet3_forward.1} parent=11 // pred_region
          %s149 = ssub.s32 512, 512
          %150 = vsyncadd [#allocation7], %s149
          %s151 = sshll.u32 [#allocation6], 4
          %s152 = int_to_ptr.vmem [resolvable:$true] %s151
          %157 = dma.hbm_to_vmem [thread:$0]  %s1, 512, %s152, [#allocation7], 256, 256, 16
        $region16: #{convnet3_forward.1} parent=11 // pred_fallthru
          _
        // Predicated region
        $region17: #{convnet3_forward.1} parent=11 // pred_check
          %p158 = pneg %p83
        $region18: #{convnet3_forward.1} parent=11 // pred_check_branch
          %160 = sbr.rel (%p158) target = $region20
        $region19: #{convnet3_forward.1} parent=11 // pred_region
          %s162 = ssub.s32 81920, 81920
          %163 = vsyncadd [#allocation7], %s162
          %s164 = sshll.u32 [#allocation8], 4
          %s165 = int_to_ptr.vmem [resolvable:$true] %s164
          %170 = dma.hbm_to_vmem [thread:$0]  %s2, 81920, %s165, [#allocation7], 128, 128, 8
        $region20: #{convnet3_forward.1} parent=11 // pred_fallthru
          _
        // Predicated region
        $region21: #{convnet3_forward.1} parent=11 // pred_check
          %p171 = pneg %p104
        $region22: #{convnet3_forward.1} parent=11 // pred_check_branch
          %173 = sbr.rel (%p171) target = $region24
        $region23: #{convnet3_forward.1} parent=11 // pred_region
          %s175 = ssub.s32 128, 128
          %176 = vsyncadd [#allocation10], %s175
          %s177 = sshll.u32 [#allocation9], 4
          %s178 = int_to_ptr.vmem [resolvable:$true] %s177
          %183 = dma.hbm_to_vmem [thread:$0]  %s3, 128, %s178, [#allocation10], 32, 32, 2
        $region24: #{convnet3_forward.1} parent=11 // pred_fallthru
          _
      $region12: #{convnet3_forward.1} parent=5 // pred_fallthru
        _
      %p184 = scmp.lt.s32.totalorder %s15, 2
      // Predicated region
      $region25: #{convnet3_forward.1} parent=5 // pred_check
        %p185 = pneg %p184
      $region26: #{convnet3_forward.1} parent=5 // pred_check_branch
        %187 = sbr.rel (%p185) target = $region28
      $region27: #{convnet3_forward.1} parent=5 // pred_region
        // Predicated region
        $region29: #{convnet3_forward.1} parent=27 // pred_check
          %p188 = pneg %p35
        $region30: #{convnet3_forward.1} parent=27 // pred_check_branch
          %190 = sbr.rel (%p188) target = $region32
        $region31: #{convnet3_forward.1} parent=27 // pred_region
          %s191 = sand.u32 %s25, 1
          %s192 = scalar_lea.sflag [#allocation5], %s191
          %s193 = sand.u32 %s25, 1
          %s194 = smul.addr %s193, 16
          %s195 = scalar_lea.vmem [#allocation4], %s194
          %s197 = ssub.s32 256, 256
          %198 = vsyncadd %s192, %s197
          %s199 = smul.addr %s15, 2
          %s200 = smul.addr %s199, 128
          %s201 = scalar_lea.hbm %s0, %s200
          %s202 = sshll.u32 %s195, 4
          %s203 = int_to_ptr.vmem [resolvable:$true] %s202
          %208 = dma.hbm_to_vmem [thread:$0]  %s201, 256, %s203, %s192, 128, 128, 8
        $region32: #{convnet3_forward.1} parent=27 // pred_fallthru
          _
      $region28: #{convnet3_forward.1} parent=5 // pred_fallthru
        _
      %p209 = scmp.le.s32.totalorder 1, %s15
      %p210 = scmp.lt.s32.totalorder %s15, 3
      %p211 = pnand %p209, %p210
      %p212 = pneg %p211
      // Predicated region
      $region33: #{convnet3_forward.1} parent=5 // pred_check
        _
      $region34: #{convnet3_forward.1} parent=5 // pred_check_branch
        %214 = sbr.rel (%p211) target = $region36
      $region35: #{convnet3_forward.1} parent=5 // pred_region
        %s215 = ssub.s32 %s15, 1
        %s216 = sand.u32 %s28, 1
        %s217 = scalar_lea.sflag [#allocation5], %s216
        %s218 = sand.u32 %s28, 1
        %s219 = smul.addr %s218, 16
        %s220 = scalar_lea.vmem [#allocation4], %s219
        // Predicated region
        $region37: #{convnet3_forward.1} parent=35 // pred_check
          %p221 = pneg %p41
        $region38: #{convnet3_forward.1} parent=35 // pred_check_branch
          %223 = sbr.rel (%p221) target = $region40
        $region39: #{convnet3_forward.1} parent=35 // pred_region
          %224 = dma.done %s217, 256
        $region40: #{convnet3_forward.1} parent=35 // pred_fallthru
          _
        // Predicated region
        $region41: #{convnet3_forward.1} parent=35 // pred_check
          %p225 = pneg %p62
        $region42: #{convnet3_forward.1} parent=35 // pred_check_branch
          %227 = sbr.rel (%p225) target = $region44
        $region43: #{convnet3_forward.1} parent=35 // pred_region
          %228 = dma.done [#allocation7], 512
        $region44: #{convnet3_forward.1} parent=35 // pred_fallthru
          _
        // Predicated region
        $region45: #{convnet3_forward.1} parent=35 // pred_check
          %p229 = pneg %p83
        $region46: #{convnet3_forward.1} parent=35 // pred_check_branch
          %231 = sbr.rel (%p229) target = $region48
        $region47: #{convnet3_forward.1} parent=35 // pred_region
          %232 = dma.done [#allocation7], 81920
        $region48: #{convnet3_forward.1} parent=35 // pred_fallthru
          _
        // Predicated region
        $region49: #{convnet3_forward.1} parent=35 // pred_check
          %p233 = pneg %p104
        $region50: #{convnet3_forward.1} parent=35 // pred_check_branch
          %235 = sbr.rel (%p233) target = $region52
        $region51: #{convnet3_forward.1} parent=35 // pred_region
          %236 = dma.done [#allocation10], 128
        $region52: #{convnet3_forward.1} parent=35 // pred_fallthru
          _
        %s237 = sand.u32 %s28, 1
        %s238 = scalar_lea.sflag [#allocation5], %s237
        %s239 = sand.u32 %s28, 1
        %s240 = smul.addr %s239, 16
        %s241 = scalar_lea.vmem [#allocation4], %s240
        %p242 = pneg %p41
        %p243 = pneg %p38
        %p244 = pneg %p62
        %p245 = pneg %p59
        %p246 = pneg %p83
        %p247 = pneg %p80
        %p248 = pneg %p104
        %p249 = pneg %p101
        %p250 = pneg %p130
        %p251 = pneg %p127
        %p252 = scmp.lt.s32.totalorder %s20, 1
        %s253 = scalar_select %p252, %s20, 1
        %s254 = smul.addr %s253, 4
        %s255 = smul.addr %s254, 8
        %s256 = scalar_lea.vmem %s4, %s255
        %p257 = scmp.lt.s32.totalorder %s20, 1
        %s258 = scalar_select %p257, %s20, 1
        %s259 = smul.addr %s258, 4
        %s260 = smul.addr %s259, 8
        %s261 = scalar_lea.vmem %s4, %s260
        %v262 = vld [vmem:[%s220] sm:$0xff]
        %v263 = vld [vmem:[%s220 + $0x8] sm:$0xff]
        %v264 = vld [vmem:[#allocation6] sm:$0xff]
        %v265 = vld [vmem:[#allocation6 + $0x8] sm:$0xff]
        %v266 = vld [vmem:[#allocation6 + $0x10] sm:$0xff]
        %v267 = vld [vmem:[#allocation6 + $0x18] sm:$0xff]
        %vm268 = vcmask 130048
        %v270 = vsel %vm268, %v262, 0
        %v273 = vsel %vm268, %v263, 0
        %275 = vmatprep.subr.mxu0 0.0
        %276 = vmatpush1.msra.mxu0 0.0
        %277 = vmatprep.subr.mxu0 0.0
        %278 = vmatpush1.msra.mxu0 0.0
        %279 = vmatprep.subr.mxu0 0.0
        %280 = vmatpush1.msra.mxu0 0.0
        %281 = vmatprep.subr.mxu0 0.0
        %282 = vmatpush1.msra.mxu0 0.0
        %283 = vmatprep.subr.mxu0 0.0
        %284 = vmatpush1.msra.mxu0 0.0
        %285 = vmatprep.subr.mxu0 0.0
        %286 = vmatpush1.msra.mxu0 0.0
        %287 = vmatprep.subr.mxu0 0.0
        %288 = vmatpush1.msra.mxu0 0.0
        %289 = vmatprep.subr.mxu0 0.0
        %290 = vmatpush1.msra.mxu0 0.0
        %291 = vmatprep.subr.mxu0 0.0
        %292 = vmatpush1.msra.mxu0 0.0
        %293 = vmatprep.subr.mxu0 0.0
        %294 = vmatpush1.msra.mxu0 0.0
        %295 = vmatprep.subr.mxu0 0.0
        %296 = vmatpush1.msra.mxu0 0.0
        %297 = vmatprep.subr.mxu0 0.0
        %298 = vmatpush1.msra.mxu0 0.0
        %299 = vmatprep.subr.mxu0 0.0
        %300 = vmatpush1.msra.mxu0 0.0
        %301 = vmatprep.subr.mxu0 0.0
        %302 = vmatpush1.msra.mxu0 0.0
        %303 = vmatprep.subr.mxu0 %v267
        %304 = vmatpush1.msra.mxu0 %v266
        %305 = vmatprep.subr.mxu0 %v265
        %306 = vmatpush1.msra.mxu0 %v264
        %307 = vmatprep.subr.mxu0 0.0
        %308 = vmatpush2.msra.mxu0 0.0
        %309 = vmatprep.subr.mxu0 0.0
        %310 = vmatpush2.msra.mxu0 0.0
        %311 = vmatprep.subr.mxu0 0.0
        %312 = vmatpush2.msra.mxu0 0.0
        %313 = vmatprep.subr.mxu0 0.0
        %314 = vmatpush2.msra.mxu0 0.0
        %315 = vmatprep.subr.mxu0 0.0
        %316 = vmatpush2.msra.mxu0 0.0
        %317 = vmatprep.subr.mxu0 0.0
        %318 = vmatpush2.msra.mxu0 0.0
        %319 = vmatprep.subr.mxu0 0.0
        %320 = vmatpush2.msra.mxu0 0.0
        %321 = vmatprep.subr.mxu0 0.0
        %322 = vmatpush2.msra.mxu0 0.0
        %323 = vmatprep.subr.mxu0 0.0
        %324 = vmatpush2.msra.mxu0 0.0
        %325 = vmatprep.subr.mxu0 0.0
        %326 = vmatpush2.msra.mxu0 0.0
        %327 = vmatprep.subr.mxu0 0.0
        %328 = vmatpush2.msra.mxu0 0.0
        %329 = vmatprep.subr.mxu0 0.0
        %330 = vmatpush2.msra.mxu0 0.0
        %331 = vmatprep.subr.mxu0 0.0
        %332 = vmatpush2.msra.mxu0 0.0
        %333 = vmatprep.subr.mxu0 0.0
        %334 = vmatpush2.msra.mxu0 0.0
        %335 = vmatprep.subr.mxu0 0.0
        %336 = vmatpush2.msra.mxu0 0.0
        %337 = vmatprep.subr.mxu0 0.0
        %338 = vmatpush2.msra.mxu0 0.0
        %339 = vmatprep.mubr.f32.mxu0 0.0
        %340 = vmatmul.mubr.f32.gmra.mxu0 %v270
        %v341 = vpop.f32.mrf.mxu0
        %v342 = vadd.f32 0.0, %v341
        %v343 = vpop.f32.mrf.mxu0
        %v344 = vadd.f32 0.0, %v343
        %345 = vmatprep.mubr.f32.mxu0 0.0
        %346 = vmatmul.mubr.f32.gmra.mxu0 %v273
        %v347 = vpop.f32.mrf.mxu0
        %v348 = vadd.f32 0.0, %v347
        %v349 = vpop.f32.mrf.mxu0
        %v350 = vadd.f32 0.0, %v349
        %351 = vdwg.mxu0
        %352 = vst [vmem:[#allocation2] sm:$0x3] 0.0
        %353 = vst [vmem:[#allocation2 + $0x8] sm:$0x3] 0.0
        %354 = vst [vmem:[#allocation2 + $0x20] sm:$0xc] 0.0
        %355 = vst [vmem:[#allocation2 + $0x28] sm:$0xc] 0.0
        %vm360 = vcmask 1041408
        %v361 = vrot.slane %v342, 6
        %v362 = vrot.slane %v344, 6
        %v363 = vrot.slane %v348, 6
        %v364 = vsel %vm360, %v361, %v363
        %v365 = vrot.slane %v350, 6
        %v366 = vsel %vm360, %v362, %v365
        %373 = vst [vmem:[#allocation2] sm:$0xfc] %v361
        %374 = vst [vmem:[#allocation2 + $0x8] sm:$0xfc] %v362
        %375 = vst [vmem:[#allocation2 + $0x10] sm:$0xff] %v364
        %376 = vst [vmem:[#allocation2 + $0x18] sm:$0xff] %v366
        %377 = vst [vmem:[#allocation2 + $0x20] sm:$0x3] %v363
        %378 = vst [vmem:[#allocation2 + $0x28] sm:$0x3] %v365
        %v379 = vld [vmem:[#allocation2] sm:$0xff]
        %v380 = vld [vmem:[#allocation2 + $0x8] sm:$0xff]
        %v381 = vld [vmem:[#allocation2 + $0x10] sm:$0xff]
        %v382 = vld [vmem:[#allocation2 + $0x18] sm:$0xff]
        %v383 = vpack.c.bf16 %v381, %v379
        %v384 = vpack.c.bf16 %v382, %v380
        %v387 = vunpack.c.l.b16 %v383
        %v388 = vunpack.c.l.b16 %v384
        %v389 = vunpack.c.h.b16 %v383
        %v390 = vunpack.c.h.b16 %v384
        %v391 = vpack.c.b16 %v388, %v387
        %v392 = vpack.c.b16 %v390, %v389
        %395 = vst [vmem:[#allocation3] sm:$0xff] %v391
        %396 = vst [vmem:[#allocation3 + $0x28] sm:$0xff] %v392
        %v397 = vld [vmem:[#allocation2] sm:$0xfe]
        %v398 = vld [vmem:[#allocation2 + $0x8] sm:$0xfe]
        %v399 = vld [vmem:[#allocation2 + $0x10] sm:$0xff]
        %v400 = vld [vmem:[#allocation2 + $0x18] sm:$0xff]
        %v401 = vld [vmem:[#allocation2 + $0x20] sm:$0x1]
        %v402 = vld [vmem:[#allocation2 + $0x28] sm:$0x1]
        %v403 = vpack.c.bf16 %v399, %v397
        %v404 = vpack.c.bf16 %v400, %v398
        %v405 = vpack.c.bf16 %v401, %v401
        %v406 = vpack.c.bf16 %v402, %v402
        %v411 = vunpack.c.l.b16 %v403
        %v412 = vunpack.c.l.b16 %v404
        %v413 = vunpack.c.h.b16 %v403
        %v414 = vunpack.c.h.b16 %v404
        %v415 = vunpack.c.l.b16 %v405
        %v416 = vunpack.c.l.b16 %v406
        %v417 = vpack.c.b16 %v412, %v411
        %v418 = vpack.c.b16 %v414, %v413
        %v419 = vpack.c.b16 %v416, %v415
        %vm420 = vsmask.f32 3328
        %vm421 = vsmask.f32 7440
        %vm422 = vmor %vm420, %vm421
        %v424 = vshrl.u32 %v417, 16
        %v426 = vrot.slane %v424, 4
        %v427 = vshll.u32 %v417, 16
        %v429 = vrot.slane %v427, 5
        %v430 = vor.u32 %v426, %v429
        %v431 = vrot.slane %v430, 4
        %v433 = vshll.u32 %v418, 16
        %v435 = vrot.slane %v433, 5
        %v436 = vsel %vm422, %v431, %v435
        %v437 = vshrl.u32 %v418, 16
        %v439 = vrot.slane %v437, 4
        %v440 = vor.u32 %v439, %v435
        %v441 = vrot.slane %v440, 4
        %v443 = vshll.u32 %v419, 16
        %v445 = vrot.slane %v443, 5
        %v446 = vsel %vm422, %v441, %v445
        %449 = vst [vmem:[#allocation3 + $0x8] sm:$0xff] %v436
        %450 = vst [vmem:[#allocation3 + $0x30] sm:$0xff] %v446
        %v451 = vld [vmem:[#allocation2] sm:$0xfc]
        %v452 = vld [vmem:[#allocation2 + $0x8] sm:$0xfc]
        %v453 = vld [vmem:[#allocation2 + $0x10] sm:$0xff]
        %v454 = vld [vmem:[#allocation2 + $0x18] sm:$0xff]
        %v455 = vld [vmem:[#allocation2 + $0x20] sm:$0x3]
        %v456 = vld [vmem:[#allocation2 + $0x28] sm:$0x3]
        %v457 = vpack.c.bf16 %v453, %v451
        %v458 = vpack.c.bf16 %v454, %v452
        %v459 = vpack.c.bf16 %v455, %v455
        %v460 = vpack.c.bf16 %v456, %v456
        %v465 = vunpack.c.l.b16 %v457
        %v466 = vunpack.c.l.b16 %v458
        %v467 = vunpack.c.h.b16 %v457
        %v468 = vunpack.c.h.b16 %v458
        %v469 = vunpack.c.l.b16 %v459
        %v470 = vunpack.c.l.b16 %v460
        %v471 = vpack.c.b16 %v466, %v465
        %v472 = vpack.c.b16 %v468, %v467
        %v473 = vpack.c.b16 %v470, %v469
        %vm474 = vcmask 1042432
        %vm475 = vcmask 1046532
        %vm476 = vmor %vm474, %vm475
        %v477 = vrot.slane %v471, 5
        %v478 = vrot.slane %v477, 4
        %v479 = vrot.slane %v472, 5
        %v480 = vsel %vm476, %v478, %v479
        %v481 = vrot.slane %v479, 4
        %v482 = vrot.slane %v473, 5
        %v483 = vsel %vm476, %v481, %v482
        %486 = vst [vmem:[#allocation3 + $0x10] sm:$0xff] %v480
        %487 = vst [vmem:[#allocation3 + $0x38] sm:$0xff] %v483
        %v488 = vld [vmem:[#allocation2] sm:$0xf8]
        %v489 = vld [vmem:[#allocation2 + $0x8] sm:$0xf8]
        %v490 = vld [vmem:[#allocation2 + $0x10] sm:$0xff]
        %v491 = vld [vmem:[#allocation2 + $0x18] sm:$0xff]
        %v492 = vld [vmem:[#allocation2 + $0x20] sm:$0x7]
        %v493 = vld [vmem:[#allocation2 + $0x28] sm:$0x7]
        %v494 = vpack.c.bf16 %v490, %v488
        %v495 = vpack.c.bf16 %v491, %v489
        %v496 = vpack.c.bf16 %v492, %v492
        %v497 = vpack.c.bf16 %v493, %v493
        %v502 = vunpack.c.l.b16 %v494
        %v503 = vunpack.c.l.b16 %v495
        %v504 = vunpack.c.h.b16 %v494
        %v505 = vunpack.c.h.b16 %v495
        %v506 = vunpack.c.l.b16 %v496
        %v507 = vunpack.c.l.b16 %v497
        %v508 = vpack.c.b16 %v503, %v502
        %v509 = vpack.c.b16 %v505, %v504
        %v510 = vpack.c.b16 %v507, %v506
        %vm511 = vsmask.f32 2304
        %vm512 = vsmask.f32 6416
        %vm513 = vmor %vm511, %vm512
        %v515 = vshrl.u32 %v508, 16
        %v517 = vrot.slane %v515, 5
        %v518 = vshll.u32 %v508, 16
        %v520 = vrot.slane %v518, 6
        %v521 = vor.u32 %v517, %v520
        %v522 = vrot.slane %v521, 4
        %v524 = vshrl.u32 %v509, 16
        %v526 = vrot.slane %v524, 5
        %v527 = vshll.u32 %v509, 16
        %v529 = vrot.slane %v527, 6
        %v530 = vor.u32 %v526, %v529
        %v531 = vsel %vm513, %v522, %v530
        %v532 = vrot.slane %v530, 4
        %v534 = vshrl.u32 %v510, 16
        %v536 = vrot.slane %v534, 5
        %v537 = vshll.u32 %v510, 16
        %v539 = vrot.slane %v537, 6
        %v540 = vor.u32 %v536, %v539
        %v541 = vsel %vm513, %v532, %v540
        %544 = vst [vmem:[#allocation3 + $0x18] sm:$0xff] %v531
        %545 = vst [vmem:[#allocation3 + $0x40] sm:$0xff] %v541
        %v546 = vld [vmem:[#allocation2] sm:$0xf0]
        %v547 = vld [vmem:[#allocation2 + $0x8] sm:$0xf0]
        %v548 = vld [vmem:[#allocation2 + $0x10] sm:$0xff]
        %v549 = vld [vmem:[#allocation2 + $0x18] sm:$0xff]
        %v550 = vld [vmem:[#allocation2 + $0x20] sm:$0xf]
        %v551 = vld [vmem:[#allocation2 + $0x28] sm:$0xf]
        %v552 = vpack.c.bf16 %v548, %v546
        %v553 = vpack.c.bf16 %v549, %v547
        %v554 = vpack.c.bf16 %v550, %v550
        %v555 = vpack.c.bf16 %v551, %v551
        %v560 = vunpack.c.l.b16 %v552
        %v561 = vunpack.c.l.b16 %v553
        %v562 = vunpack.c.h.b16 %v552
        %v563 = vunpack.c.h.b16 %v553
        %v564 = vunpack.c.l.b16 %v554
        %v565 = vunpack.c.l.b16 %v555
        %v566 = vpack.c.b16 %v561, %v560
        %v567 = vpack.c.b16 %v563, %v562
        %v568 = vpack.c.b16 %v565, %v564
        %vm569 = vcmask 1041408
        %vm570 = vcmask 1045508
        %vm571 = vmor %vm569, %vm570
        %v572 = vrot.slane %v566, 6
        %v573 = vrot.slane %v572, 4
        %v574 = vrot.slane %v567, 6
        %v575 = vsel %vm571, %v573, %v574
        %v576 = vrot.slane %v574, 4
        %v577 = vrot.slane %v568, 6
        %v578 = vsel %vm571, %v576, %v577
        %581 = vst [vmem:[#allocation3 + $0x20] sm:$0xff] %v575
        %582 = vst [vmem:[#allocation3 + $0x48] sm:$0xff] %v578
        %v583 = vld [vmem:[#allocation3] sm:$0xff]
        %v584 = vld [vmem:[#allocation3 + $0x8] sm:$0xff]
        %v585 = vld [vmem:[#allocation3 + $0x10] sm:$0xff]
        %v586 = vld [vmem:[#allocation3 + $0x18] sm:$0xff]
        %v587 = vld [vmem:[#allocation3 + $0x20] sm:$0xff]
        %v588 = vld [vmem:[#allocation3 + $0x28] sm:$0xff]
        %v589 = vld [vmem:[#allocation3 + $0x30] sm:$0xff]
        %v590 = vld [vmem:[#allocation3 + $0x38] sm:$0xff]
        %v591 = vld [vmem:[#allocation3 + $0x40] sm:$0xff]
        %v592 = vld [vmem:[#allocation3 + $0x48] sm:$0xff]
        %v593 = vld [vmem:[#allocation8] sm:$0xff]
        %v594 = vld [vmem:[#allocation8 + $0x8] sm:$0xff]
        %v595 = vld [vmem:[#allocation8 + $0x10] sm:$0xff]
        %v596 = vld [vmem:[#allocation8 + $0x18] sm:$0xff]
        %v597 = vld [vmem:[#allocation8 + $0x20] sm:$0xff]
        %v598 = vld [vmem:[#allocation8 + $0x28] sm:$0xff]
        %v599 = vld [vmem:[#allocation8 + $0x30] sm:$0xff]
        %v600 = vld [vmem:[#allocation8 + $0x38] sm:$0xff]
        %v601 = vld [vmem:[#allocation8 + $0x40] sm:$0xff]
        %v602 = vld [vmem:[#allocation8 + $0x48] sm:$0xff]
        %v603 = vld [vmem:[#allocation8 + $0x50] sm:$0xff]
        %v604 = vld [vmem:[#allocation8 + $0x58] sm:$0xff]
        %v605 = vld [vmem:[#allocation8 + $0x60] sm:$0xff]
        %v606 = vld [vmem:[#allocation8 + $0x68] sm:$0xff]
        %v607 = vld [vmem:[#allocation8 + $0x70] sm:$0xff]
        %v608 = vld [vmem:[#allocation8 + $0x78] sm:$0xff]
        %v609 = vld [vmem:[#allocation8 + $0x80] sm:$0xff]
        %v610 = vld [vmem:[#allocation8 + $0x88] sm:$0xff]
        %v611 = vld [vmem:[#allocation8 + $0x90] sm:$0xff]
        %v612 = vld [vmem:[#allocation8 + $0x98] sm:$0xff]
        %v613 = vld [vmem:[#allocation8 + $0xa0] sm:$0xff]
        %v614 = vld [vmem:[#allocation8 + $0xa8] sm:$0xff]
        %v615 = vld [vmem:[#allocation8 + $0xb0] sm:$0xff]
        %v616 = vld [vmem:[#allocation8 + $0xb8] sm:$0xff]
        %v617 = vld [vmem:[#allocation8 + $0xc0] sm:$0xff]
        %v618 = vld [vmem:[#allocation8 + $0xc8] sm:$0xff]
        %v619 = vld [vmem:[#allocation8 + $0xd0] sm:$0xff]
        %v620 = vld [vmem:[#allocation8 + $0xd8] sm:$0xff]
        %v621 = vld [vmem:[#allocation8 + $0xe0] sm:$0xff]
        %v622 = vld [vmem:[#allocation8 + $0xe8] sm:$0xff]
        %v623 = vld [vmem:[#allocation8 + $0xf0] sm:$0xff]
        %v624 = vld [vmem:[#allocation8 + $0xf8] sm:$0xff]
        %v625 = vld [vmem:[#allocation8 + $0x100] sm:$0xff]
        %v626 = vld [vmem:[#allocation8 + $0x108] sm:$0xff]
        %v627 = vld [vmem:[#allocation8 + $0x110] sm:$0xff]
        %v628 = vld [vmem:[#allocation8 + $0x118] sm:$0xff]
        %v629 = vld [vmem:[#allocation8 + $0x120] sm:$0xff]
        %v630 = vld [vmem:[#allocation8 + $0x128] sm:$0xff]
        %v631 = vld [vmem:[#allocation8 + $0x130] sm:$0xff]
        %v632 = vld [vmem:[#allocation8 + $0x138] sm:$0xff]
        %v633 = vld [vmem:[#allocation8 + $0x140] sm:$0xff]
        %v634 = vld [vmem:[#allocation8 + $0x148] sm:$0xff]
        %v635 = vld [vmem:[#allocation8 + $0x150] sm:$0xff]
        %v636 = vld [vmem:[#allocation8 + $0x158] sm:$0xff]
        %v637 = vld [vmem:[#allocation8 + $0x160] sm:$0xff]
        %v638 = vld [vmem:[#allocation8 + $0x168] sm:$0xff]
        %v639 = vld [vmem:[#allocation8 + $0x170] sm:$0xff]
        %v640 = vld [vmem:[#allocation8 + $0x178] sm:$0xff]
        %v641 = vld [vmem:[#allocation8 + $0x180] sm:$0xff]
        %v642 = vld [vmem:[#allocation8 + $0x188] sm:$0xff]
        %v643 = vld [vmem:[#allocation8 + $0x190] sm:$0xff]
        %v644 = vld [vmem:[#allocation8 + $0x198] sm:$0xff]
        %v645 = vld [vmem:[#allocation8 + $0x1a0] sm:$0xff]
        %v646 = vld [vmem:[#allocation8 + $0x1a8] sm:$0xff]
        %v647 = vld [vmem:[#allocation8 + $0x1b0] sm:$0xff]
        %v648 = vld [vmem:[#allocation8 + $0x1b8] sm:$0xff]
        %v649 = vld [vmem:[#allocation8 + $0x1c0] sm:$0xff]
        %v650 = vld [vmem:[#allocation8 + $0x1c8] sm:$0xff]
        %v651 = vld [vmem:[#allocation8 + $0x1d0] sm:$0xff]
        %v652 = vld [vmem:[#allocation8 + $0x1d8] sm:$0xff]
        %v653 = vld [vmem:[#allocation8 + $0x1e0] sm:$0xff]
        %v654 = vld [vmem:[#allocation8 + $0x1e8] sm:$0xff]
        %v655 = vld [vmem:[#allocation8 + $0x1f0] sm:$0xff]
        %v656 = vld [vmem:[#allocation8 + $0x1f8] sm:$0xff]
        %v657 = vld [vmem:[#allocation8 + $0x200] sm:$0xff]
        %v658 = vld [vmem:[#allocation8 + $0x208] sm:$0xff]
        %v659 = vld [vmem:[#allocation8 + $0x210] sm:$0xff]
        %v660 = vld [vmem:[#allocation8 + $0x218] sm:$0xff]
        %v661 = vld [vmem:[#allocation8 + $0x220] sm:$0xff]
        %v662 = vld [vmem:[#allocation8 + $0x228] sm:$0xff]
        %v663 = vld [vmem:[#allocation8 + $0x230] sm:$0xff]
        %v664 = vld [vmem:[#allocation8 + $0x238] sm:$0xff]
        %v665 = vld [vmem:[#allocation8 + $0x240] sm:$0xff]
        %v666 = vld [vmem:[#allocation8 + $0x248] sm:$0xff]
        %v667 = vld [vmem:[#allocation8 + $0x250] sm:$0xff]
        %v668 = vld [vmem:[#allocation8 + $0x258] sm:$0xff]
        %v669 = vld [vmem:[#allocation8 + $0x260] sm:$0xff]
        %v670 = vld [vmem:[#allocation8 + $0x268] sm:$0xff]
        %v671 = vld [vmem:[#allocation8 + $0x270] sm:$0xff]
        %v672 = vld [vmem:[#allocation8 + $0x278] sm:$0xff]
        %v673 = vld [vmem:[#allocation8 + $0x280] sm:$0xff]
        %v674 = vld [vmem:[#allocation8 + $0x288] sm:$0xff]
        %v675 = vld [vmem:[#allocation8 + $0x290] sm:$0xff]
        %v676 = vld [vmem:[#allocation8 + $0x298] sm:$0xff]
        %v677 = vld [vmem:[#allocation8 + $0x2a0] sm:$0xff]
        %v678 = vld [vmem:[#allocation8 + $0x2a8] sm:$0xff]
        %v679 = vld [vmem:[#allocation8 + $0x2b0] sm:$0xff]
        %v680 = vld [vmem:[#allocation8 + $0x2b8] sm:$0xff]
        %v681 = vld [vmem:[#allocation8 + $0x2c0] sm:$0xff]
        %v682 = vld [vmem:[#allocation8 + $0x2c8] sm:$0xff]
        %v683 = vld [vmem:[#allocation8 + $0x2d0] sm:$0xff]
        %v684 = vld [vmem:[#allocation8 + $0x2d8] sm:$0xff]
        %v685 = vld [vmem:[#allocation8 + $0x2e0] sm:$0xff]
        %v686 = vld [vmem:[#allocation8 + $0x2e8] sm:$0xff]
        %v687 = vld [vmem:[#allocation8 + $0x2f0] sm:$0xff]
        %v688 = vld [vmem:[#allocation8 + $0x2f8] sm:$0xff]
        %v689 = vld [vmem:[#allocation8 + $0x300] sm:$0xff]
        %v690 = vld [vmem:[#allocation8 + $0x308] sm:$0xff]
        %v691 = vld [vmem:[#allocation8 + $0x310] sm:$0xff]
        %v692 = vld [vmem:[#allocation8 + $0x318] sm:$0xff]
        %v693 = vld [vmem:[#allocation8 + $0x320] sm:$0xff]
        %v694 = vld [vmem:[#allocation8 + $0x328] sm:$0xff]
        %v695 = vld [vmem:[#allocation8 + $0x330] sm:$0xff]
        %v696 = vld [vmem:[#allocation8 + $0x338] sm:$0xff]
        %v697 = vld [vmem:[#allocation8 + $0x340] sm:$0xff]
        %v698 = vld [vmem:[#allocation8 + $0x348] sm:$0xff]
        %v699 = vld [vmem:[#allocation8 + $0x350] sm:$0xff]
        %v700 = vld [vmem:[#allocation8 + $0x358] sm:$0xff]
        %v701 = vld [vmem:[#allocation8 + $0x360] sm:$0xff]
        %v702 = vld [vmem:[#allocation8 + $0x368] sm:$0xff]
        %v703 = vld [vmem:[#allocation8 + $0x370] sm:$0xff]
        %v704 = vld [vmem:[#allocation8 + $0x378] sm:$0xff]
        %v705 = vld [vmem:[#allocation8 + $0x380] sm:$0xff]
        %v706 = vld [vmem:[#allocation8 + $0x388] sm:$0xff]
        %v707 = vld [vmem:[#allocation8 + $0x390] sm:$0xff]
        %v708 = vld [vmem:[#allocation8 + $0x398] sm:$0xff]
        %v709 = vld [vmem:[#allocation8 + $0x3a0] sm:$0xff]
        %v710 = vld [vmem:[#allocation8 + $0x3a8] sm:$0xff]
        %v711 = vld [vmem:[#allocation8 + $0x3b0] sm:$0xff]
        %v712 = vld [vmem:[#allocation8 + $0x3b8] sm:$0xff]
        %v713 = vld [vmem:[#allocation8 + $0x3c0] sm:$0xff]
        %v714 = vld [vmem:[#allocation8 + $0x3c8] sm:$0xff]
        %v715 = vld [vmem:[#allocation8 + $0x3d0] sm:$0xff]
        %v716 = vld [vmem:[#allocation8 + $0x3d8] sm:$0xff]
        %v717 = vld [vmem:[#allocation8 + $0x3e0] sm:$0xff]
        %v718 = vld [vmem:[#allocation8 + $0x3e8] sm:$0xff]
        %v719 = vld [vmem:[#allocation8 + $0x3f0] sm:$0xff]
        %v720 = vld [vmem:[#allocation8 + $0x3f8] sm:$0xff]
        %v721 = vld [vmem:[#allocation8 + $0x400] sm:$0xff]
        %v722 = vld [vmem:[#allocation8 + $0x408] sm:$0xff]
        %v723 = vld [vmem:[#allocation8 + $0x410] sm:$0xff]
        %v724 = vld [vmem:[#allocation8 + $0x418] sm:$0xff]
        %v725 = vld [vmem:[#allocation8 + $0x420] sm:$0xff]
        %v726 = vld [vmem:[#allocation8 + $0x428] sm:$0xff]
        %v727 = vld [vmem:[#allocation8 + $0x430] sm:$0xff]
        %v728 = vld [vmem:[#allocation8 + $0x438] sm:$0xff]
        %v729 = vld [vmem:[#allocation8 + $0x440] sm:$0xff]
        %v730 = vld [vmem:[#allocation8 + $0x448] sm:$0xff]
        %v731 = vld [vmem:[#allocation8 + $0x450] sm:$0xff]
        %v732 = vld [vmem:[#allocation8 + $0x458] sm:$0xff]
        %v733 = vld [vmem:[#allocation8 + $0x460] sm:$0xff]
        %v734 = vld [vmem:[#allocation8 + $0x468] sm:$0xff]
        %v735 = vld [vmem:[#allocation8 + $0x470] sm:$0xff]
        %v736 = vld [vmem:[#allocation8 + $0x478] sm:$0xff]
        %v737 = vld [vmem:[#allocation8 + $0x480] sm:$0xff]
        %v738 = vld [vmem:[#allocation8 + $0x488] sm:$0xff]
        %v739 = vld [vmem:[#allocation8 + $0x490] sm:$0xff]
        %v740 = vld [vmem:[#allocation8 + $0x498] sm:$0xff]
        %v741 = vld [vmem:[#allocation8 + $0x4a0] sm:$0xff]
        %v742 = vld [vmem:[#allocation8 + $0x4a8] sm:$0xff]
        %v743 = vld [vmem:[#allocation8 + $0x4b0] sm:$0xff]
        %v744 = vld [vmem:[#allocation8 + $0x4b8] sm:$0xff]
        %v745 = vld [vmem:[#allocation8 + $0x4c0] sm:$0xff]
        %v746 = vld [vmem:[#allocation8 + $0x4c8] sm:$0xff]
        %v747 = vld [vmem:[#allocation8 + $0x4d0] sm:$0xff]
        %v748 = vld [vmem:[#allocation8 + $0x4d8] sm:$0xff]
        %v749 = vld [vmem:[#allocation8 + $0x4e0] sm:$0xff]
        %v750 = vld [vmem:[#allocation8 + $0x4e8] sm:$0xff]
        %v751 = vld [vmem:[#allocation8 + $0x4f0] sm:$0xff]
        %v752 = vld [vmem:[#allocation8 + $0x4f8] sm:$0xff]
        %v753 = vld [vmem:[#allocation9] sm:$0x3]
        %v755 = vlaneseq
        %v756 = vshrl.u32 %v755, 7
        %v757 = vsub.s32 0, %v756
        %v758 = vrot.slane %v753, %v757
        %v759 = vlaneseq
        %v760 = vshrl.u32 %v759, 7
        %v761 = vsub.s32 1, %v760
        %v762 = vrot.slane %v753, %v761
        %v775 = vunpack.c.l.b16 %v583
        %v776 = vunpack.c.h.b16 %v583
        %v777 = vunpack.c.l.b16 %v584
        %v778 = vunpack.c.h.b16 %v584
        %v779 = vunpack.c.l.b16 %v585
        %v780 = vunpack.c.h.b16 %v585
        %v781 = vunpack.c.l.b16 %v586
        %v782 = vunpack.c.h.b16 %v586
        %v783 = vunpack.c.l.b16 %v587
        %v784 = vunpack.c.h.b16 %v587
        %v785 = vunpack.c.l.b16 %v588
        %v786 = vunpack.c.h.b16 %v588
        %v787 = vunpack.c.l.b16 %v589
        %v788 = vunpack.c.h.b16 %v589
        %v789 = vunpack.c.l.b16 %v590
        %v790 = vunpack.c.h.b16 %v590
        %v791 = vunpack.c.l.b16 %v591
        %v792 = vunpack.c.h.b16 %v591
        %v793 = vunpack.c.l.b16 %v592
        %v794 = vunpack.c.h.b16 %v592
        %v795 = vpack.c.b16 %v785, %v775
        %v796 = vpack.c.b16 %v786, %v776
        %v797 = vpack.c.b16 %v787, %v777
        %v798 = vpack.c.b16 %v788, %v778
        %v799 = vpack.c.b16 %v789, %v779
        %v800 = vpack.c.b16 %v790, %v780
        %v801 = vpack.c.b16 %v791, %v781
        %v802 = vpack.c.b16 %v792, %v782
        %v803 = vpack.c.b16 %v793, %v783
        %v804 = vpack.c.b16 %v794, %v784
        %v975 = vunpack.c.l.b16 %v593
        %v976 = vunpack.c.h.b16 %v593
        %v977 = vunpack.c.l.b16 %v594
        %v978 = vunpack.c.h.b16 %v594
        %v979 = vunpack.c.l.b16 %v595
        %v980 = vunpack.c.h.b16 %v595
        %v981 = vunpack.c.l.b16 %v596
        %v982 = vunpack.c.h.b16 %v596
        %v983 = vunpack.c.l.b16 %v597
        %v984 = vunpack.c.h.b16 %v597
        %v985 = vunpack.c.l.b16 %v598
        %v986 = vunpack.c.h.b16 %v598
        %v987 = vunpack.c.l.b16 %v599
        %v988 = vunpack.c.h.b16 %v599
        %v989 = vunpack.c.l.b16 %v600
        %v990 = vunpack.c.h.b16 %v600
        %v991 = vunpack.c.l.b16 %v601
        %v992 = vunpack.c.h.b16 %v601
        %v993 = vunpack.c.l.b16 %v602
        %v994 = vunpack.c.h.b16 %v602
        %v995 = vunpack.c.l.b16 %v603
        %v996 = vunpack.c.h.b16 %v603
        %v997 = vunpack.c.l.b16 %v604
        %v998 = vunpack.c.h.b16 %v604
        %v999 = vunpack.c.l.b16 %v605
        %v1000 = vunpack.c.h.b16 %v605
        %v1001 = vunpack.c.l.b16 %v606
        %v1002 = vunpack.c.h.b16 %v606
        %v1003 = vunpack.c.l.b16 %v607
        %v1004 = vunpack.c.h.b16 %v607
        %v1005 = vunpack.c.l.b16 %v608
        %v1006 = vunpack.c.h.b16 %v608
        %v1007 = vunpack.c.l.b16 %v609
        %v1008 = vunpack.c.h.b16 %v609
        %v1009 = vunpack.c.l.b16 %v610
        %v1010 = vunpack.c.h.b16 %v610
        %v1011 = vunpack.c.l.b16 %v611
        %v1012 = vunpack.c.h.b16 %v611
        %v1013 = vunpack.c.l.b16 %v612
        %v1014 = vunpack.c.h.b16 %v612
        %v1015 = vunpack.c.l.b16 %v613
        %v1016 = vunpack.c.h.b16 %v613
        %v1017 = vunpack.c.l.b16 %v614
        %v1018 = vunpack.c.h.b16 %v614
        %v1019 = vunpack.c.l.b16 %v615
        %v1020 = vunpack.c.h.b16 %v615
        %v1021 = vunpack.c.l.b16 %v616
        %v1022 = vunpack.c.h.b16 %v616
        %v1023 = vunpack.c.l.b16 %v617
        %v1024 = vunpack.c.h.b16 %v617
        %v1025 = vunpack.c.l.b16 %v618
        %v1026 = vunpack.c.h.b16 %v618
        %v1027 = vunpack.c.l.b16 %v619
        %v1028 = vunpack.c.h.b16 %v619
        %v1029 = vunpack.c.l.b16 %v620
        %v1030 = vunpack.c.h.b16 %v620
        %v1031 = vunpack.c.l.b16 %v621
        %v1032 = vunpack.c.h.b16 %v621
        %v1033 = vunpack.c.l.b16 %v622
        %v1034 = vunpack.c.h.b16 %v622
        %v1035 = vunpack.c.l.b16 %v623
        %v1036 = vunpack.c.h.b16 %v623
        %v1037 = vunpack.c.l.b16 %v624
        %v1038 = vunpack.c.h.b16 %v624
        %v1039 = vunpack.c.l.b16 %v625
        %v1040 = vunpack.c.h.b16 %v625
        %v1041 = vunpack.c.l.b16 %v626
        %v1042 = vunpack.c.h.b16 %v626
        %v1043 = vunpack.c.l.b16 %v627
        %v1044 = vunpack.c.h.b16 %v627
        %v1045 = vunpack.c.l.b16 %v628
        %v1046 = vunpack.c.h.b16 %v628
        %v1047 = vunpack.c.l.b16 %v629
        %v1048 = vunpack.c.h.b16 %v629
        %v1049 = vunpack.c.l.b16 %v630
        %v1050 = vunpack.c.h.b16 %v630
        %v1051 = vunpack.c.l.b16 %v631
        %v1052 = vunpack.c.h.b16 %v631
        %v1053 = vunpack.c.l.b16 %v632
        %v1054 = vunpack.c.h.b16 %v632
        %v1055 = vunpack.c.l.b16 %v633
        %v1056 = vunpack.c.h.b16 %v633
        %v1057 = vunpack.c.l.b16 %v634
        %v1058 = vunpack.c.h.b16 %v634
        %v1059 = vunpack.c.l.b16 %v635
        %v1060 = vunpack.c.h.b16 %v635
        %v1061 = vunpack.c.l.b16 %v636
        %v1062 = vunpack.c.h.b16 %v636
        %v1063 = vunpack.c.l.b16 %v637
        %v1064 = vunpack.c.h.b16 %v637
        %v1065 = vunpack.c.l.b16 %v638
        %v1066 = vunpack.c.h.b16 %v638
        %v1067 = vunpack.c.l.b16 %v639
        %v1068 = vunpack.c.h.b16 %v639
        %v1069 = vunpack.c.l.b16 %v640
        %v1070 = vunpack.c.h.b16 %v640
        %v1071 = vunpack.c.l.b16 %v641
        %v1072 = vunpack.c.h.b16 %v641
        %v1073 = vunpack.c.l.b16 %v642
        %v1074 = vunpack.c.h.b16 %v642
        %v1075 = vunpack.c.l.b16 %v643
        %v1076 = vunpack.c.h.b16 %v643
        %v1077 = vunpack.c.l.b16 %v644
        %v1078 = vunpack.c.h.b16 %v644
        %v1079 = vunpack.c.l.b16 %v645
        %v1080 = vunpack.c.h.b16 %v645
        %v1081 = vunpack.c.l.b16 %v646
        %v1082 = vunpack.c.h.b16 %v646
        %v1083 = vunpack.c.l.b16 %v647
        %v1084 = vunpack.c.h.b16 %v647
        %v1085 = vunpack.c.l.b16 %v648
        %v1086 = vunpack.c.h.b16 %v648
        %v1087 = vunpack.c.l.b16 %v649
        %v1088 = vunpack.c.h.b16 %v649
        %v1089 = vunpack.c.l.b16 %v650
        %v1090 = vunpack.c.h.b16 %v650
        %v1091 = vunpack.c.l.b16 %v651
        %v1092 = vunpack.c.h.b16 %v651
        %v1093 = vunpack.c.l.b16 %v652
        %v1094 = vunpack.c.h.b16 %v652
        %v1095 = vunpack.c.l.b16 %v653
        %v1096 = vunpack.c.h.b16 %v653
        %v1097 = vunpack.c.l.b16 %v654
        %v1098 = vunpack.c.h.b16 %v654
        %v1099 = vunpack.c.l.b16 %v655
        %v1100 = vunpack.c.h.b16 %v655
        %v1101 = vunpack.c.l.b16 %v656
        %v1102 = vunpack.c.h.b16 %v656
        %v1103 = vunpack.c.l.b16 %v657
        %v1104 = vunpack.c.h.b16 %v657
        %v1105 = vunpack.c.l.b16 %v658
        %v1106 = vunpack.c.h.b16 %v658
        %v1107 = vunpack.c.l.b16 %v659
        %v1108 = vunpack.c.h.b16 %v659
        %v1109 = vunpack.c.l.b16 %v660
        %v1110 = vunpack.c.h.b16 %v660
        %v1111 = vunpack.c.l.b16 %v661
        %v1112 = vunpack.c.h.b16 %v661
        %v1113 = vunpack.c.l.b16 %v662
        %v1114 = vunpack.c.h.b16 %v662
        %v1115 = vunpack.c.l.b16 %v663
        %v1116 = vunpack.c.h.b16 %v663
        %v1117 = vunpack.c.l.b16 %v664
        %v1118 = vunpack.c.h.b16 %v664
        %v1119 = vunpack.c.l.b16 %v665
        %v1120 = vunpack.c.h.b16 %v665
        %v1121 = vunpack.c.l.b16 %v666
        %v1122 = vunpack.c.h.b16 %v666
        %v1123 = vunpack.c.l.b16 %v667
        %v1124 = vunpack.c.h.b16 %v667
        %v1125 = vunpack.c.l.b16 %v668
        %v1126 = vunpack.c.h.b16 %v668
        %v1127 = vunpack.c.l.b16 %v669
        %v1128 = vunpack.c.h.b16 %v669
        %v1129 = vunpack.c.l.b16 %v670
        %v1130 = vunpack.c.h.b16 %v670
        %v1131 = vunpack.c.l.b16 %v671
        %v1132 = vunpack.c.h.b16 %v671
        %v1133 = vunpack.c.l.b16 %v672
        %v1134 = vunpack.c.h.b16 %v672
        %v1135 = vunpack.c.l.b16 %v673
        %v1136 = vunpack.c.h.b16 %v673
        %v1137 = vunpack.c.l.b16 %v674
        %v1138 = vunpack.c.h.b16 %v674
        %v1139 = vunpack.c.l.b16 %v675
        %v1140 = vunpack.c.h.b16 %v675
        %v1141 = vunpack.c.l.b16 %v676
        %v1142 = vunpack.c.h.b16 %v676
        %v1143 = vunpack.c.l.b16 %v677
        %v1144 = vunpack.c.h.b16 %v677
        %v1145 = vunpack.c.l.b16 %v678
        %v1146 = vunpack.c.h.b16 %v678
        %v1147 = vunpack.c.l.b16 %v679
        %v1148 = vunpack.c.h.b16 %v679
        %v1149 = vunpack.c.l.b16 %v680
        %v1150 = vunpack.c.h.b16 %v680
        %v1151 = vunpack.c.l.b16 %v681
        %v1152 = vunpack.c.h.b16 %v681
        %v1153 = vunpack.c.l.b16 %v682
        %v1154 = vunpack.c.h.b16 %v682
        %v1155 = vunpack.c.l.b16 %v683
        %v1156 = vunpack.c.h.b16 %v683
        %v1157 = vunpack.c.l.b16 %v684
        %v1158 = vunpack.c.h.b16 %v684
        %v1159 = vunpack.c.l.b16 %v685
        %v1160 = vunpack.c.h.b16 %v685
        %v1161 = vunpack.c.l.b16 %v686
        %v1162 = vunpack.c.h.b16 %v686
        %v1163 = vunpack.c.l.b16 %v687
        %v1164 = vunpack.c.h.b16 %v687
        %v1165 = vunpack.c.l.b16 %v688
        %v1166 = vunpack.c.h.b16 %v688
        %v1167 = vunpack.c.l.b16 %v689
        %v1168 = vunpack.c.h.b16 %v689
        %v1169 = vunpack.c.l.b16 %v690
        %v1170 = vunpack.c.h.b16 %v690
        %v1171 = vunpack.c.l.b16 %v691
        %v1172 = vunpack.c.h.b16 %v691
        %v1173 = vunpack.c.l.b16 %v692
        %v1174 = vunpack.c.h.b16 %v692
        %v1175 = vunpack.c.l.b16 %v693
        %v1176 = vunpack.c.h.b16 %v693
        %v1177 = vunpack.c.l.b16 %v694
        %v1178 = vunpack.c.h.b16 %v694
        %v1179 = vunpack.c.l.b16 %v695
        %v1180 = vunpack.c.h.b16 %v695
        %v1181 = vunpack.c.l.b16 %v696
        %v1182 = vunpack.c.h.b16 %v696
        %v1183 = vunpack.c.l.b16 %v697
        %v1184 = vunpack.c.h.b16 %v697
        %v1185 = vunpack.c.l.b16 %v698
        %v1186 = vunpack.c.h.b16 %v698
        %v1187 = vunpack.c.l.b16 %v699
        %v1188 = vunpack.c.h.b16 %v699
        %v1189 = vunpack.c.l.b16 %v700
        %v1190 = vunpack.c.h.b16 %v700
        %v1191 = vunpack.c.l.b16 %v701
        %v1192 = vunpack.c.h.b16 %v701
        %v1193 = vunpack.c.l.b16 %v702
        %v1194 = vunpack.c.h.b16 %v702
        %v1195 = vunpack.c.l.b16 %v703
        %v1196 = vunpack.c.h.b16 %v703
        %v1197 = vunpack.c.l.b16 %v704
        %v1198 = vunpack.c.h.b16 %v704
        %v1199 = vunpack.c.l.b16 %v705
        %v1200 = vunpack.c.h.b16 %v705
        %v1201 = vunpack.c.l.b16 %v706
        %v1202 = vunpack.c.h.b16 %v706
        %v1203 = vunpack.c.l.b16 %v707
        %v1204 = vunpack.c.h.b16 %v707
        %v1205 = vunpack.c.l.b16 %v708
        %v1206 = vunpack.c.h.b16 %v708
        %v1207 = vunpack.c.l.b16 %v709
        %v1208 = vunpack.c.h.b16 %v709
        %v1209 = vunpack.c.l.b16 %v710
        %v1210 = vunpack.c.h.b16 %v710
        %v1211 = vunpack.c.l.b16 %v711
        %v1212 = vunpack.c.h.b16 %v711
        %v1213 = vunpack.c.l.b16 %v712
        %v1214 = vunpack.c.h.b16 %v712
        %v1215 = vunpack.c.l.b16 %v713
        %v1216 = vunpack.c.h.b16 %v713
        %v1217 = vunpack.c.l.b16 %v714
        %v1218 = vunpack.c.h.b16 %v714
        %v1219 = vunpack.c.l.b16 %v715
        %v1220 = vunpack.c.h.b16 %v715
        %v1221 = vunpack.c.l.b16 %v716
        %v1222 = vunpack.c.h.b16 %v716
        %v1223 = vunpack.c.l.b16 %v717
        %v1224 = vunpack.c.h.b16 %v717
        %v1225 = vunpack.c.l.b16 %v718
        %v1226 = vunpack.c.h.b16 %v718
        %v1227 = vunpack.c.l.b16 %v719
        %v1228 = vunpack.c.h.b16 %v719
        %v1229 = vunpack.c.l.b16 %v720
        %v1230 = vunpack.c.h.b16 %v720
        %v1231 = vunpack.c.l.b16 %v721
        %v1232 = vunpack.c.h.b16 %v721
        %v1233 = vunpack.c.l.b16 %v722
        %v1234 = vunpack.c.h.b16 %v722
        %v1235 = vunpack.c.l.b16 %v723
        %v1236 = vunpack.c.h.b16 %v723
        %v1237 = vunpack.c.l.b16 %v724
        %v1238 = vunpack.c.h.b16 %v724
        %v1239 = vunpack.c.l.b16 %v725
        %v1240 = vunpack.c.h.b16 %v725
        %v1241 = vunpack.c.l.b16 %v726
        %v1242 = vunpack.c.h.b16 %v726
        %v1243 = vunpack.c.l.b16 %v727
        %v1244 = vunpack.c.h.b16 %v727
        %v1245 = vunpack.c.l.b16 %v728
        %v1246 = vunpack.c.h.b16 %v728
        %v1247 = vunpack.c.l.b16 %v729
        %v1248 = vunpack.c.h.b16 %v729
        %v1249 = vunpack.c.l.b16 %v730
        %v1250 = vunpack.c.h.b16 %v730
        %v1251 = vunpack.c.l.b16 %v731
        %v1252 = vunpack.c.h.b16 %v731
        %v1253 = vunpack.c.l.b16 %v732
        %v1254 = vunpack.c.h.b16 %v732
        %v1255 = vunpack.c.l.b16 %v733
        %v1256 = vunpack.c.h.b16 %v733
        %v1257 = vunpack.c.l.b16 %v734
        %v1258 = vunpack.c.h.b16 %v734
        %v1259 = vunpack.c.l.b16 %v735
        %v1260 = vunpack.c.h.b16 %v735
        %v1261 = vunpack.c.l.b16 %v736
        %v1262 = vunpack.c.h.b16 %v736
        %v1263 = vunpack.c.l.b16 %v737
        %v1264 = vunpack.c.h.b16 %v737
        %v1265 = vunpack.c.l.b16 %v738
        %v1266 = vunpack.c.h.b16 %v738
        %v1267 = vunpack.c.l.b16 %v739
        %v1268 = vunpack.c.h.b16 %v739
        %v1269 = vunpack.c.l.b16 %v740
        %v1270 = vunpack.c.h.b16 %v740
        %v1271 = vunpack.c.l.b16 %v741
        %v1272 = vunpack.c.h.b16 %v741
        %v1273 = vunpack.c.l.b16 %v742
        %v1274 = vunpack.c.h.b16 %v742
        %v1275 = vunpack.c.l.b16 %v743
        %v1276 = vunpack.c.h.b16 %v743
        %v1277 = vunpack.c.l.b16 %v744
        %v1278 = vunpack.c.h.b16 %v744
        %v1279 = vunpack.c.l.b16 %v745
        %v1280 = vunpack.c.h.b16 %v745
        %v1281 = vunpack.c.l.b16 %v746
        %v1282 = vunpack.c.h.b16 %v746
        %v1283 = vunpack.c.l.b16 %v747
        %v1284 = vunpack.c.h.b16 %v747
        %v1285 = vunpack.c.l.b16 %v748
        %v1286 = vunpack.c.h.b16 %v748
        %v1287 = vunpack.c.l.b16 %v749
        %v1288 = vunpack.c.h.b16 %v749
        %v1289 = vunpack.c.l.b16 %v750
        %v1290 = vunpack.c.h.b16 %v750
        %v1291 = vunpack.c.l.b16 %v751
        %v1292 = vunpack.c.h.b16 %v751
        %v1293 = vunpack.c.l.b16 %v752
        %v1294 = vunpack.c.h.b16 %v752
        %v1295 = vpack.c.b16 %v977, %v975
        %v1296 = vpack.c.b16 %v978, %v976
        %v1297 = vpack.c.b16 %v981, %v979
        %v1298 = vpack.c.b16 %v982, %v980
        %v1299 = vpack.c.b16 %v985, %v983
        %v1300 = vpack.c.b16 %v986, %v984
        %v1301 = vpack.c.b16 %v989, %v987
        %v1302 = vpack.c.b16 %v990, %v988
        %v1303 = vpack.c.b16 %v993, %v991
        %v1304 = vpack.c.b16 %v994, %v992
        %v1305 = vpack.c.b16 %v997, %v995
        %v1306 = vpack.c.b16 %v998, %v996
        %v1307 = vpack.c.b16 %v1001, %v999
        %v1308 = vpack.c.b16 %v1002, %v1000
        %v1309 = vpack.c.b16 %v1005, %v1003
        %v1310 = vpack.c.b16 %v1006, %v1004
        %v1311 = vpack.c.b16 %v1009, %v1007
        %v1312 = vpack.c.b16 %v1010, %v1008
        %v1313 = vpack.c.b16 %v1013, %v1011
        %v1314 = vpack.c.b16 %v1014, %v1012
        %v1315 = vpack.c.b16 %v1017, %v1015
        %v1316 = vpack.c.b16 %v1018, %v1016
        %v1317 = vpack.c.b16 %v1021, %v1019
        %v1318 = vpack.c.b16 %v1022, %v1020
        %v1319 = vpack.c.b16 %v1025, %v1023
        %v1320 = vpack.c.b16 %v1026, %v1024
        %v1321 = vpack.c.b16 %v1029, %v1027
        %v1322 = vpack.c.b16 %v1030, %v1028
        %v1323 = vpack.c.b16 %v1033, %v1031
        %v1324 = vpack.c.b16 %v1034, %v1032
        %v1325 = vpack.c.b16 %v1037, %v1035
        %v1326 = vpack.c.b16 %v1038, %v1036
        %v1327 = vpack.c.b16 %v1041, %v1039
        %v1328 = vpack.c.b16 %v1042, %v1040
        %v1329 = vpack.c.b16 %v1045, %v1043
        %v1330 = vpack.c.b16 %v1046, %v1044
        %v1331 = vpack.c.b16 %v1049, %v1047
        %v1332 = vpack.c.b16 %v1050, %v1048
        %v1333 = vpack.c.b16 %v1053, %v1051
        %v1334 = vpack.c.b16 %v1054, %v1052
        %v1335 = vpack.c.b16 %v1057, %v1055
        %v1336 = vpack.c.b16 %v1058, %v1056
        %v1337 = vpack.c.b16 %v1061, %v1059
        %v1338 = vpack.c.b16 %v1062, %v1060
        %v1339 = vpack.c.b16 %v1065, %v1063
        %v1340 = vpack.c.b16 %v1066, %v1064
        %v1341 = vpack.c.b16 %v1069, %v1067
        %v1342 = vpack.c.b16 %v1070, %v1068
        %v1343 = vpack.c.b16 %v1073, %v1071
        %v1344 = vpack.c.b16 %v1074, %v1072
        %v1345 = vpack.c.b16 %v1077, %v1075
        %v1346 = vpack.c.b16 %v1078, %v1076
        %v1347 = vpack.c.b16 %v1081, %v1079
        %v1348 = vpack.c.b16 %v1082, %v1080
        %v1349 = vpack.c.b16 %v1085, %v1083
        %v1350 = vpack.c.b16 %v1086, %v1084
        %v1351 = vpack.c.b16 %v1089, %v1087
        %v1352 = vpack.c.b16 %v1090, %v1088
        %v1353 = vpack.c.b16 %v1093, %v1091
        %v1354 = vpack.c.b16 %v1094, %v1092
        %v1355 = vpack.c.b16 %v1097, %v1095
        %v1356 = vpack.c.b16 %v1098, %v1096
        %v1357 = vpack.c.b16 %v1101, %v1099
        %v1358 = vpack.c.b16 %v1102, %v1100
        %v1359 = vpack.c.b16 %v1105, %v1103
        %v1360 = vpack.c.b16 %v1106, %v1104
        %v1361 = vpack.c.b16 %v1109, %v1107
        %v1362 = vpack.c.b16 %v1110, %v1108
        %v1363 = vpack.c.b16 %v1113, %v1111
        %v1364 = vpack.c.b16 %v1114, %v1112
        %v1365 = vpack.c.b16 %v1117, %v1115
        %v1366 = vpack.c.b16 %v1118, %v1116
        %v1367 = vpack.c.b16 %v1121, %v1119
        %v1368 = vpack.c.b16 %v1122, %v1120
        %v1369 = vpack.c.b16 %v1125, %v1123
        %v1370 = vpack.c.b16 %v1126, %v1124
        %v1371 = vpack.c.b16 %v1129, %v1127
        %v1372 = vpack.c.b16 %v1130, %v1128
        %v1373 = vpack.c.b16 %v1133, %v1131
        %v1374 = vpack.c.b16 %v1134, %v1132
        %v1375 = vpack.c.b16 %v1137, %v1135
        %v1376 = vpack.c.b16 %v1138, %v1136
        %v1377 = vpack.c.b16 %v1141, %v1139
        %v1378 = vpack.c.b16 %v1142, %v1140
        %v1379 = vpack.c.b16 %v1145, %v1143
        %v1380 = vpack.c.b16 %v1146, %v1144
        %v1381 = vpack.c.b16 %v1149, %v1147
        %v1382 = vpack.c.b16 %v1150, %v1148
        %v1383 = vpack.c.b16 %v1153, %v1151
        %v1384 = vpack.c.b16 %v1154, %v1152
        %v1385 = vpack.c.b16 %v1157, %v1155
        %v1386 = vpack.c.b16 %v1158, %v1156
        %v1387 = vpack.c.b16 %v1161, %v1159
        %v1388 = vpack.c.b16 %v1162, %v1160
        %v1389 = vpack.c.b16 %v1165, %v1163
        %v1390 = vpack.c.b16 %v1166, %v1164
        %v1391 = vpack.c.b16 %v1169, %v1167
        %v1392 = vpack.c.b16 %v1170, %v1168
        %v1393 = vpack.c.b16 %v1173, %v1171
        %v1394 = vpack.c.b16 %v1174, %v1172
        %v1395 = vpack.c.b16 %v1177, %v1175
        %v1396 = vpack.c.b16 %v1178, %v1176
        %v1397 = vpack.c.b16 %v1181, %v1179
        %v1398 = vpack.c.b16 %v1182, %v1180
        %v1399 = vpack.c.b16 %v1185, %v1183
        %v1400 = vpack.c.b16 %v1186, %v1184
        %v1401 = vpack.c.b16 %v1189, %v1187
        %v1402 = vpack.c.b16 %v1190, %v1188
        %v1403 = vpack.c.b16 %v1193, %v1191
        %v1404 = vpack.c.b16 %v1194, %v1192
        %v1405 = vpack.c.b16 %v1197, %v1195
        %v1406 = vpack.c.b16 %v1198, %v1196
        %v1407 = vpack.c.b16 %v1201, %v1199
        %v1408 = vpack.c.b16 %v1202, %v1200
        %v1409 = vpack.c.b16 %v1205, %v1203
        %v1410 = vpack.c.b16 %v1206, %v1204
        %v1411 = vpack.c.b16 %v1209, %v1207
        %v1412 = vpack.c.b16 %v1210, %v1208
        %v1413 = vpack.c.b16 %v1213, %v1211
        %v1414 = vpack.c.b16 %v1214, %v1212
        %v1415 = vpack.c.b16 %v1217, %v1215
        %v1416 = vpack.c.b16 %v1218, %v1216
        %v1417 = vpack.c.b16 %v1221, %v1219
        %v1418 = vpack.c.b16 %v1222, %v1220
        %v1419 = vpack.c.b16 %v1225, %v1223
        %v1420 = vpack.c.b16 %v1226, %v1224
        %v1421 = vpack.c.b16 %v1229, %v1227
        %v1422 = vpack.c.b16 %v1230, %v1228
        %v1423 = vpack.c.b16 %v1233, %v1231
        %v1424 = vpack.c.b16 %v1234, %v1232
        %v1425 = vpack.c.b16 %v1237, %v1235
        %v1426 = vpack.c.b16 %v1238, %v1236
        %v1427 = vpack.c.b16 %v1241, %v1239
        %v1428 = vpack.c.b16 %v1242, %v1240
        %v1429 = vpack.c.b16 %v1245, %v1243
        %v1430 = vpack.c.b16 %v1246, %v1244
        %v1431 = vpack.c.b16 %v1249, %v1247
        %v1432 = vpack.c.b16 %v1250, %v1248
        %v1433 = vpack.c.b16 %v1253, %v1251
        %v1434 = vpack.c.b16 %v1254, %v1252
        %v1435 = vpack.c.b16 %v1257, %v1255
        %v1436 = vpack.c.b16 %v1258, %v1256
        %v1437 = vpack.c.b16 %v1261, %v1259
        %v1438 = vpack.c.b16 %v1262, %v1260
        %v1439 = vpack.c.b16 %v1265, %v1263
        %v1440 = vpack.c.b16 %v1266, %v1264
        %v1441 = vpack.c.b16 %v1269, %v1267
        %v1442 = vpack.c.b16 %v1270, %v1268
        %v1443 = vpack.c.b16 %v1273, %v1271
        %v1444 = vpack.c.b16 %v1274, %v1272
        %v1445 = vpack.c.b16 %v1277, %v1275
        %v1446 = vpack.c.b16 %v1278, %v1276
        %v1447 = vpack.c.b16 %v1281, %v1279
        %v1448 = vpack.c.b16 %v1282, %v1280
        %v1449 = vpack.c.b16 %v1285, %v1283
        %v1450 = vpack.c.b16 %v1286, %v1284
        %v1451 = vpack.c.b16 %v1289, %v1287
        %v1452 = vpack.c.b16 %v1290, %v1288
        %v1453 = vpack.c.b16 %v1293, %v1291
        %v1454 = vpack.c.b16 %v1294, %v1292
        %1615 = vmatprep.subr.bf16.mxu0 %v1310
        %1616 = vmatpush1.bf16.msra.mxu0 %v1309
        %1617 = vmatprep.subr.bf16.mxu0 %v1308
        %1618 = vmatpush1.bf16.msra.mxu0 %v1307
        %1619 = vmatprep.subr.bf16.mxu0 %v1306
        %1620 = vmatpush1.bf16.msra.mxu0 %v1305
        %1621 = vmatprep.subr.bf16.mxu0 %v1304
        %1622 = vmatpush1.bf16.msra.mxu0 %v1303
        %1623 = vmatprep.subr.bf16.mxu0 %v1302
        %1624 = vmatpush1.bf16.msra.mxu0 %v1301
        %1625 = vmatprep.subr.bf16.mxu0 %v1300
        %1626 = vmatpush1.bf16.msra.mxu0 %v1299
        %1627 = vmatprep.subr.bf16.mxu0 %v1298
        %1628 = vmatpush1.bf16.msra.mxu0 %v1297
        %1629 = vmatprep.subr.bf16.mxu0 %v1296
        %1630 = vmatpush1.bf16.msra.mxu0 %v1295
        %1631 = vmatprep.subr.bf16.mxu0 %v1326
        %1632 = vmatpush2.bf16.msra.mxu0 %v1325
        %1633 = vmatprep.subr.bf16.mxu0 %v1324
        %1634 = vmatpush2.bf16.msra.mxu0 %v1323
        %1635 = vmatprep.subr.bf16.mxu0 %v1322
        %1636 = vmatpush2.bf16.msra.mxu0 %v1321
        %1637 = vmatprep.subr.bf16.mxu0 %v1320
        %1638 = vmatpush2.bf16.msra.mxu0 %v1319
        %1639 = vmatprep.subr.bf16.mxu0 %v1318
        %1640 = vmatpush2.bf16.msra.mxu0 %v1317
        %1641 = vmatprep.subr.bf16.mxu0 %v1316
        %1642 = vmatpush2.bf16.msra.mxu0 %v1315
        %1643 = vmatprep.subr.bf16.mxu0 %v1314
        %1644 = vmatpush2.bf16.msra.mxu0 %v1313
        %1645 = vmatprep.subr.bf16.mxu0 %v1312
        %1646 = vmatpush2.bf16.msra.mxu0 %v1311
        %1647 = vmatprep.mubr.bf16.mxu0 %v796
        %1648 = vmatmul.mubr.bf16.gmra.mxu0 %v795
        %v1649 = vpop.f32.mrf.mxu0
        %v1650 = vadd.f32 %v758, %v1649
        %v1651 = vpop.f32.mrf.mxu0
        %v1652 = vadd.f32 %v762, %v1651
        %v1653 = vpop.f32.mrf.mxu0
        %v1654 = vadd.f32 %v758, %v1653
        %v1655 = vpop.f32.mrf.mxu0
        %v1656 = vadd.f32 %v762, %v1655
        %1657 = vdwg.mxu0
        %1658 = vmatprep.subr.bf16.mxu0 %v1342
        %1659 = vmatpush1.bf16.msra.mxu0 %v1341
        %1660 = vmatprep.subr.bf16.mxu0 %v1340
        %1661 = vmatpush1.bf16.msra.mxu0 %v1339
        %1662 = vmatprep.subr.bf16.mxu0 %v1338
        %1663 = vmatpush1.bf16.msra.mxu0 %v1337
        %1664 = vmatprep.subr.bf16.mxu0 %v1336
        %1665 = vmatpush1.bf16.msra.mxu0 %v1335
        %1666 = vmatprep.subr.bf16.mxu0 %v1334
        %1667 = vmatpush1.bf16.msra.mxu0 %v1333
        %1668 = vmatprep.subr.bf16.mxu0 %v1332
        %1669 = vmatpush1.bf16.msra.mxu0 %v1331
        %1670 = vmatprep.subr.bf16.mxu0 %v1330
        %1671 = vmatpush1.bf16.msra.mxu0 %v1329
        %1672 = vmatprep.subr.bf16.mxu0 %v1328
        %1673 = vmatpush1.bf16.msra.mxu0 %v1327
        %1674 = vmatprep.subr.bf16.mxu0 %v1358
        %1675 = vmatpush2.bf16.msra.mxu0 %v1357
        %1676 = vmatprep.subr.bf16.mxu0 %v1356
        %1677 = vmatpush2.bf16.msra.mxu0 %v1355
        %1678 = vmatprep.subr.bf16.mxu0 %v1354
        %1679 = vmatpush2.bf16.msra.mxu0 %v1353
        %1680 = vmatprep.subr.bf16.mxu0 %v1352
        %1681 = vmatpush2.bf16.msra.mxu0 %v1351
        %1682 = vmatprep.subr.bf16.mxu0 %v1350
        %1683 = vmatpush2.bf16.msra.mxu0 %v1349
        %1684 = vmatprep.subr.bf16.mxu0 %v1348
        %1685 = vmatpush2.bf16.msra.mxu0 %v1347
        %1686 = vmatprep.subr.bf16.mxu0 %v1346
        %1687 = vmatpush2.bf16.msra.mxu0 %v1345
        %1688 = vmatprep.subr.bf16.mxu0 %v1344
        %1689 = vmatpush2.bf16.msra.mxu0 %v1343
        %1690 = vmatprep.mubr.bf16.mxu0 %v798
        %1691 = vmatmul.mubr.bf16.gmra.mxu0 %v797
        %v1692 = vpop.f32.mrf.mxu0
        %v1693 = vadd.f32 %v1650, %v1692
        %v1694 = vpop.f32.mrf.mxu0
        %v1695 = vadd.f32 %v1652, %v1694
        %v1696 = vpop.f32.mrf.mxu0
        %v1697 = vadd.f32 %v1654, %v1696
        %v1698 = vpop.f32.mrf.mxu0
        %v1699 = vadd.f32 %v1656, %v1698
        %1700 = vdwg.mxu0
        %1701 = vmatprep.subr.bf16.mxu0 %v1374
        %1702 = vmatpush1.bf16.msra.mxu0 %v1373
        %1703 = vmatprep.subr.bf16.mxu0 %v1372
        %1704 = vmatpush1.bf16.msra.mxu0 %v1371
        %1705 = vmatprep.subr.bf16.mxu0 %v1370
        %1706 = vmatpush1.bf16.msra.mxu0 %v1369
        %1707 = vmatprep.subr.bf16.mxu0 %v1368
        %1708 = vmatpush1.bf16.msra.mxu0 %v1367
        %1709 = vmatprep.subr.bf16.mxu0 %v1366
        %1710 = vmatpush1.bf16.msra.mxu0 %v1365
        %1711 = vmatprep.subr.bf16.mxu0 %v1364
        %1712 = vmatpush1.bf16.msra.mxu0 %v1363
        %1713 = vmatprep.subr.bf16.mxu0 %v1362
        %1714 = vmatpush1.bf16.msra.mxu0 %v1361
        %1715 = vmatprep.subr.bf16.mxu0 %v1360
        %1716 = vmatpush1.bf16.msra.mxu0 %v1359
        %1717 = vmatprep.subr.bf16.mxu0 %v1390
        %1718 = vmatpush2.bf16.msra.mxu0 %v1389
        %1719 = vmatprep.subr.bf16.mxu0 %v1388
        %1720 = vmatpush2.bf16.msra.mxu0 %v1387
        %1721 = vmatprep.subr.bf16.mxu0 %v1386
        %1722 = vmatpush2.bf16.msra.mxu0 %v1385
        %1723 = vmatprep.subr.bf16.mxu0 %v1384
        %1724 = vmatpush2.bf16.msra.mxu0 %v1383
        %1725 = vmatprep.subr.bf16.mxu0 %v1382
        %1726 = vmatpush2.bf16.msra.mxu0 %v1381
        %1727 = vmatprep.subr.bf16.mxu0 %v1380
        %1728 = vmatpush2.bf16.msra.mxu0 %v1379
        %1729 = vmatprep.subr.bf16.mxu0 %v1378
        %1730 = vmatpush2.bf16.msra.mxu0 %v1377
        %1731 = vmatprep.subr.bf16.mxu0 %v1376
        %1732 = vmatpush2.bf16.msra.mxu0 %v1375
        %1733 = vmatprep.mubr.bf16.mxu0 %v800
        %1734 = vmatmul.mubr.bf16.gmra.mxu0 %v799
        %v1735 = vpop.f32.mrf.mxu0
        %v1736 = vadd.f32 %v1693, %v1735
        %v1737 = vpop.f32.mrf.mxu0
        %v1738 = vadd.f32 %v1695, %v1737
        %v1739 = vpop.f32.mrf.mxu0
        %v1740 = vadd.f32 %v1697, %v1739
        %v1741 = vpop.f32.mrf.mxu0
        %v1742 = vadd.f32 %v1699, %v1741
        %1743 = vdwg.mxu0
        %1744 = vmatprep.subr.bf16.mxu0 %v1406
        %1745 = vmatpush1.bf16.msra.mxu0 %v1405
        %1746 = vmatprep.subr.bf16.mxu0 %v1404
        %1747 = vmatpush1.bf16.msra.mxu0 %v1403
        %1748 = vmatprep.subr.bf16.mxu0 %v1402
        %1749 = vmatpush1.bf16.msra.mxu0 %v1401
        %1750 = vmatprep.subr.bf16.mxu0 %v1400
        %1751 = vmatpush1.bf16.msra.mxu0 %v1399
        %1752 = vmatprep.subr.bf16.mxu0 %v1398
        %1753 = vmatpush1.bf16.msra.mxu0 %v1397
        %1754 = vmatprep.subr.bf16.mxu0 %v1396
        %1755 = vmatpush1.bf16.msra.mxu0 %v1395
        %1756 = vmatprep.subr.bf16.mxu0 %v1394
        %1757 = vmatpush1.bf16.msra.mxu0 %v1393
        %1758 = vmatprep.subr.bf16.mxu0 %v1392
        %1759 = vmatpush1.bf16.msra.mxu0 %v1391
        %1760 = vmatprep.subr.bf16.mxu0 %v1422
        %1761 = vmatpush2.bf16.msra.mxu0 %v1421
        %1762 = vmatprep.subr.bf16.mxu0 %v1420
        %1763 = vmatpush2.bf16.msra.mxu0 %v1419
        %1764 = vmatprep.subr.bf16.mxu0 %v1418
        %1765 = vmatpush2.bf16.msra.mxu0 %v1417
        %1766 = vmatprep.subr.bf16.mxu0 %v1416
        %1767 = vmatpush2.bf16.msra.mxu0 %v1415
        %1768 = vmatprep.subr.bf16.mxu0 %v1414
        %1769 = vmatpush2.bf16.msra.mxu0 %v1413
        %1770 = vmatprep.subr.bf16.mxu0 %v1412
        %1771 = vmatpush2.bf16.msra.mxu0 %v1411
        %1772 = vmatprep.subr.bf16.mxu0 %v1410
        %1773 = vmatpush2.bf16.msra.mxu0 %v1409
        %1774 = vmatprep.subr.bf16.mxu0 %v1408
        %1775 = vmatpush2.bf16.msra.mxu0 %v1407
        %1776 = vmatprep.mubr.bf16.mxu0 %v802
        %1777 = vmatmul.mubr.bf16.gmra.mxu0 %v801
        %v1778 = vpop.f32.mrf.mxu0
        %v1779 = vadd.f32 %v1736, %v1778
        %v1780 = vpop.f32.mrf.mxu0
        %v1781 = vadd.f32 %v1738, %v1780
        %v1782 = vpop.f32.mrf.mxu0
        %v1783 = vadd.f32 %v1740, %v1782
        %v1784 = vpop.f32.mrf.mxu0
        %v1785 = vadd.f32 %v1742, %v1784
        %1786 = vdwg.mxu0
        %1787 = vmatprep.subr.bf16.mxu0 %v1438
        %1788 = vmatpush1.bf16.msra.mxu0 %v1437
        %1789 = vmatprep.subr.bf16.mxu0 %v1436
        %1790 = vmatpush1.bf16.msra.mxu0 %v1435
        %1791 = vmatprep.subr.bf16.mxu0 %v1434
        %1792 = vmatpush1.bf16.msra.mxu0 %v1433
        %1793 = vmatprep.subr.bf16.mxu0 %v1432
        %1794 = vmatpush1.bf16.msra.mxu0 %v1431
        %1795 = vmatprep.subr.bf16.mxu0 %v1430
        %1796 = vmatpush1.bf16.msra.mxu0 %v1429
        %1797 = vmatprep.subr.bf16.mxu0 %v1428
        %1798 = vmatpush1.bf16.msra.mxu0 %v1427
        %1799 = vmatprep.subr.bf16.mxu0 %v1426
        %1800 = vmatpush1.bf16.msra.mxu0 %v1425
        %1801 = vmatprep.subr.bf16.mxu0 %v1424
        %1802 = vmatpush1.bf16.msra.mxu0 %v1423
        %1803 = vmatprep.subr.bf16.mxu0 %v1454
        %1804 = vmatpush2.bf16.msra.mxu0 %v1453
        %1805 = vmatprep.subr.bf16.mxu0 %v1452
        %1806 = vmatpush2.bf16.msra.mxu0 %v1451
        %1807 = vmatprep.subr.bf16.mxu0 %v1450
        %1808 = vmatpush2.bf16.msra.mxu0 %v1449
        %1809 = vmatprep.subr.bf16.mxu0 %v1448
        %1810 = vmatpush2.bf16.msra.mxu0 %v1447
        %1811 = vmatprep.subr.bf16.mxu0 %v1446
        %1812 = vmatpush2.bf16.msra.mxu0 %v1445
        %1813 = vmatprep.subr.bf16.mxu0 %v1444
        %1814 = vmatpush2.bf16.msra.mxu0 %v1443
        %1815 = vmatprep.subr.bf16.mxu0 %v1442
        %1816 = vmatpush2.bf16.msra.mxu0 %v1441
        %1817 = vmatprep.subr.bf16.mxu0 %v1440
        %1818 = vmatpush2.bf16.msra.mxu0 %v1439
        %1819 = vmatprep.mubr.bf16.mxu0 %v804
        %1820 = vmatmul.mubr.bf16.gmra.mxu0 %v803
        %v1821 = vpop.f32.mrf.mxu0
        %v1822 = vadd.f32 %v1779, %v1821
        %v1823 = vpop.f32.mrf.mxu0
        %v1824 = vadd.f32 %v1781, %v1823
        %v1825 = vpop.f32.mrf.mxu0
        %v1826 = vadd.f32 %v1783, %v1825
        %v1827 = vpop.f32.mrf.mxu0
        %v1828 = vadd.f32 %v1785, %v1827
        %1829 = vdwg.mxu0
        %v1830 = vmax.f32 %v1822, 0.0
        %v1831 = vmax.f32 %v1824, 0.0
        %v1832 = vmax.f32 %v1826, 0.0
        %v1833 = vmax.f32 %v1828, 0.0
        %v1838 = vrot.slane %v1830, 6
        %v1839 = vrot.slane %v1831, 6
        %v1840 = vrot.slane %v1832, 6
        %v1841 = vsel %vm360, %v1838, %v1840
        %v1842 = vrot.slane %v1833, 6
        %v1843 = vsel %vm360, %v1839, %v1842
        %1850 = vst [vmem:[#allocation2] sm:$0xfc] %v1838
        %1851 = vst [vmem:[#allocation2 + $0x8] sm:$0xfc] %v1839
        %1852 = vst [vmem:[#allocation2 + $0x10] sm:$0xff] %v1841
        %1853 = vst [vmem:[#allocation2 + $0x18] sm:$0xff] %v1843
        %1854 = vst [vmem:[#allocation2 + $0x20] sm:$0x3] %v1840
        %1855 = vst [vmem:[#allocation2 + $0x28] sm:$0x3] %v1842
        %v1856 = vld [vmem:[#allocation2] sm:$0xff]
        %v1857 = vld [vmem:[#allocation2 + $0x8] sm:$0xff]
        %v1858 = vld [vmem:[#allocation2 + $0x10] sm:$0xff]
        %v1859 = vld [vmem:[#allocation2 + $0x18] sm:$0xff]
        %v1860 = vpack.c.bf16 %v1858, %v1856
        %v1861 = vpack.c.bf16 %v1859, %v1857
        %v1864 = vunpack.c.l.b16 %v1860
        %v1865 = vunpack.c.l.b16 %v1861
        %v1866 = vunpack.c.h.b16 %v1860
        %v1867 = vunpack.c.h.b16 %v1861
        %v1868 = vpack.c.b16 %v1865, %v1864
        %v1869 = vpack.c.b16 %v1867, %v1866
        %1872 = vst [vmem:[#allocation3] sm:$0xff] %v1868
        %1873 = vst [vmem:[#allocation3 + $0x28] sm:$0xff] %v1869
        %v1874 = vld [vmem:[#allocation2] sm:$0xfe]
        %v1875 = vld [vmem:[#allocation2 + $0x8] sm:$0xfe]
        %v1876 = vld [vmem:[#allocation2 + $0x10] sm:$0xff]
        %v1877 = vld [vmem:[#allocation2 + $0x18] sm:$0xff]
        %v1878 = vld [vmem:[#allocation2 + $0x20] sm:$0x1]
        %v1879 = vld [vmem:[#allocation2 + $0x28] sm:$0x1]
        %v1880 = vpack.c.bf16 %v1876, %v1874
        %v1881 = vpack.c.bf16 %v1877, %v1875
        %v1882 = vpack.c.bf16 %v1878, %v1878
        %v1883 = vpack.c.bf16 %v1879, %v1879
        %v1888 = vunpack.c.l.b16 %v1880
        %v1889 = vunpack.c.l.b16 %v1881
        %v1890 = vunpack.c.h.b16 %v1880
        %v1891 = vunpack.c.h.b16 %v1881
        %v1892 = vunpack.c.l.b16 %v1882
        %v1893 = vunpack.c.l.b16 %v1883
        %v1894 = vpack.c.b16 %v1889, %v1888
        %v1895 = vpack.c.b16 %v1891, %v1890
        %v1896 = vpack.c.b16 %v1893, %v1892
        %v1898 = vshrl.u32 %v1894, 16
        %v1900 = vrot.slane %v1898, 4
        %v1901 = vshll.u32 %v1894, 16
        %v1903 = vrot.slane %v1901, 5
        %v1904 = vor.u32 %v1900, %v1903
        %v1905 = vrot.slane %v1904, 4
        %v1907 = vshll.u32 %v1895, 16
        %v1909 = vrot.slane %v1907, 5
        %v1910 = vsel %vm422, %v1905, %v1909
        %v1911 = vshrl.u32 %v1895, 16
        %v1913 = vrot.slane %v1911, 4
        %v1914 = vor.u32 %v1913, %v1909
        %v1915 = vrot.slane %v1914, 4
        %v1917 = vshll.u32 %v1896, 16
        %v1919 = vrot.slane %v1917, 5
        %v1920 = vsel %vm422, %v1915, %v1919
        %1923 = vst [vmem:[#allocation3 + $0x8] sm:$0xff] %v1910
        %1924 = vst [vmem:[#allocation3 + $0x30] sm:$0xff] %v1920
        %v1925 = vld [vmem:[#allocation2] sm:$0xfc]
        %v1926 = vld [vmem:[#allocation2 + $0x8] sm:$0xfc]
        %v1927 = vld [vmem:[#allocation2 + $0x10] sm:$0xff]
        %v1928 = vld [vmem:[#allocation2 + $0x18] sm:$0xff]
        %v1929 = vld [vmem:[#allocation2 + $0x20] sm:$0x3]
        %v1930 = vld [vmem:[#allocation2 + $0x28] sm:$0x3]
        %v1931 = vpack.c.bf16 %v1927, %v1925
        %v1932 = vpack.c.bf16 %v1928, %v1926
        %v1933 = vpack.c.bf16 %v1929, %v1929
        %v1934 = vpack.c.bf16 %v1930, %v1930
        %v1939 = vunpack.c.l.b16 %v1931
        %v1940 = vunpack.c.l.b16 %v1932
        %v1941 = vunpack.c.h.b16 %v1931
        %v1942 = vunpack.c.h.b16 %v1932
        %v1943 = vunpack.c.l.b16 %v1933
        %v1944 = vunpack.c.l.b16 %v1934
        %v1945 = vpack.c.b16 %v1940, %v1939
        %v1946 = vpack.c.b16 %v1942, %v1941
        %v1947 = vpack.c.b16 %v1944, %v1943
        %v1948 = vrot.slane %v1945, 5
        %v1949 = vrot.slane %v1948, 4
        %v1950 = vrot.slane %v1946, 5
        %v1951 = vsel %vm476, %v1949, %v1950
        %v1952 = vrot.slane %v1950, 4
        %v1953 = vrot.slane %v1947, 5
        %v1954 = vsel %vm476, %v1952, %v1953
        %1957 = vst [vmem:[#allocation3 + $0x10] sm:$0xff] %v1951
        %1958 = vst [vmem:[#allocation3 + $0x38] sm:$0xff] %v1954
        %v1959 = vld [vmem:[#allocation2] sm:$0xf8]
        %v1960 = vld [vmem:[#allocation2 + $0x8] sm:$0xf8]
        %v1961 = vld [vmem:[#allocation2 + $0x10] sm:$0xff]
        %v1962 = vld [vmem:[#allocation2 + $0x18] sm:$0xff]
        %v1963 = vld [vmem:[#allocation2 + $0x20] sm:$0x7]
        %v1964 = vld [vmem:[#allocation2 + $0x28] sm:$0x7]
        %v1965 = vpack.c.bf16 %v1961, %v1959
        %v1966 = vpack.c.bf16 %v1962, %v1960
        %v1967 = vpack.c.bf16 %v1963, %v1963
        %v1968 = vpack.c.bf16 %v1964, %v1964
        %v1973 = vunpack.c.l.b16 %v1965
        %v1974 = vunpack.c.l.b16 %v1966
        %v1975 = vunpack.c.h.b16 %v1965
        %v1976 = vunpack.c.h.b16 %v1966
        %v1977 = vunpack.c.l.b16 %v1967
        %v1978 = vunpack.c.l.b16 %v1968
        %v1979 = vpack.c.b16 %v1974, %v1973
        %v1980 = vpack.c.b16 %v1976, %v1975
        %v1981 = vpack.c.b16 %v1978, %v1977
        %v1983 = vshrl.u32 %v1979, 16
        %v1985 = vrot.slane %v1983, 5
        %v1986 = vshll.u32 %v1979, 16
        %v1988 = vrot.slane %v1986, 6
        %v1989 = vor.u32 %v1985, %v1988
        %v1990 = vrot.slane %v1989, 4
        %v1992 = vshrl.u32 %v1980, 16
        %v1994 = vrot.slane %v1992, 5
        %v1995 = vshll.u32 %v1980, 16
        %v1997 = vrot.slane %v1995, 6
        %v1998 = vor.u32 %v1994, %v1997
        %v1999 = vsel %vm513, %v1990, %v1998
        %v2000 = vrot.slane %v1998, 4
        %v2002 = vshrl.u32 %v1981, 16
        %v2004 = vrot.slane %v2002, 5
        %v2005 = vshll.u32 %v1981, 16
        %v2007 = vrot.slane %v2005, 6
        %v2008 = vor.u32 %v2004, %v2007
        %v2009 = vsel %vm513, %v2000, %v2008
        %2012 = vst [vmem:[#allocation3 + $0x18] sm:$0xff] %v1999
        %2013 = vst [vmem:[#allocation3 + $0x40] sm:$0xff] %v2009
        %v2014 = vld [vmem:[#allocation2] sm:$0xf0]
        %v2015 = vld [vmem:[#allocation2 + $0x8] sm:$0xf0]
        %v2016 = vld [vmem:[#allocation2 + $0x10] sm:$0xff]
        %v2017 = vld [vmem:[#allocation2 + $0x18] sm:$0xff]
        %v2018 = vld [vmem:[#allocation2 + $0x20] sm:$0xf]
        %v2019 = vld [vmem:[#allocation2 + $0x28] sm:$0xf]
        %v2020 = vpack.c.bf16 %v2016, %v2014
        %v2021 = vpack.c.bf16 %v2017, %v2015
        %v2022 = vpack.c.bf16 %v2018, %v2018
        %v2023 = vpack.c.bf16 %v2019, %v2019
        %v2028 = vunpack.c.l.b16 %v2020
        %v2029 = vunpack.c.l.b16 %v2021
        %v2030 = vunpack.c.h.b16 %v2020
        %v2031 = vunpack.c.h.b16 %v2021
        %v2032 = vunpack.c.l.b16 %v2022
        %v2033 = vunpack.c.l.b16 %v2023
        %v2034 = vpack.c.b16 %v2029, %v2028
        %v2035 = vpack.c.b16 %v2031, %v2030
        %v2036 = vpack.c.b16 %v2033, %v2032
        %v2037 = vrot.slane %v2034, 6
        %v2038 = vrot.slane %v2037, 4
        %v2039 = vrot.slane %v2035, 6
        %v2040 = vsel %vm571, %v2038, %v2039
        %v2041 = vrot.slane %v2039, 4
        %v2042 = vrot.slane %v2036, 6
        %v2043 = vsel %vm571, %v2041, %v2042
        %2046 = vst [vmem:[#allocation3 + $0x20] sm:$0xff] %v2040
        %2047 = vst [vmem:[#allocation3 + $0x48] sm:$0xff] %v2043
        %v2048 = vld [vmem:[#allocation3] sm:$0xff]
        %v2049 = vld [vmem:[#allocation3 + $0x8] sm:$0xff]
        %v2050 = vld [vmem:[#allocation3 + $0x10] sm:$0xff]
        %v2051 = vld [vmem:[#allocation3 + $0x18] sm:$0xff]
        %v2052 = vld [vmem:[#allocation3 + $0x20] sm:$0xff]
        %v2053 = vld [vmem:[#allocation3 + $0x28] sm:$0xff]
        %v2054 = vld [vmem:[#allocation3 + $0x30] sm:$0xff]
        %v2055 = vld [vmem:[#allocation3 + $0x38] sm:$0xff]
        %v2056 = vld [vmem:[#allocation3 + $0x40] sm:$0xff]
        %v2057 = vld [vmem:[#allocation3 + $0x48] sm:$0xff]
        %s2058 = scalar_lea.vmem [#allocation8], 1280
        %v2059 = vld [vmem:[%s2058] sm:$0xff]
        %v2060 = vld [vmem:[%s2058 + $0x8] sm:$0xff]
        %v2061 = vld [vmem:[%s2058 + $0x10] sm:$0xff]
        %v2062 = vld [vmem:[%s2058 + $0x18] sm:$0xff]
        %v2063 = vld [vmem:[%s2058 + $0x20] sm:$0xff]
        %v2064 = vld [vmem:[%s2058 + $0x28] sm:$0xff]
        %v2065 = vld [vmem:[%s2058 + $0x30] sm:$0xff]
        %v2066 = vld [vmem:[%s2058 + $0x38] sm:$0xff]
        %v2067 = vld [vmem:[%s2058 + $0x40] sm:$0xff]
        %v2068 = vld [vmem:[%s2058 + $0x48] sm:$0xff]
        %v2069 = vld [vmem:[%s2058 + $0x50] sm:$0xff]
        %v2070 = vld [vmem:[%s2058 + $0x58] sm:$0xff]
        %v2071 = vld [vmem:[%s2058 + $0x60] sm:$0xff]
        %v2072 = vld [vmem:[%s2058 + $0x68] sm:$0xff]
        %v2073 = vld [vmem:[%s2058 + $0x70] sm:$0xff]
        %v2074 = vld [vmem:[%s2058 + $0x78] sm:$0xff]
        %v2075 = vld [vmem:[%s2058 + $0x80] sm:$0xff]
        %v2076 = vld [vmem:[%s2058 + $0x88] sm:$0xff]
        %v2077 = vld [vmem:[%s2058 + $0x90] sm:$0xff]
        %v2078 = vld [vmem:[%s2058 + $0x98] sm:$0xff]
        %v2079 = vld [vmem:[%s2058 + $0xa0] sm:$0xff]
        %v2080 = vld [vmem:[%s2058 + $0xa8] sm:$0xff]
        %v2081 = vld [vmem:[%s2058 + $0xb0] sm:$0xff]
        %v2082 = vld [vmem:[%s2058 + $0xb8] sm:$0xff]
        %v2083 = vld [vmem:[%s2058 + $0xc0] sm:$0xff]
        %v2084 = vld [vmem:[%s2058 + $0xc8] sm:$0xff]
        %v2085 = vld [vmem:[%s2058 + $0xd0] sm:$0xff]
        %v2086 = vld [vmem:[%s2058 + $0xd8] sm:$0xff]
        %v2087 = vld [vmem:[%s2058 + $0xe0] sm:$0xff]
        %v2088 = vld [vmem:[%s2058 + $0xe8] sm:$0xff]
        %v2089 = vld [vmem:[%s2058 + $0xf0] sm:$0xff]
        %v2090 = vld [vmem:[%s2058 + $0xf8] sm:$0xff]
        %v2091 = vld [vmem:[%s2058 + $0x100] sm:$0xff]
        %v2092 = vld [vmem:[%s2058 + $0x108] sm:$0xff]
        %v2093 = vld [vmem:[%s2058 + $0x110] sm:$0xff]
        %v2094 = vld [vmem:[%s2058 + $0x118] sm:$0xff]
        %v2095 = vld [vmem:[%s2058 + $0x120] sm:$0xff]
        %v2096 = vld [vmem:[%s2058 + $0x128] sm:$0xff]
        %v2097 = vld [vmem:[%s2058 + $0x130] sm:$0xff]
        %v2098 = vld [vmem:[%s2058 + $0x138] sm:$0xff]
        %v2099 = vld [vmem:[%s2058 + $0x140] sm:$0xff]
        %v2100 = vld [vmem:[%s2058 + $0x148] sm:$0xff]
        %v2101 = vld [vmem:[%s2058 + $0x150] sm:$0xff]
        %v2102 = vld [vmem:[%s2058 + $0x158] sm:$0xff]
        %v2103 = vld [vmem:[%s2058 + $0x160] sm:$0xff]
        %v2104 = vld [vmem:[%s2058 + $0x168] sm:$0xff]
        %v2105 = vld [vmem:[%s2058 + $0x170] sm:$0xff]
        %v2106 = vld [vmem:[%s2058 + $0x178] sm:$0xff]
        %v2107 = vld [vmem:[%s2058 + $0x180] sm:$0xff]
        %v2108 = vld [vmem:[%s2058 + $0x188] sm:$0xff]
        %v2109 = vld [vmem:[%s2058 + $0x190] sm:$0xff]
        %v2110 = vld [vmem:[%s2058 + $0x198] sm:$0xff]
        %v2111 = vld [vmem:[%s2058 + $0x1a0] sm:$0xff]
        %v2112 = vld [vmem:[%s2058 + $0x1a8] sm:$0xff]
        %v2113 = vld [vmem:[%s2058 + $0x1b0] sm:$0xff]
        %v2114 = vld [vmem:[%s2058 + $0x1b8] sm:$0xff]
        %v2115 = vld [vmem:[%s2058 + $0x1c0] sm:$0xff]
        %v2116 = vld [vmem:[%s2058 + $0x1c8] sm:$0xff]
        %v2117 = vld [vmem:[%s2058 + $0x1d0] sm:$0xff]
        %v2118 = vld [vmem:[%s2058 + $0x1d8] sm:$0xff]
        %v2119 = vld [vmem:[%s2058 + $0x1e0] sm:$0xff]
        %v2120 = vld [vmem:[%s2058 + $0x1e8] sm:$0xff]
        %v2121 = vld [vmem:[%s2058 + $0x1f0] sm:$0xff]
        %v2122 = vld [vmem:[%s2058 + $0x1f8] sm:$0xff]
        %v2123 = vld [vmem:[%s2058 + $0x200] sm:$0xff]
        %v2124 = vld [vmem:[%s2058 + $0x208] sm:$0xff]
        %v2125 = vld [vmem:[%s2058 + $0x210] sm:$0xff]
        %v2126 = vld [vmem:[%s2058 + $0x218] sm:$0xff]
        %v2127 = vld [vmem:[%s2058 + $0x220] sm:$0xff]
        %v2128 = vld [vmem:[%s2058 + $0x228] sm:$0xff]
        %v2129 = vld [vmem:[%s2058 + $0x230] sm:$0xff]
        %v2130 = vld [vmem:[%s2058 + $0x238] sm:$0xff]
        %v2131 = vld [vmem:[%s2058 + $0x240] sm:$0xff]
        %v2132 = vld [vmem:[%s2058 + $0x248] sm:$0xff]
        %v2133 = vld [vmem:[%s2058 + $0x250] sm:$0xff]
        %v2134 = vld [vmem:[%s2058 + $0x258] sm:$0xff]
        %v2135 = vld [vmem:[%s2058 + $0x260] sm:$0xff]
        %v2136 = vld [vmem:[%s2058 + $0x268] sm:$0xff]
        %v2137 = vld [vmem:[%s2058 + $0x270] sm:$0xff]
        %v2138 = vld [vmem:[%s2058 + $0x278] sm:$0xff]
        %v2139 = vld [vmem:[%s2058 + $0x280] sm:$0xff]
        %v2140 = vld [vmem:[%s2058 + $0x288] sm:$0xff]
        %v2141 = vld [vmem:[%s2058 + $0x290] sm:$0xff]
        %v2142 = vld [vmem:[%s2058 + $0x298] sm:$0xff]
        %v2143 = vld [vmem:[%s2058 + $0x2a0] sm:$0xff]
        %v2144 = vld [vmem:[%s2058 + $0x2a8] sm:$0xff]
        %v2145 = vld [vmem:[%s2058 + $0x2b0] sm:$0xff]
        %v2146 = vld [vmem:[%s2058 + $0x2b8] sm:$0xff]
        %v2147 = vld [vmem:[%s2058 + $0x2c0] sm:$0xff]
        %v2148 = vld [vmem:[%s2058 + $0x2c8] sm:$0xff]
        %v2149 = vld [vmem:[%s2058 + $0x2d0] sm:$0xff]
        %v2150 = vld [vmem:[%s2058 + $0x2d8] sm:$0xff]
        %v2151 = vld [vmem:[%s2058 + $0x2e0] sm:$0xff]
        %v2152 = vld [vmem:[%s2058 + $0x2e8] sm:$0xff]
        %v2153 = vld [vmem:[%s2058 + $0x2f0] sm:$0xff]
        %v2154 = vld [vmem:[%s2058 + $0x2f8] sm:$0xff]
        %v2155 = vld [vmem:[%s2058 + $0x300] sm:$0xff]
        %v2156 = vld [vmem:[%s2058 + $0x308] sm:$0xff]
        %v2157 = vld [vmem:[%s2058 + $0x310] sm:$0xff]
        %v2158 = vld [vmem:[%s2058 + $0x318] sm:$0xff]
        %v2159 = vld [vmem:[%s2058 + $0x320] sm:$0xff]
        %v2160 = vld [vmem:[%s2058 + $0x328] sm:$0xff]
        %v2161 = vld [vmem:[%s2058 + $0x330] sm:$0xff]
        %v2162 = vld [vmem:[%s2058 + $0x338] sm:$0xff]
        %v2163 = vld [vmem:[%s2058 + $0x340] sm:$0xff]
        %v2164 = vld [vmem:[%s2058 + $0x348] sm:$0xff]
        %v2165 = vld [vmem:[%s2058 + $0x350] sm:$0xff]
        %v2166 = vld [vmem:[%s2058 + $0x358] sm:$0xff]
        %v2167 = vld [vmem:[%s2058 + $0x360] sm:$0xff]
        %v2168 = vld [vmem:[%s2058 + $0x368] sm:$0xff]
        %v2169 = vld [vmem:[%s2058 + $0x370] sm:$0xff]
        %v2170 = vld [vmem:[%s2058 + $0x378] sm:$0xff]
        %v2171 = vld [vmem:[%s2058 + $0x380] sm:$0xff]
        %v2172 = vld [vmem:[%s2058 + $0x388] sm:$0xff]
        %v2173 = vld [vmem:[%s2058 + $0x390] sm:$0xff]
        %v2174 = vld [vmem:[%s2058 + $0x398] sm:$0xff]
        %v2175 = vld [vmem:[%s2058 + $0x3a0] sm:$0xff]
        %v2176 = vld [vmem:[%s2058 + $0x3a8] sm:$0xff]
        %v2177 = vld [vmem:[%s2058 + $0x3b0] sm:$0xff]
        %v2178 = vld [vmem:[%s2058 + $0x3b8] sm:$0xff]
        %v2179 = vld [vmem:[%s2058 + $0x3c0] sm:$0xff]
        %v2180 = vld [vmem:[%s2058 + $0x3c8] sm:$0xff]
        %v2181 = vld [vmem:[%s2058 + $0x3d0] sm:$0xff]
        %v2182 = vld [vmem:[%s2058 + $0x3d8] sm:$0xff]
        %v2183 = vld [vmem:[%s2058 + $0x3e0] sm:$0xff]
        %v2184 = vld [vmem:[%s2058 + $0x3e8] sm:$0xff]
        %v2185 = vld [vmem:[%s2058 + $0x3f0] sm:$0xff]
        %v2186 = vld [vmem:[%s2058 + $0x3f8] sm:$0xff]
        %v2187 = vld [vmem:[%s2058 + $0x400] sm:$0xff]
        %v2188 = vld [vmem:[%s2058 + $0x408] sm:$0xff]
        %v2189 = vld [vmem:[%s2058 + $0x410] sm:$0xff]
        %v2190 = vld [vmem:[%s2058 + $0x418] sm:$0xff]
        %v2191 = vld [vmem:[%s2058 + $0x420] sm:$0xff]
        %v2192 = vld [vmem:[%s2058 + $0x428] sm:$0xff]
        %v2193 = vld [vmem:[%s2058 + $0x430] sm:$0xff]
        %v2194 = vld [vmem:[%s2058 + $0x438] sm:$0xff]
        %v2195 = vld [vmem:[%s2058 + $0x440] sm:$0xff]
        %v2196 = vld [vmem:[%s2058 + $0x448] sm:$0xff]
        %v2197 = vld [vmem:[%s2058 + $0x450] sm:$0xff]
        %v2198 = vld [vmem:[%s2058 + $0x458] sm:$0xff]
        %v2199 = vld [vmem:[%s2058 + $0x460] sm:$0xff]
        %v2200 = vld [vmem:[%s2058 + $0x468] sm:$0xff]
        %v2201 = vld [vmem:[%s2058 + $0x470] sm:$0xff]
        %v2202 = vld [vmem:[%s2058 + $0x478] sm:$0xff]
        %v2203 = vld [vmem:[%s2058 + $0x480] sm:$0xff]
        %v2204 = vld [vmem:[%s2058 + $0x488] sm:$0xff]
        %v2205 = vld [vmem:[%s2058 + $0x490] sm:$0xff]
        %v2206 = vld [vmem:[%s2058 + $0x498] sm:$0xff]
        %v2207 = vld [vmem:[%s2058 + $0x4a0] sm:$0xff]
        %v2208 = vld [vmem:[%s2058 + $0x4a8] sm:$0xff]
        %v2209 = vld [vmem:[%s2058 + $0x4b0] sm:$0xff]
        %v2210 = vld [vmem:[%s2058 + $0x4b8] sm:$0xff]
        %v2211 = vld [vmem:[%s2058 + $0x4c0] sm:$0xff]
        %v2212 = vld [vmem:[%s2058 + $0x4c8] sm:$0xff]
        %v2213 = vld [vmem:[%s2058 + $0x4d0] sm:$0xff]
        %v2214 = vld [vmem:[%s2058 + $0x4d8] sm:$0xff]
        %v2215 = vld [vmem:[%s2058 + $0x4e0] sm:$0xff]
        %v2216 = vld [vmem:[%s2058 + $0x4e8] sm:$0xff]
        %v2217 = vld [vmem:[%s2058 + $0x4f0] sm:$0xff]
        %v2218 = vld [vmem:[%s2058 + $0x4f8] sm:$0xff]
        %s2219 = scalar_lea.vmem [#allocation9], 2
        %v2220 = vld [vmem:[%s2219] sm:$0x3]
        %v2222 = vlaneseq
        %v2223 = vshrl.u32 %v2222, 7
        %v2224 = vsub.s32 0, %v2223
        %v2225 = vrot.slane %v2220, %v2224
        %v2226 = vlaneseq
        %v2227 = vshrl.u32 %v2226, 7
        %v2228 = vsub.s32 1, %v2227
        %v2229 = vrot.slane %v2220, %v2228
        %v2242 = vunpack.c.l.b16 %v2048
        %v2243 = vunpack.c.h.b16 %v2048
        %v2244 = vunpack.c.l.b16 %v2049
        %v2245 = vunpack.c.h.b16 %v2049
        %v2246 = vunpack.c.l.b16 %v2050
        %v2247 = vunpack.c.h.b16 %v2050
        %v2248 = vunpack.c.l.b16 %v2051
        %v2249 = vunpack.c.h.b16 %v2051
        %v2250 = vunpack.c.l.b16 %v2052
        %v2251 = vunpack.c.h.b16 %v2052
        %v2252 = vunpack.c.l.b16 %v2053
        %v2253 = vunpack.c.h.b16 %v2053
        %v2254 = vunpack.c.l.b16 %v2054
        %v2255 = vunpack.c.h.b16 %v2054
        %v2256 = vunpack.c.l.b16 %v2055
        %v2257 = vunpack.c.h.b16 %v2055
        %v2258 = vunpack.c.l.b16 %v2056
        %v2259 = vunpack.c.h.b16 %v2056
        %v2260 = vunpack.c.l.b16 %v2057
        %v2261 = vunpack.c.h.b16 %v2057
        %v2262 = vpack.c.b16 %v2252, %v2242
        %v2263 = vpack.c.b16 %v2253, %v2243
        %v2264 = vpack.c.b16 %v2254, %v2244
        %v2265 = vpack.c.b16 %v2255, %v2245
        %v2266 = vpack.c.b16 %v2256, %v2246
        %v2267 = vpack.c.b16 %v2257, %v2247
        %v2268 = vpack.c.b16 %v2258, %v2248
        %v2269 = vpack.c.b16 %v2259, %v2249
        %v2270 = vpack.c.b16 %v2260, %v2250
        %v2271 = vpack.c.b16 %v2261, %v2251
        %v2442 = vunpack.c.l.b16 %v2059
        %v2443 = vunpack.c.h.b16 %v2059
        %v2444 = vunpack.c.l.b16 %v2060
        %v2445 = vunpack.c.h.b16 %v2060
        %v2446 = vunpack.c.l.b16 %v2061
        %v2447 = vunpack.c.h.b16 %v2061
        %v2448 = vunpack.c.l.b16 %v2062
        %v2449 = vunpack.c.h.b16 %v2062
        %v2450 = vunpack.c.l.b16 %v2063
        %v2451 = vunpack.c.h.b16 %v2063
        %v2452 = vunpack.c.l.b16 %v2064
        %v2453 = vunpack.c.h.b16 %v2064
        %v2454 = vunpack.c.l.b16 %v2065
        %v2455 = vunpack.c.h.b16 %v2065
        %v2456 = vunpack.c.l.b16 %v2066
        %v2457 = vunpack.c.h.b16 %v2066
        %v2458 = vunpack.c.l.b16 %v2067
        %v2459 = vunpack.c.h.b16 %v2067
        %v2460 = vunpack.c.l.b16 %v2068
        %v2461 = vunpack.c.h.b16 %v2068
        %v2462 = vunpack.c.l.b16 %v2069
        %v2463 = vunpack.c.h.b16 %v2069
        %v2464 = vunpack.c.l.b16 %v2070
        %v2465 = vunpack.c.h.b16 %v2070
        %v2466 = vunpack.c.l.b16 %v2071
        %v2467 = vunpack.c.h.b16 %v2071
        %v2468 = vunpack.c.l.b16 %v2072
        %v2469 = vunpack.c.h.b16 %v2072
        %v2470 = vunpack.c.l.b16 %v2073
        %v2471 = vunpack.c.h.b16 %v2073
        %v2472 = vunpack.c.l.b16 %v2074
        %v2473 = vunpack.c.h.b16 %v2074
        %v2474 = vunpack.c.l.b16 %v2075
        %v2475 = vunpack.c.h.b16 %v2075
        %v2476 = vunpack.c.l.b16 %v2076
        %v2477 = vunpack.c.h.b16 %v2076
        %v2478 = vunpack.c.l.b16 %v2077
        %v2479 = vunpack.c.h.b16 %v2077
        %v2480 = vunpack.c.l.b16 %v2078
        %v2481 = vunpack.c.h.b16 %v2078
        %v2482 = vunpack.c.l.b16 %v2079
        %v2483 = vunpack.c.h.b16 %v2079
        %v2484 = vunpack.c.l.b16 %v2080
        %v2485 = vunpack.c.h.b16 %v2080
        %v2486 = vunpack.c.l.b16 %v2081
        %v2487 = vunpack.c.h.b16 %v2081
        %v2488 = vunpack.c.l.b16 %v2082
        %v2489 = vunpack.c.h.b16 %v2082
        %v2490 = vunpack.c.l.b16 %v2083
        %v2491 = vunpack.c.h.b16 %v2083
        %v2492 = vunpack.c.l.b16 %v2084
        %v2493 = vunpack.c.h.b16 %v2084
        %v2494 = vunpack.c.l.b16 %v2085
        %v2495 = vunpack.c.h.b16 %v2085
        %v2496 = vunpack.c.l.b16 %v2086
        %v2497 = vunpack.c.h.b16 %v2086
        %v2498 = vunpack.c.l.b16 %v2087
        %v2499 = vunpack.c.h.b16 %v2087
        %v2500 = vunpack.c.l.b16 %v2088
        %v2501 = vunpack.c.h.b16 %v2088
        %v2502 = vunpack.c.l.b16 %v2089
        %v2503 = vunpack.c.h.b16 %v2089
        %v2504 = vunpack.c.l.b16 %v2090
        %v2505 = vunpack.c.h.b16 %v2090
        %v2506 = vunpack.c.l.b16 %v2091
        %v2507 = vunpack.c.h.b16 %v2091
        %v2508 = vunpack.c.l.b16 %v2092
        %v2509 = vunpack.c.h.b16 %v2092
        %v2510 = vunpack.c.l.b16 %v2093
        %v2511 = vunpack.c.h.b16 %v2093
        %v2512 = vunpack.c.l.b16 %v2094
        %v2513 = vunpack.c.h.b16 %v2094
        %v2514 = vunpack.c.l.b16 %v2095
        %v2515 = vunpack.c.h.b16 %v2095
        %v2516 = vunpack.c.l.b16 %v2096
        %v2517 = vunpack.c.h.b16 %v2096
        %v2518 = vunpack.c.l.b16 %v2097
        %v2519 = vunpack.c.h.b16 %v2097
        %v2520 = vunpack.c.l.b16 %v2098
        %v2521 = vunpack.c.h.b16 %v2098
        %v2522 = vunpack.c.l.b16 %v2099
        %v2523 = vunpack.c.h.b16 %v2099
        %v2524 = vunpack.c.l.b16 %v2100
        %v2525 = vunpack.c.h.b16 %v2100
        %v2526 = vunpack.c.l.b16 %v2101
        %v2527 = vunpack.c.h.b16 %v2101
        %v2528 = vunpack.c.l.b16 %v2102
        %v2529 = vunpack.c.h.b16 %v2102
        %v2530 = vunpack.c.l.b16 %v2103
        %v2531 = vunpack.c.h.b16 %v2103
        %v2532 = vunpack.c.l.b16 %v2104
        %v2533 = vunpack.c.h.b16 %v2104
        %v2534 = vunpack.c.l.b16 %v2105
        %v2535 = vunpack.c.h.b16 %v2105
        %v2536 = vunpack.c.l.b16 %v2106
        %v2537 = vunpack.c.h.b16 %v2106
        %v2538 = vunpack.c.l.b16 %v2107
        %v2539 = vunpack.c.h.b16 %v2107
        %v2540 = vunpack.c.l.b16 %v2108
        %v2541 = vunpack.c.h.b16 %v2108
        %v2542 = vunpack.c.l.b16 %v2109
        %v2543 = vunpack.c.h.b16 %v2109
        %v2544 = vunpack.c.l.b16 %v2110
        %v2545 = vunpack.c.h.b16 %v2110
        %v2546 = vunpack.c.l.b16 %v2111
        %v2547 = vunpack.c.h.b16 %v2111
        %v2548 = vunpack.c.l.b16 %v2112
        %v2549 = vunpack.c.h.b16 %v2112
        %v2550 = vunpack.c.l.b16 %v2113
        %v2551 = vunpack.c.h.b16 %v2113
        %v2552 = vunpack.c.l.b16 %v2114
        %v2553 = vunpack.c.h.b16 %v2114
        %v2554 = vunpack.c.l.b16 %v2115
        %v2555 = vunpack.c.h.b16 %v2115
        %v2556 = vunpack.c.l.b16 %v2116
        %v2557 = vunpack.c.h.b16 %v2116
        %v2558 = vunpack.c.l.b16 %v2117
        %v2559 = vunpack.c.h.b16 %v2117
        %v2560 = vunpack.c.l.b16 %v2118
        %v2561 = vunpack.c.h.b16 %v2118
        %v2562 = vunpack.c.l.b16 %v2119
        %v2563 = vunpack.c.h.b16 %v2119
        %v2564 = vunpack.c.l.b16 %v2120
        %v2565 = vunpack.c.h.b16 %v2120
        %v2566 = vunpack.c.l.b16 %v2121
        %v2567 = vunpack.c.h.b16 %v2121
        %v2568 = vunpack.c.l.b16 %v2122
        %v2569 = vunpack.c.h.b16 %v2122
        %v2570 = vunpack.c.l.b16 %v2123
        %v2571 = vunpack.c.h.b16 %v2123
        %v2572 = vunpack.c.l.b16 %v2124
        %v2573 = vunpack.c.h.b16 %v2124
        %v2574 = vunpack.c.l.b16 %v2125
        %v2575 = vunpack.c.h.b16 %v2125
        %v2576 = vunpack.c.l.b16 %v2126
        %v2577 = vunpack.c.h.b16 %v2126
        %v2578 = vunpack.c.l.b16 %v2127
        %v2579 = vunpack.c.h.b16 %v2127
        %v2580 = vunpack.c.l.b16 %v2128
        %v2581 = vunpack.c.h.b16 %v2128
        %v2582 = vunpack.c.l.b16 %v2129
        %v2583 = vunpack.c.h.b16 %v2129
        %v2584 = vunpack.c.l.b16 %v2130
        %v2585 = vunpack.c.h.b16 %v2130
        %v2586 = vunpack.c.l.b16 %v2131
        %v2587 = vunpack.c.h.b16 %v2131
        %v2588 = vunpack.c.l.b16 %v2132
        %v2589 = vunpack.c.h.b16 %v2132
        %v2590 = vunpack.c.l.b16 %v2133
        %v2591 = vunpack.c.h.b16 %v2133
        %v2592 = vunpack.c.l.b16 %v2134
        %v2593 = vunpack.c.h.b16 %v2134
        %v2594 = vunpack.c.l.b16 %v2135
        %v2595 = vunpack.c.h.b16 %v2135
        %v2596 = vunpack.c.l.b16 %v2136
        %v2597 = vunpack.c.h.b16 %v2136
        %v2598 = vunpack.c.l.b16 %v2137
        %v2599 = vunpack.c.h.b16 %v2137
        %v2600 = vunpack.c.l.b16 %v2138
        %v2601 = vunpack.c.h.b16 %v2138
        %v2602 = vunpack.c.l.b16 %v2139
        %v2603 = vunpack.c.h.b16 %v2139
        %v2604 = vunpack.c.l.b16 %v2140
        %v2605 = vunpack.c.h.b16 %v2140
        %v2606 = vunpack.c.l.b16 %v2141
        %v2607 = vunpack.c.h.b16 %v2141
        %v2608 = vunpack.c.l.b16 %v2142
        %v2609 = vunpack.c.h.b16 %v2142
        %v2610 = vunpack.c.l.b16 %v2143
        %v2611 = vunpack.c.h.b16 %v2143
        %v2612 = vunpack.c.l.b16 %v2144
        %v2613 = vunpack.c.h.b16 %v2144
        %v2614 = vunpack.c.l.b16 %v2145
        %v2615 = vunpack.c.h.b16 %v2145
        %v2616 = vunpack.c.l.b16 %v2146
        %v2617 = vunpack.c.h.b16 %v2146
        %v2618 = vunpack.c.l.b16 %v2147
        %v2619 = vunpack.c.h.b16 %v2147
        %v2620 = vunpack.c.l.b16 %v2148
        %v2621 = vunpack.c.h.b16 %v2148
        %v2622 = vunpack.c.l.b16 %v2149
        %v2623 = vunpack.c.h.b16 %v2149
        %v2624 = vunpack.c.l.b16 %v2150
        %v2625 = vunpack.c.h.b16 %v2150
        %v2626 = vunpack.c.l.b16 %v2151
        %v2627 = vunpack.c.h.b16 %v2151
        %v2628 = vunpack.c.l.b16 %v2152
        %v2629 = vunpack.c.h.b16 %v2152
        %v2630 = vunpack.c.l.b16 %v2153
        %v2631 = vunpack.c.h.b16 %v2153
        %v2632 = vunpack.c.l.b16 %v2154
        %v2633 = vunpack.c.h.b16 %v2154
        %v2634 = vunpack.c.l.b16 %v2155
        %v2635 = vunpack.c.h.b16 %v2155
        %v2636 = vunpack.c.l.b16 %v2156
        %v2637 = vunpack.c.h.b16 %v2156
        %v2638 = vunpack.c.l.b16 %v2157
        %v2639 = vunpack.c.h.b16 %v2157
        %v2640 = vunpack.c.l.b16 %v2158
        %v2641 = vunpack.c.h.b16 %v2158
        %v2642 = vunpack.c.l.b16 %v2159
        %v2643 = vunpack.c.h.b16 %v2159
        %v2644 = vunpack.c.l.b16 %v2160
        %v2645 = vunpack.c.h.b16 %v2160
        %v2646 = vunpack.c.l.b16 %v2161
        %v2647 = vunpack.c.h.b16 %v2161
        %v2648 = vunpack.c.l.b16 %v2162
        %v2649 = vunpack.c.h.b16 %v2162
        %v2650 = vunpack.c.l.b16 %v2163
        %v2651 = vunpack.c.h.b16 %v2163
        %v2652 = vunpack.c.l.b16 %v2164
        %v2653 = vunpack.c.h.b16 %v2164
        %v2654 = vunpack.c.l.b16 %v2165
        %v2655 = vunpack.c.h.b16 %v2165
        %v2656 = vunpack.c.l.b16 %v2166
        %v2657 = vunpack.c.h.b16 %v2166
        %v2658 = vunpack.c.l.b16 %v2167
        %v2659 = vunpack.c.h.b16 %v2167
        %v2660 = vunpack.c.l.b16 %v2168
        %v2661 = vunpack.c.h.b16 %v2168
        %v2662 = vunpack.c.l.b16 %v2169
        %v2663 = vunpack.c.h.b16 %v2169
        %v2664 = vunpack.c.l.b16 %v2170
        %v2665 = vunpack.c.h.b16 %v2170
        %v2666 = vunpack.c.l.b16 %v2171
        %v2667 = vunpack.c.h.b16 %v2171
        %v2668 = vunpack.c.l.b16 %v2172
        %v2669 = vunpack.c.h.b16 %v2172
        %v2670 = vunpack.c.l.b16 %v2173
        %v2671 = vunpack.c.h.b16 %v2173
        %v2672 = vunpack.c.l.b16 %v2174
        %v2673 = vunpack.c.h.b16 %v2174
        %v2674 = vunpack.c.l.b16 %v2175
        %v2675 = vunpack.c.h.b16 %v2175
        %v2676 = vunpack.c.l.b16 %v2176
        %v2677 = vunpack.c.h.b16 %v2176
        %v2678 = vunpack.c.l.b16 %v2177
        %v2679 = vunpack.c.h.b16 %v2177
        %v2680 = vunpack.c.l.b16 %v2178
        %v2681 = vunpack.c.h.b16 %v2178
        %v2682 = vunpack.c.l.b16 %v2179
        %v2683 = vunpack.c.h.b16 %v2179
        %v2684 = vunpack.c.l.b16 %v2180
        %v2685 = vunpack.c.h.b16 %v2180
        %v2686 = vunpack.c.l.b16 %v2181
        %v2687 = vunpack.c.h.b16 %v2181
        %v2688 = vunpack.c.l.b16 %v2182
        %v2689 = vunpack.c.h.b16 %v2182
        %v2690 = vunpack.c.l.b16 %v2183
        %v2691 = vunpack.c.h.b16 %v2183
        %v2692 = vunpack.c.l.b16 %v2184
        %v2693 = vunpack.c.h.b16 %v2184
        %v2694 = vunpack.c.l.b16 %v2185
        %v2695 = vunpack.c.h.b16 %v2185
        %v2696 = vunpack.c.l.b16 %v2186
        %v2697 = vunpack.c.h.b16 %v2186
        %v2698 = vunpack.c.l.b16 %v2187
        %v2699 = vunpack.c.h.b16 %v2187
        %v2700 = vunpack.c.l.b16 %v2188
        %v2701 = vunpack.c.h.b16 %v2188
        %v2702 = vunpack.c.l.b16 %v2189
        %v2703 = vunpack.c.h.b16 %v2189
        %v2704 = vunpack.c.l.b16 %v2190
        %v2705 = vunpack.c.h.b16 %v2190
        %v2706 = vunpack.c.l.b16 %v2191
        %v2707 = vunpack.c.h.b16 %v2191
        %v2708 = vunpack.c.l.b16 %v2192
        %v2709 = vunpack.c.h.b16 %v2192
        %v2710 = vunpack.c.l.b16 %v2193
        %v2711 = vunpack.c.h.b16 %v2193
        %v2712 = vunpack.c.l.b16 %v2194
        %v2713 = vunpack.c.h.b16 %v2194
        %v2714 = vunpack.c.l.b16 %v2195
        %v2715 = vunpack.c.h.b16 %v2195
        %v2716 = vunpack.c.l.b16 %v2196
        %v2717 = vunpack.c.h.b16 %v2196
        %v2718 = vunpack.c.l.b16 %v2197
        %v2719 = vunpack.c.h.b16 %v2197
        %v2720 = vunpack.c.l.b16 %v2198
        %v2721 = vunpack.c.h.b16 %v2198
        %v2722 = vunpack.c.l.b16 %v2199
        %v2723 = vunpack.c.h.b16 %v2199
        %v2724 = vunpack.c.l.b16 %v2200
        %v2725 = vunpack.c.h.b16 %v2200
        %v2726 = vunpack.c.l.b16 %v2201
        %v2727 = vunpack.c.h.b16 %v2201
        %v2728 = vunpack.c.l.b16 %v2202
        %v2729 = vunpack.c.h.b16 %v2202
        %v2730 = vunpack.c.l.b16 %v2203
        %v2731 = vunpack.c.h.b16 %v2203
        %v2732 = vunpack.c.l.b16 %v2204
        %v2733 = vunpack.c.h.b16 %v2204
        %v2734 = vunpack.c.l.b16 %v2205
        %v2735 = vunpack.c.h.b16 %v2205
        %v2736 = vunpack.c.l.b16 %v2206
        %v2737 = vunpack.c.h.b16 %v2206
        %v2738 = vunpack.c.l.b16 %v2207
        %v2739 = vunpack.c.h.b16 %v2207
        %v2740 = vunpack.c.l.b16 %v2208
        %v2741 = vunpack.c.h.b16 %v2208
        %v2742 = vunpack.c.l.b16 %v2209
        %v2743 = vunpack.c.h.b16 %v2209
        %v2744 = vunpack.c.l.b16 %v2210
        %v2745 = vunpack.c.h.b16 %v2210
        %v2746 = vunpack.c.l.b16 %v2211
        %v2747 = vunpack.c.h.b16 %v2211
        %v2748 = vunpack.c.l.b16 %v2212
        %v2749 = vunpack.c.h.b16 %v2212
        %v2750 = vunpack.c.l.b16 %v2213
        %v2751 = vunpack.c.h.b16 %v2213
        %v2752 = vunpack.c.l.b16 %v2214
        %v2753 = vunpack.c.h.b16 %v2214
        %v2754 = vunpack.c.l.b16 %v2215
        %v2755 = vunpack.c.h.b16 %v2215
        %v2756 = vunpack.c.l.b16 %v2216
        %v2757 = vunpack.c.h.b16 %v2216
        %v2758 = vunpack.c.l.b16 %v2217
        %v2759 = vunpack.c.h.b16 %v2217
        %v2760 = vunpack.c.l.b16 %v2218
        %v2761 = vunpack.c.h.b16 %v2218
        %v2762 = vpack.c.b16 %v2444, %v2442
        %v2763 = vpack.c.b16 %v2445, %v2443
        %v2764 = vpack.c.b16 %v2448, %v2446
        %v2765 = vpack.c.b16 %v2449, %v2447
        %v2766 = vpack.c.b16 %v2452, %v2450
        %v2767 = vpack.c.b16 %v2453, %v2451
        %v2768 = vpack.c.b16 %v2456, %v2454
        %v2769 = vpack.c.b16 %v2457, %v2455
        %v2770 = vpack.c.b16 %v2460, %v2458
        %v2771 = vpack.c.b16 %v2461, %v2459
        %v2772 = vpack.c.b16 %v2464, %v2462
        %v2773 = vpack.c.b16 %v2465, %v2463
        %v2774 = vpack.c.b16 %v2468, %v2466
        %v2775 = vpack.c.b16 %v2469, %v2467
        %v2776 = vpack.c.b16 %v2472, %v2470
        %v2777 = vpack.c.b16 %v2473, %v2471
        %v2778 = vpack.c.b16 %v2476, %v2474
        %v2779 = vpack.c.b16 %v2477, %v2475
        %v2780 = vpack.c.b16 %v2480, %v2478
        %v2781 = vpack.c.b16 %v2481, %v2479
        %v2782 = vpack.c.b16 %v2484, %v2482
        %v2783 = vpack.c.b16 %v2485, %v2483
        %v2784 = vpack.c.b16 %v2488, %v2486
        %v2785 = vpack.c.b16 %v2489, %v2487
        %v2786 = vpack.c.b16 %v2492, %v2490
        %v2787 = vpack.c.b16 %v2493, %v2491
        %v2788 = vpack.c.b16 %v2496, %v2494
        %v2789 = vpack.c.b16 %v2497, %v2495
        %v2790 = vpack.c.b16 %v2500, %v2498
        %v2791 = vpack.c.b16 %v2501, %v2499
        %v2792 = vpack.c.b16 %v2504, %v2502
        %v2793 = vpack.c.b16 %v2505, %v2503
        %v2794 = vpack.c.b16 %v2508, %v2506
        %v2795 = vpack.c.b16 %v2509, %v2507
        %v2796 = vpack.c.b16 %v2512, %v2510
        %v2797 = vpack.c.b16 %v2513, %v2511
        %v2798 = vpack.c.b16 %v2516, %v2514
        %v2799 = vpack.c.b16 %v2517, %v2515
        %v2800 = vpack.c.b16 %v2520, %v2518
        %v2801 = vpack.c.b16 %v2521, %v2519
        %v2802 = vpack.c.b16 %v2524, %v2522
        %v2803 = vpack.c.b16 %v2525, %v2523
        %v2804 = vpack.c.b16 %v2528, %v2526
        %v2805 = vpack.c.b16 %v2529, %v2527
        %v2806 = vpack.c.b16 %v2532, %v2530
        %v2807 = vpack.c.b16 %v2533, %v2531
        %v2808 = vpack.c.b16 %v2536, %v2534
        %v2809 = vpack.c.b16 %v2537, %v2535
        %v2810 = vpack.c.b16 %v2540, %v2538
        %v2811 = vpack.c.b16 %v2541, %v2539
        %v2812 = vpack.c.b16 %v2544, %v2542
        %v2813 = vpack.c.b16 %v2545, %v2543
        %v2814 = vpack.c.b16 %v2548, %v2546
        %v2815 = vpack.c.b16 %v2549, %v2547
        %v2816 = vpack.c.b16 %v2552, %v2550
        %v2817 = vpack.c.b16 %v2553, %v2551
        %v2818 = vpack.c.b16 %v2556, %v2554
        %v2819 = vpack.c.b16 %v2557, %v2555
        %v2820 = vpack.c.b16 %v2560, %v2558
        %v2821 = vpack.c.b16 %v2561, %v2559
        %v2822 = vpack.c.b16 %v2564, %v2562
        %v2823 = vpack.c.b16 %v2565, %v2563
        %v2824 = vpack.c.b16 %v2568, %v2566
        %v2825 = vpack.c.b16 %v2569, %v2567
        %v2826 = vpack.c.b16 %v2572, %v2570
        %v2827 = vpack.c.b16 %v2573, %v2571
        %v2828 = vpack.c.b16 %v2576, %v2574
        %v2829 = vpack.c.b16 %v2577, %v2575
        %v2830 = vpack.c.b16 %v2580, %v2578
        %v2831 = vpack.c.b16 %v2581, %v2579
        %v2832 = vpack.c.b16 %v2584, %v2582
        %v2833 = vpack.c.b16 %v2585, %v2583
        %v2834 = vpack.c.b16 %v2588, %v2586
        %v2835 = vpack.c.b16 %v2589, %v2587
        %v2836 = vpack.c.b16 %v2592, %v2590
        %v2837 = vpack.c.b16 %v2593, %v2591
        %v2838 = vpack.c.b16 %v2596, %v2594
        %v2839 = vpack.c.b16 %v2597, %v2595
        %v2840 = vpack.c.b16 %v2600, %v2598
        %v2841 = vpack.c.b16 %v2601, %v2599
        %v2842 = vpack.c.b16 %v2604, %v2602
        %v2843 = vpack.c.b16 %v2605, %v2603
        %v2844 = vpack.c.b16 %v2608, %v2606
        %v2845 = vpack.c.b16 %v2609, %v2607
        %v2846 = vpack.c.b16 %v2612, %v2610
        %v2847 = vpack.c.b16 %v2613, %v2611
        %v2848 = vpack.c.b16 %v2616, %v2614
        %v2849 = vpack.c.b16 %v2617, %v2615
        %v2850 = vpack.c.b16 %v2620, %v2618
        %v2851 = vpack.c.b16 %v2621, %v2619
        %v2852 = vpack.c.b16 %v2624, %v2622
        %v2853 = vpack.c.b16 %v2625, %v2623
        %v2854 = vpack.c.b16 %v2628, %v2626
        %v2855 = vpack.c.b16 %v2629, %v2627
        %v2856 = vpack.c.b16 %v2632, %v2630
        %v2857 = vpack.c.b16 %v2633, %v2631
        %v2858 = vpack.c.b16 %v2636, %v2634
        %v2859 = vpack.c.b16 %v2637, %v2635
        %v2860 = vpack.c.b16 %v2640, %v2638
        %v2861 = vpack.c.b16 %v2641, %v2639
        %v2862 = vpack.c.b16 %v2644, %v2642
        %v2863 = vpack.c.b16 %v2645, %v2643
        %v2864 = vpack.c.b16 %v2648, %v2646
        %v2865 = vpack.c.b16 %v2649, %v2647
        %v2866 = vpack.c.b16 %v2652, %v2650
        %v2867 = vpack.c.b16 %v2653, %v2651
        %v2868 = vpack.c.b16 %v2656, %v2654
        %v2869 = vpack.c.b16 %v2657, %v2655
        %v2870 = vpack.c.b16 %v2660, %v2658
        %v2871 = vpack.c.b16 %v2661, %v2659
        %v2872 = vpack.c.b16 %v2664, %v2662
        %v2873 = vpack.c.b16 %v2665, %v2663
        %v2874 = vpack.c.b16 %v2668, %v2666
        %v2875 = vpack.c.b16 %v2669, %v2667
        %v2876 = vpack.c.b16 %v2672, %v2670
        %v2877 = vpack.c.b16 %v2673, %v2671
        %v2878 = vpack.c.b16 %v2676, %v2674
        %v2879 = vpack.c.b16 %v2677, %v2675
        %v2880 = vpack.c.b16 %v2680, %v2678
        %v2881 = vpack.c.b16 %v2681, %v2679
        %v2882 = vpack.c.b16 %v2684, %v2682
        %v2883 = vpack.c.b16 %v2685, %v2683
        %v2884 = vpack.c.b16 %v2688, %v2686
        %v2885 = vpack.c.b16 %v2689, %v2687
        %v2886 = vpack.c.b16 %v2692, %v2690
        %v2887 = vpack.c.b16 %v2693, %v2691
        %v2888 = vpack.c.b16 %v2696, %v2694
        %v2889 = vpack.c.b16 %v2697, %v2695
        %v2890 = vpack.c.b16 %v2700, %v2698
        %v2891 = vpack.c.b16 %v2701, %v2699
        %v2892 = vpack.c.b16 %v2704, %v2702
        %v2893 = vpack.c.b16 %v2705, %v2703
        %v2894 = vpack.c.b16 %v2708, %v2706
        %v2895 = vpack.c.b16 %v2709, %v2707
        %v2896 = vpack.c.b16 %v2712, %v2710
        %v2897 = vpack.c.b16 %v2713, %v2711
        %v2898 = vpack.c.b16 %v2716, %v2714
        %v2899 = vpack.c.b16 %v2717, %v2715
        %v2900 = vpack.c.b16 %v2720, %v2718
        %v2901 = vpack.c.b16 %v2721, %v2719
        %v2902 = vpack.c.b16 %v2724, %v2722
        %v2903 = vpack.c.b16 %v2725, %v2723
        %v2904 = vpack.c.b16 %v2728, %v2726
        %v2905 = vpack.c.b16 %v2729, %v2727
        %v2906 = vpack.c.b16 %v2732, %v2730
        %v2907 = vpack.c.b16 %v2733, %v2731
        %v2908 = vpack.c.b16 %v2736, %v2734
        %v2909 = vpack.c.b16 %v2737, %v2735
        %v2910 = vpack.c.b16 %v2740, %v2738
        %v2911 = vpack.c.b16 %v2741, %v2739
        %v2912 = vpack.c.b16 %v2744, %v2742
        %v2913 = vpack.c.b16 %v2745, %v2743
        %v2914 = vpack.c.b16 %v2748, %v2746
        %v2915 = vpack.c.b16 %v2749, %v2747
        %v2916 = vpack.c.b16 %v2752, %v2750
        %v2917 = vpack.c.b16 %v2753, %v2751
        %v2918 = vpack.c.b16 %v2756, %v2754
        %v2919 = vpack.c.b16 %v2757, %v2755
        %v2920 = vpack.c.b16 %v2760, %v2758
        %v2921 = vpack.c.b16 %v2761, %v2759
        %3082 = vmatprep.subr.bf16.mxu0 %v2777
        %3083 = vmatpush1.bf16.msra.mxu0 %v2776
        %3084 = vmatprep.subr.bf16.mxu0 %v2775
        %3085 = vmatpush1.bf16.msra.mxu0 %v2774
        %3086 = vmatprep.subr.bf16.mxu0 %v2773
        %3087 = vmatpush1.bf16.msra.mxu0 %v2772
        %3088 = vmatprep.subr.bf16.mxu0 %v2771
        %3089 = vmatpush1.bf16.msra.mxu0 %v2770
        %3090 = vmatprep.subr.bf16.mxu0 %v2769
        %3091 = vmatpush1.bf16.msra.mxu0 %v2768
        %3092 = vmatprep.subr.bf16.mxu0 %v2767
        %3093 = vmatpush1.bf16.msra.mxu0 %v2766
        %3094 = vmatprep.subr.bf16.mxu0 %v2765
        %3095 = vmatpush1.bf16.msra.mxu0 %v2764
        %3096 = vmatprep.subr.bf16.mxu0 %v2763
        %3097 = vmatpush1.bf16.msra.mxu0 %v2762
        %3098 = vmatprep.subr.bf16.mxu0 %v2793
        %3099 = vmatpush2.bf16.msra.mxu0 %v2792
        %3100 = vmatprep.subr.bf16.mxu0 %v2791
        %3101 = vmatpush2.bf16.msra.mxu0 %v2790
        %3102 = vmatprep.subr.bf16.mxu0 %v2789
        %3103 = vmatpush2.bf16.msra.mxu0 %v2788
        %3104 = vmatprep.subr.bf16.mxu0 %v2787
        %3105 = vmatpush2.bf16.msra.mxu0 %v2786
        %3106 = vmatprep.subr.bf16.mxu0 %v2785
        %3107 = vmatpush2.bf16.msra.mxu0 %v2784
        %3108 = vmatprep.subr.bf16.mxu0 %v2783
        %3109 = vmatpush2.bf16.msra.mxu0 %v2782
        %3110 = vmatprep.subr.bf16.mxu0 %v2781
        %3111 = vmatpush2.bf16.msra.mxu0 %v2780
        %3112 = vmatprep.subr.bf16.mxu0 %v2779
        %3113 = vmatpush2.bf16.msra.mxu0 %v2778
        %3114 = vmatprep.mubr.bf16.mxu0 %v2263
        %3115 = vmatmul.mubr.bf16.gmra.mxu0 %v2262
        %v3116 = vpop.f32.mrf.mxu0
        %v3117 = vadd.f32 %v2225, %v3116
        %v3118 = vpop.f32.mrf.mxu0
        %v3119 = vadd.f32 %v2229, %v3118
        %v3120 = vpop.f32.mrf.mxu0
        %v3121 = vadd.f32 %v2225, %v3120
        %v3122 = vpop.f32.mrf.mxu0
        %v3123 = vadd.f32 %v2229, %v3122
        %3124 = vdwg.mxu0
        %3125 = vmatprep.subr.bf16.mxu0 %v2809
        %3126 = vmatpush1.bf16.msra.mxu0 %v2808
        %3127 = vmatprep.subr.bf16.mxu0 %v2807
        %3128 = vmatpush1.bf16.msra.mxu0 %v2806
        %3129 = vmatprep.subr.bf16.mxu0 %v2805
        %3130 = vmatpush1.bf16.msra.mxu0 %v2804
        %3131 = vmatprep.subr.bf16.mxu0 %v2803
        %3132 = vmatpush1.bf16.msra.mxu0 %v2802
        %3133 = vmatprep.subr.bf16.mxu0 %v2801
        %3134 = vmatpush1.bf16.msra.mxu0 %v2800
        %3135 = vmatprep.subr.bf16.mxu0 %v2799
        %3136 = vmatpush1.bf16.msra.mxu0 %v2798
        %3137 = vmatprep.subr.bf16.mxu0 %v2797
        %3138 = vmatpush1.bf16.msra.mxu0 %v2796
        %3139 = vmatprep.subr.bf16.mxu0 %v2795
        %3140 = vmatpush1.bf16.msra.mxu0 %v2794
        %3141 = vmatprep.subr.bf16.mxu0 %v2825
        %3142 = vmatpush2.bf16.msra.mxu0 %v2824
        %3143 = vmatprep.subr.bf16.mxu0 %v2823
        %3144 = vmatpush2.bf16.msra.mxu0 %v2822
        %3145 = vmatprep.subr.bf16.mxu0 %v2821
        %3146 = vmatpush2.bf16.msra.mxu0 %v2820
        %3147 = vmatprep.subr.bf16.mxu0 %v2819
        %3148 = vmatpush2.bf16.msra.mxu0 %v2818
        %3149 = vmatprep.subr.bf16.mxu0 %v2817
        %3150 = vmatpush2.bf16.msra.mxu0 %v2816
        %3151 = vmatprep.subr.bf16.mxu0 %v2815
        %3152 = vmatpush2.bf16.msra.mxu0 %v2814
        %3153 = vmatprep.subr.bf16.mxu0 %v2813
        %3154 = vmatpush2.bf16.msra.mxu0 %v2812
        %3155 = vmatprep.subr.bf16.mxu0 %v2811
        %3156 = vmatpush2.bf16.msra.mxu0 %v2810
        %3157 = vmatprep.mubr.bf16.mxu0 %v2265
        %3158 = vmatmul.mubr.bf16.gmra.mxu0 %v2264
        %v3159 = vpop.f32.mrf.mxu0
        %v3160 = vadd.f32 %v3117, %v3159
        %v3161 = vpop.f32.mrf.mxu0
        %v3162 = vadd.f32 %v3119, %v3161
        %v3163 = vpop.f32.mrf.mxu0
        %v3164 = vadd.f32 %v3121, %v3163
        %v3165 = vpop.f32.mrf.mxu0
        %v3166 = vadd.f32 %v3123, %v3165
        %3167 = vdwg.mxu0
        %3168 = vmatprep.subr.bf16.mxu0 %v2841
        %3169 = vmatpush1.bf16.msra.mxu0 %v2840
        %3170 = vmatprep.subr.bf16.mxu0 %v2839
        %3171 = vmatpush1.bf16.msra.mxu0 %v2838
        %3172 = vmatprep.subr.bf16.mxu0 %v2837
        %3173 = vmatpush1.bf16.msra.mxu0 %v2836
        %3174 = vmatprep.subr.bf16.mxu0 %v2835
        %3175 = vmatpush1.bf16.msra.mxu0 %v2834
        %3176 = vmatprep.subr.bf16.mxu0 %v2833
        %3177 = vmatpush1.bf16.msra.mxu0 %v2832
        %3178 = vmatprep.subr.bf16.mxu0 %v2831
        %3179 = vmatpush1.bf16.msra.mxu0 %v2830
        %3180 = vmatprep.subr.bf16.mxu0 %v2829
        %3181 = vmatpush1.bf16.msra.mxu0 %v2828
        %3182 = vmatprep.subr.bf16.mxu0 %v2827
        %3183 = vmatpush1.bf16.msra.mxu0 %v2826
        %3184 = vmatprep.subr.bf16.mxu0 %v2857
        %3185 = vmatpush2.bf16.msra.mxu0 %v2856
        %3186 = vmatprep.subr.bf16.mxu0 %v2855
        %3187 = vmatpush2.bf16.msra.mxu0 %v2854
        %3188 = vmatprep.subr.bf16.mxu0 %v2853
        %3189 = vmatpush2.bf16.msra.mxu0 %v2852
        %3190 = vmatprep.subr.bf16.mxu0 %v2851
        %3191 = vmatpush2.bf16.msra.mxu0 %v2850
        %3192 = vmatprep.subr.bf16.mxu0 %v2849
        %3193 = vmatpush2.bf16.msra.mxu0 %v2848
        %3194 = vmatprep.subr.bf16.mxu0 %v2847
        %3195 = vmatpush2.bf16.msra.mxu0 %v2846
        %3196 = vmatprep.subr.bf16.mxu0 %v2845
        %3197 = vmatpush2.bf16.msra.mxu0 %v2844
        %3198 = vmatprep.subr.bf16.mxu0 %v2843
        %3199 = vmatpush2.bf16.msra.mxu0 %v2842
        %3200 = vmatprep.mubr.bf16.mxu0 %v2267
        %3201 = vmatmul.mubr.bf16.gmra.mxu0 %v2266
        %v3202 = vpop.f32.mrf.mxu0
        %v3203 = vadd.f32 %v3160, %v3202
        %v3204 = vpop.f32.mrf.mxu0
        %v3205 = vadd.f32 %v3162, %v3204
        %v3206 = vpop.f32.mrf.mxu0
        %v3207 = vadd.f32 %v3164, %v3206
        %v3208 = vpop.f32.mrf.mxu0
        %v3209 = vadd.f32 %v3166, %v3208
        %3210 = vdwg.mxu0
        %3211 = vmatprep.subr.bf16.mxu0 %v2873
        %3212 = vmatpush1.bf16.msra.mxu0 %v2872
        %3213 = vmatprep.subr.bf16.mxu0 %v2871
        %3214 = vmatpush1.bf16.msra.mxu0 %v2870
        %3215 = vmatprep.subr.bf16.mxu0 %v2869
        %3216 = vmatpush1.bf16.msra.mxu0 %v2868
        %3217 = vmatprep.subr.bf16.mxu0 %v2867
        %3218 = vmatpush1.bf16.msra.mxu0 %v2866
        %3219 = vmatprep.subr.bf16.mxu0 %v2865
        %3220 = vmatpush1.bf16.msra.mxu0 %v2864
        %3221 = vmatprep.subr.bf16.mxu0 %v2863
        %3222 = vmatpush1.bf16.msra.mxu0 %v2862
        %3223 = vmatprep.subr.bf16.mxu0 %v2861
        %3224 = vmatpush1.bf16.msra.mxu0 %v2860
        %3225 = vmatprep.subr.bf16.mxu0 %v2859
        %3226 = vmatpush1.bf16.msra.mxu0 %v2858
        %3227 = vmatprep.subr.bf16.mxu0 %v2889
        %3228 = vmatpush2.bf16.msra.mxu0 %v2888
        %3229 = vmatprep.subr.bf16.mxu0 %v2887
        %3230 = vmatpush2.bf16.msra.mxu0 %v2886
        %3231 = vmatprep.subr.bf16.mxu0 %v2885
        %3232 = vmatpush2.bf16.msra.mxu0 %v2884
        %3233 = vmatprep.subr.bf16.mxu0 %v2883
        %3234 = vmatpush2.bf16.msra.mxu0 %v2882
        %3235 = vmatprep.subr.bf16.mxu0 %v2881
        %3236 = vmatpush2.bf16.msra.mxu0 %v2880
        %3237 = vmatprep.subr.bf16.mxu0 %v2879
        %3238 = vmatpush2.bf16.msra.mxu0 %v2878
        %3239 = vmatprep.subr.bf16.mxu0 %v2877
        %3240 = vmatpush2.bf16.msra.mxu0 %v2876
        %3241 = vmatprep.subr.bf16.mxu0 %v2875
        %3242 = vmatpush2.bf16.msra.mxu0 %v2874
        %3243 = vmatprep.mubr.bf16.mxu0 %v2269
        %3244 = vmatmul.mubr.bf16.gmra.mxu0 %v2268
        %v3245 = vpop.f32.mrf.mxu0
        %v3246 = vadd.f32 %v3203, %v3245
        %v3247 = vpop.f32.mrf.mxu0
        %v3248 = vadd.f32 %v3205, %v3247
        %v3249 = vpop.f32.mrf.mxu0
        %v3250 = vadd.f32 %v3207, %v3249
        %v3251 = vpop.f32.mrf.mxu0
        %v3252 = vadd.f32 %v3209, %v3251
        %3253 = vdwg.mxu0
        %3254 = vmatprep.subr.bf16.mxu0 %v2905
        %3255 = vmatpush1.bf16.msra.mxu0 %v2904
        %3256 = vmatprep.subr.bf16.mxu0 %v2903
        %3257 = vmatpush1.bf16.msra.mxu0 %v2902
        %3258 = vmatprep.subr.bf16.mxu0 %v2901
        %3259 = vmatpush1.bf16.msra.mxu0 %v2900
        %3260 = vmatprep.subr.bf16.mxu0 %v2899
        %3261 = vmatpush1.bf16.msra.mxu0 %v2898
        %3262 = vmatprep.subr.bf16.mxu0 %v2897
        %3263 = vmatpush1.bf16.msra.mxu0 %v2896
        %3264 = vmatprep.subr.bf16.mxu0 %v2895
        %3265 = vmatpush1.bf16.msra.mxu0 %v2894
        %3266 = vmatprep.subr.bf16.mxu0 %v2893
        %3267 = vmatpush1.bf16.msra.mxu0 %v2892
        %3268 = vmatprep.subr.bf16.mxu0 %v2891
        %3269 = vmatpush1.bf16.msra.mxu0 %v2890
        %3270 = vmatprep.subr.bf16.mxu0 %v2921
        %3271 = vmatpush2.bf16.msra.mxu0 %v2920
        %3272 = vmatprep.subr.bf16.mxu0 %v2919
        %3273 = vmatpush2.bf16.msra.mxu0 %v2918
        %3274 = vmatprep.subr.bf16.mxu0 %v2917
        %3275 = vmatpush2.bf16.msra.mxu0 %v2916
        %3276 = vmatprep.subr.bf16.mxu0 %v2915
        %3277 = vmatpush2.bf16.msra.mxu0 %v2914
        %3278 = vmatprep.subr.bf16.mxu0 %v2913
        %3279 = vmatpush2.bf16.msra.mxu0 %v2912
        %3280 = vmatprep.subr.bf16.mxu0 %v2911
        %3281 = vmatpush2.bf16.msra.mxu0 %v2910
        %3282 = vmatprep.subr.bf16.mxu0 %v2909
        %3283 = vmatpush2.bf16.msra.mxu0 %v2908
        %3284 = vmatprep.subr.bf16.mxu0 %v2907
        %3285 = vmatpush2.bf16.msra.mxu0 %v2906
        %3286 = vmatprep.mubr.bf16.mxu0 %v2271
        %3287 = vmatmul.mubr.bf16.gmra.mxu0 %v2270
        %v3288 = vpop.f32.mrf.mxu0
        %v3289 = vadd.f32 %v3246, %v3288
        %v3290 = vpop.f32.mrf.mxu0
        %v3291 = vadd.f32 %v3248, %v3290
        %v3292 = vpop.f32.mrf.mxu0
        %v3293 = vadd.f32 %v3250, %v3292
        %v3294 = vpop.f32.mrf.mxu0
        %v3295 = vadd.f32 %v3252, %v3294
        %3296 = vdwg.mxu0
        %v3297 = vmax.f32 %v3289, 0.0
        %v3298 = vmax.f32 %v3291, 0.0
        %v3299 = vmax.f32 %v3293, 0.0
        %v3300 = vmax.f32 %v3295, 0.0
        %v3305 = vrot.slane %v3297, 6
        %v3306 = vrot.slane %v3298, 6
        %v3307 = vrot.slane %v3299, 6
        %v3308 = vsel %vm360, %v3305, %v3307
        %v3309 = vrot.slane %v3300, 6
        %v3310 = vsel %vm360, %v3306, %v3309
        %3317 = vst [vmem:[#allocation2] sm:$0xfc] %v3305
        %3318 = vst [vmem:[#allocation2 + $0x8] sm:$0xfc] %v3306
        %3319 = vst [vmem:[#allocation2 + $0x10] sm:$0xff] %v3308
        %3320 = vst [vmem:[#allocation2 + $0x18] sm:$0xff] %v3310
        %3321 = vst [vmem:[#allocation2 + $0x20] sm:$0x3] %v3307
        %3322 = vst [vmem:[#allocation2 + $0x28] sm:$0x3] %v3309
        %v3323 = vld [vmem:[#allocation2] sm:$0xff]
        %v3324 = vld [vmem:[#allocation2 + $0x8] sm:$0xff]
        %v3325 = vld [vmem:[#allocation2 + $0x10] sm:$0xff]
        %v3326 = vld [vmem:[#allocation2 + $0x18] sm:$0xff]
        %v3327 = vpack.c.bf16 %v3325, %v3323
        %v3328 = vpack.c.bf16 %v3326, %v3324
        %v3331 = vunpack.c.l.b16 %v3327
        %v3332 = vunpack.c.l.b16 %v3328
        %v3333 = vunpack.c.h.b16 %v3327
        %v3334 = vunpack.c.h.b16 %v3328
        %v3335 = vpack.c.b16 %v3332, %v3331
        %v3336 = vpack.c.b16 %v3334, %v3333
        %3339 = vst [vmem:[#allocation3] sm:$0xff] %v3335
        %3340 = vst [vmem:[#allocation3 + $0x28] sm:$0xff] %v3336
        %v3341 = vld [vmem:[#allocation2] sm:$0xfe]
        %v3342 = vld [vmem:[#allocation2 + $0x8] sm:$0xfe]
        %v3343 = vld [vmem:[#allocation2 + $0x10] sm:$0xff]
        %v3344 = vld [vmem:[#allocation2 + $0x18] sm:$0xff]
        %v3345 = vld [vmem:[#allocation2 + $0x20] sm:$0x1]
        %v3346 = vld [vmem:[#allocation2 + $0x28] sm:$0x1]
        %v3347 = vpack.c.bf16 %v3343, %v3341
        %v3348 = vpack.c.bf16 %v3344, %v3342
        %v3349 = vpack.c.bf16 %v3345, %v3345
        %v3350 = vpack.c.bf16 %v3346, %v3346
        %v3355 = vunpack.c.l.b16 %v3347
        %v3356 = vunpack.c.l.b16 %v3348
        %v3357 = vunpack.c.h.b16 %v3347
        %v3358 = vunpack.c.h.b16 %v3348
        %v3359 = vunpack.c.l.b16 %v3349
        %v3360 = vunpack.c.l.b16 %v3350
        %v3361 = vpack.c.b16 %v3356, %v3355
        %v3362 = vpack.c.b16 %v3358, %v3357
        %v3363 = vpack.c.b16 %v3360, %v3359
        %v3365 = vshrl.u32 %v3361, 16
        %v3367 = vrot.slane %v3365, 4
        %v3368 = vshll.u32 %v3361, 16
        %v3370 = vrot.slane %v3368, 5
        %v3371 = vor.u32 %v3367, %v3370
        %v3372 = vrot.slane %v3371, 4
        %v3374 = vshll.u32 %v3362, 16
        %v3376 = vrot.slane %v3374, 5
        %v3377 = vsel %vm422, %v3372, %v3376
        %v3378 = vshrl.u32 %v3362, 16
        %v3380 = vrot.slane %v3378, 4
        %v3381 = vor.u32 %v3380, %v3376
        %v3382 = vrot.slane %v3381, 4
        %v3384 = vshll.u32 %v3363, 16
        %v3386 = vrot.slane %v3384, 5
        %v3387 = vsel %vm422, %v3382, %v3386
        %3390 = vst [vmem:[#allocation3 + $0x8] sm:$0xff] %v3377
        %3391 = vst [vmem:[#allocation3 + $0x30] sm:$0xff] %v3387
        %v3392 = vld [vmem:[#allocation2] sm:$0xfc]
        %v3393 = vld [vmem:[#allocation2 + $0x8] sm:$0xfc]
        %v3394 = vld [vmem:[#allocation2 + $0x10] sm:$0xff]
        %v3395 = vld [vmem:[#allocation2 + $0x18] sm:$0xff]
        %v3396 = vld [vmem:[#allocation2 + $0x20] sm:$0x3]
        %v3397 = vld [vmem:[#allocation2 + $0x28] sm:$0x3]
        %v3398 = vpack.c.bf16 %v3394, %v3392
        %v3399 = vpack.c.bf16 %v3395, %v3393
        %v3400 = vpack.c.bf16 %v3396, %v3396
        %v3401 = vpack.c.bf16 %v3397, %v3397
        %v3406 = vunpack.c.l.b16 %v3398
        %v3407 = vunpack.c.l.b16 %v3399
        %v3408 = vunpack.c.h.b16 %v3398
        %v3409 = vunpack.c.h.b16 %v3399
        %v3410 = vunpack.c.l.b16 %v3400
        %v3411 = vunpack.c.l.b16 %v3401
        %v3412 = vpack.c.b16 %v3407, %v3406
        %v3413 = vpack.c.b16 %v3409, %v3408
        %v3414 = vpack.c.b16 %v3411, %v3410
        %v3415 = vrot.slane %v3412, 5
        %v3416 = vrot.slane %v3415, 4
        %v3417 = vrot.slane %v3413, 5
        %v3418 = vsel %vm476, %v3416, %v3417
        %v3419 = vrot.slane %v3417, 4
        %v3420 = vrot.slane %v3414, 5
        %v3421 = vsel %vm476, %v3419, %v3420
        %3424 = vst [vmem:[#allocation3 + $0x10] sm:$0xff] %v3418
        %3425 = vst [vmem:[#allocation3 + $0x38] sm:$0xff] %v3421
        %v3426 = vld [vmem:[#allocation2] sm:$0xf8]
        %v3427 = vld [vmem:[#allocation2 + $0x8] sm:$0xf8]
        %v3428 = vld [vmem:[#allocation2 + $0x10] sm:$0xff]
        %v3429 = vld [vmem:[#allocation2 + $0x18] sm:$0xff]
        %v3430 = vld [vmem:[#allocation2 + $0x20] sm:$0x7]
        %v3431 = vld [vmem:[#allocation2 + $0x28] sm:$0x7]
        %v3432 = vpack.c.bf16 %v3428, %v3426
        %v3433 = vpack.c.bf16 %v3429, %v3427
        %v3434 = vpack.c.bf16 %v3430, %v3430
        %v3435 = vpack.c.bf16 %v3431, %v3431
        %v3440 = vunpack.c.l.b16 %v3432
        %v3441 = vunpack.c.l.b16 %v3433
        %v3442 = vunpack.c.h.b16 %v3432
        %v3443 = vunpack.c.h.b16 %v3433
        %v3444 = vunpack.c.l.b16 %v3434
        %v3445 = vunpack.c.l.b16 %v3435
        %v3446 = vpack.c.b16 %v3441, %v3440
        %v3447 = vpack.c.b16 %v3443, %v3442
        %v3448 = vpack.c.b16 %v3445, %v3444
        %v3450 = vshrl.u32 %v3446, 16
        %v3452 = vrot.slane %v3450, 5
        %v3453 = vshll.u32 %v3446, 16
        %v3455 = vrot.slane %v3453, 6
        %v3456 = vor.u32 %v3452, %v3455
        %v3457 = vrot.slane %v3456, 4
        %v3459 = vshrl.u32 %v3447, 16
        %v3461 = vrot.slane %v3459, 5
        %v3462 = vshll.u32 %v3447, 16
        %v3464 = vrot.slane %v3462, 6
        %v3465 = vor.u32 %v3461, %v3464
        %v3466 = vsel %vm513, %v3457, %v3465
        %v3467 = vrot.slane %v3465, 4
        %v3469 = vshrl.u32 %v3448, 16
        %v3471 = vrot.slane %v3469, 5
        %v3472 = vshll.u32 %v3448, 16
        %v3474 = vrot.slane %v3472, 6
        %v3475 = vor.u32 %v3471, %v3474
        %v3476 = vsel %vm513, %v3467, %v3475
        %3479 = vst [vmem:[#allocation3 + $0x18] sm:$0xff] %v3466
        %3480 = vst [vmem:[#allocation3 + $0x40] sm:$0xff] %v3476
        %v3481 = vld [vmem:[#allocation2] sm:$0xf0]
        %v3482 = vld [vmem:[#allocation2 + $0x8] sm:$0xf0]
        %v3483 = vld [vmem:[#allocation2 + $0x10] sm:$0xff]
        %v3484 = vld [vmem:[#allocation2 + $0x18] sm:$0xff]
        %v3485 = vld [vmem:[#allocation2 + $0x20] sm:$0xf]
        %v3486 = vld [vmem:[#allocation2 + $0x28] sm:$0xf]
        %v3487 = vpack.c.bf16 %v3483, %v3481
        %v3488 = vpack.c.bf16 %v3484, %v3482
        %v3489 = vpack.c.bf16 %v3485, %v3485
        %v3490 = vpack.c.bf16 %v3486, %v3486
        %v3495 = vunpack.c.l.b16 %v3487
        %v3496 = vunpack.c.l.b16 %v3488
        %v3497 = vunpack.c.h.b16 %v3487
        %v3498 = vunpack.c.h.b16 %v3488
        %v3499 = vunpack.c.l.b16 %v3489
        %v3500 = vunpack.c.l.b16 %v3490
        %v3501 = vpack.c.b16 %v3496, %v3495
        %v3502 = vpack.c.b16 %v3498, %v3497
        %v3503 = vpack.c.b16 %v3500, %v3499
        %v3504 = vrot.slane %v3501, 6
        %v3505 = vrot.slane %v3504, 4
        %v3506 = vrot.slane %v3502, 6
        %v3507 = vsel %vm571, %v3505, %v3506
        %v3508 = vrot.slane %v3506, 4
        %v3509 = vrot.slane %v3503, 6
        %v3510 = vsel %vm571, %v3508, %v3509
        %3513 = vst [vmem:[#allocation3 + $0x20] sm:$0xff] %v3507
        %3514 = vst [vmem:[#allocation3 + $0x48] sm:$0xff] %v3510
        %v3515 = vld [vmem:[#allocation3] sm:$0xff]
        %v3516 = vld [vmem:[#allocation3 + $0x8] sm:$0xff]
        %v3517 = vld [vmem:[#allocation3 + $0x10] sm:$0xff]
        %v3518 = vld [vmem:[#allocation3 + $0x18] sm:$0xff]
        %v3519 = vld [vmem:[#allocation3 + $0x20] sm:$0xff]
        %v3520 = vld [vmem:[#allocation3 + $0x28] sm:$0xff]
        %v3521 = vld [vmem:[#allocation3 + $0x30] sm:$0xff]
        %v3522 = vld [vmem:[#allocation3 + $0x38] sm:$0xff]
        %v3523 = vld [vmem:[#allocation3 + $0x40] sm:$0xff]
        %v3524 = vld [vmem:[#allocation3 + $0x48] sm:$0xff]
        %s3525 = scalar_lea.vmem [#allocation8], 2560
        %v3526 = vld [vmem:[%s3525] sm:$0xff]
        %v3527 = vld [vmem:[%s3525 + $0x8] sm:$0xff]
        %v3528 = vld [vmem:[%s3525 + $0x10] sm:$0xff]
        %v3529 = vld [vmem:[%s3525 + $0x18] sm:$0xff]
        %v3530 = vld [vmem:[%s3525 + $0x20] sm:$0xff]
        %v3531 = vld [vmem:[%s3525 + $0x28] sm:$0xff]
        %v3532 = vld [vmem:[%s3525 + $0x30] sm:$0xff]
        %v3533 = vld [vmem:[%s3525 + $0x38] sm:$0xff]
        %v3534 = vld [vmem:[%s3525 + $0x40] sm:$0xff]
        %v3535 = vld [vmem:[%s3525 + $0x48] sm:$0xff]
        %v3536 = vld [vmem:[%s3525 + $0x50] sm:$0xff]
        %v3537 = vld [vmem:[%s3525 + $0x58] sm:$0xff]
        %v3538 = vld [vmem:[%s3525 + $0x60] sm:$0xff]
        %v3539 = vld [vmem:[%s3525 + $0x68] sm:$0xff]
        %v3540 = vld [vmem:[%s3525 + $0x70] sm:$0xff]
        %v3541 = vld [vmem:[%s3525 + $0x78] sm:$0xff]
        %v3542 = vld [vmem:[%s3525 + $0x80] sm:$0xff]
        %v3543 = vld [vmem:[%s3525 + $0x88] sm:$0xff]
        %v3544 = vld [vmem:[%s3525 + $0x90] sm:$0xff]
        %v3545 = vld [vmem:[%s3525 + $0x98] sm:$0xff]
        %v3546 = vld [vmem:[%s3525 + $0xa0] sm:$0xff]
        %v3547 = vld [vmem:[%s3525 + $0xa8] sm:$0xff]
        %v3548 = vld [vmem:[%s3525 + $0xb0] sm:$0xff]
        %v3549 = vld [vmem:[%s3525 + $0xb8] sm:$0xff]
        %v3550 = vld [vmem:[%s3525 + $0xc0] sm:$0xff]
        %v3551 = vld [vmem:[%s3525 + $0xc8] sm:$0xff]
        %v3552 = vld [vmem:[%s3525 + $0xd0] sm:$0xff]
        %v3553 = vld [vmem:[%s3525 + $0xd8] sm:$0xff]
        %v3554 = vld [vmem:[%s3525 + $0xe0] sm:$0xff]
        %v3555 = vld [vmem:[%s3525 + $0xe8] sm:$0xff]
        %v3556 = vld [vmem:[%s3525 + $0xf0] sm:$0xff]
        %v3557 = vld [vmem:[%s3525 + $0xf8] sm:$0xff]
        %v3558 = vld [vmem:[%s3525 + $0x100] sm:$0xff]
        %v3559 = vld [vmem:[%s3525 + $0x108] sm:$0xff]
        %v3560 = vld [vmem:[%s3525 + $0x110] sm:$0xff]
        %v3561 = vld [vmem:[%s3525 + $0x118] sm:$0xff]
        %v3562 = vld [vmem:[%s3525 + $0x120] sm:$0xff]
        %v3563 = vld [vmem:[%s3525 + $0x128] sm:$0xff]
        %v3564 = vld [vmem:[%s3525 + $0x130] sm:$0xff]
        %v3565 = vld [vmem:[%s3525 + $0x138] sm:$0xff]
        %v3566 = vld [vmem:[%s3525 + $0x140] sm:$0xff]
        %v3567 = vld [vmem:[%s3525 + $0x148] sm:$0xff]
        %v3568 = vld [vmem:[%s3525 + $0x150] sm:$0xff]
        %v3569 = vld [vmem:[%s3525 + $0x158] sm:$0xff]
        %v3570 = vld [vmem:[%s3525 + $0x160] sm:$0xff]
        %v3571 = vld [vmem:[%s3525 + $0x168] sm:$0xff]
        %v3572 = vld [vmem:[%s3525 + $0x170] sm:$0xff]
        %v3573 = vld [vmem:[%s3525 + $0x178] sm:$0xff]
        %v3574 = vld [vmem:[%s3525 + $0x180] sm:$0xff]
        %v3575 = vld [vmem:[%s3525 + $0x188] sm:$0xff]
        %v3576 = vld [vmem:[%s3525 + $0x190] sm:$0xff]
        %v3577 = vld [vmem:[%s3525 + $0x198] sm:$0xff]
        %v3578 = vld [vmem:[%s3525 + $0x1a0] sm:$0xff]
        %v3579 = vld [vmem:[%s3525 + $0x1a8] sm:$0xff]
        %v3580 = vld [vmem:[%s3525 + $0x1b0] sm:$0xff]
        %v3581 = vld [vmem:[%s3525 + $0x1b8] sm:$0xff]
        %v3582 = vld [vmem:[%s3525 + $0x1c0] sm:$0xff]
        %v3583 = vld [vmem:[%s3525 + $0x1c8] sm:$0xff]
        %v3584 = vld [vmem:[%s3525 + $0x1d0] sm:$0xff]
        %v3585 = vld [vmem:[%s3525 + $0x1d8] sm:$0xff]
        %v3586 = vld [vmem:[%s3525 + $0x1e0] sm:$0xff]
        %v3587 = vld [vmem:[%s3525 + $0x1e8] sm:$0xff]
        %v3588 = vld [vmem:[%s3525 + $0x1f0] sm:$0xff]
        %v3589 = vld [vmem:[%s3525 + $0x1f8] sm:$0xff]
        %v3590 = vld [vmem:[%s3525 + $0x200] sm:$0xff]
        %v3591 = vld [vmem:[%s3525 + $0x208] sm:$0xff]
        %v3592 = vld [vmem:[%s3525 + $0x210] sm:$0xff]
        %v3593 = vld [vmem:[%s3525 + $0x218] sm:$0xff]
        %v3594 = vld [vmem:[%s3525 + $0x220] sm:$0xff]
        %v3595 = vld [vmem:[%s3525 + $0x228] sm:$0xff]
        %v3596 = vld [vmem:[%s3525 + $0x230] sm:$0xff]
        %v3597 = vld [vmem:[%s3525 + $0x238] sm:$0xff]
        %v3598 = vld [vmem:[%s3525 + $0x240] sm:$0xff]
        %v3599 = vld [vmem:[%s3525 + $0x248] sm:$0xff]
        %v3600 = vld [vmem:[%s3525 + $0x250] sm:$0xff]
        %v3601 = vld [vmem:[%s3525 + $0x258] sm:$0xff]
        %v3602 = vld [vmem:[%s3525 + $0x260] sm:$0xff]
        %v3603 = vld [vmem:[%s3525 + $0x268] sm:$0xff]
        %v3604 = vld [vmem:[%s3525 + $0x270] sm:$0xff]
        %v3605 = vld [vmem:[%s3525 + $0x278] sm:$0xff]
        %v3606 = vld [vmem:[%s3525 + $0x280] sm:$0xff]
        %v3607 = vld [vmem:[%s3525 + $0x288] sm:$0xff]
        %v3608 = vld [vmem:[%s3525 + $0x290] sm:$0xff]
        %v3609 = vld [vmem:[%s3525 + $0x298] sm:$0xff]
        %v3610 = vld [vmem:[%s3525 + $0x2a0] sm:$0xff]
        %v3611 = vld [vmem:[%s3525 + $0x2a8] sm:$0xff]
        %v3612 = vld [vmem:[%s3525 + $0x2b0] sm:$0xff]
        %v3613 = vld [vmem:[%s3525 + $0x2b8] sm:$0xff]
        %v3614 = vld [vmem:[%s3525 + $0x2c0] sm:$0xff]
        %v3615 = vld [vmem:[%s3525 + $0x2c8] sm:$0xff]
        %v3616 = vld [vmem:[%s3525 + $0x2d0] sm:$0xff]
        %v3617 = vld [vmem:[%s3525 + $0x2d8] sm:$0xff]
        %v3618 = vld [vmem:[%s3525 + $0x2e0] sm:$0xff]
        %v3619 = vld [vmem:[%s3525 + $0x2e8] sm:$0xff]
        %v3620 = vld [vmem:[%s3525 + $0x2f0] sm:$0xff]
        %v3621 = vld [vmem:[%s3525 + $0x2f8] sm:$0xff]
        %v3622 = vld [vmem:[%s3525 + $0x300] sm:$0xff]
        %v3623 = vld [vmem:[%s3525 + $0x308] sm:$0xff]
        %v3624 = vld [vmem:[%s3525 + $0x310] sm:$0xff]
        %v3625 = vld [vmem:[%s3525 + $0x318] sm:$0xff]
        %v3626 = vld [vmem:[%s3525 + $0x320] sm:$0xff]
        %v3627 = vld [vmem:[%s3525 + $0x328] sm:$0xff]
        %v3628 = vld [vmem:[%s3525 + $0x330] sm:$0xff]
        %v3629 = vld [vmem:[%s3525 + $0x338] sm:$0xff]
        %v3630 = vld [vmem:[%s3525 + $0x340] sm:$0xff]
        %v3631 = vld [vmem:[%s3525 + $0x348] sm:$0xff]
        %v3632 = vld [vmem:[%s3525 + $0x350] sm:$0xff]
        %v3633 = vld [vmem:[%s3525 + $0x358] sm:$0xff]
        %v3634 = vld [vmem:[%s3525 + $0x360] sm:$0xff]
        %v3635 = vld [vmem:[%s3525 + $0x368] sm:$0xff]
        %v3636 = vld [vmem:[%s3525 + $0x370] sm:$0xff]
        %v3637 = vld [vmem:[%s3525 + $0x378] sm:$0xff]
        %v3638 = vld [vmem:[%s3525 + $0x380] sm:$0xff]
        %v3639 = vld [vmem:[%s3525 + $0x388] sm:$0xff]
        %v3640 = vld [vmem:[%s3525 + $0x390] sm:$0xff]
        %v3641 = vld [vmem:[%s3525 + $0x398] sm:$0xff]
        %v3642 = vld [vmem:[%s3525 + $0x3a0] sm:$0xff]
        %v3643 = vld [vmem:[%s3525 + $0x3a8] sm:$0xff]
        %v3644 = vld [vmem:[%s3525 + $0x3b0] sm:$0xff]
        %v3645 = vld [vmem:[%s3525 + $0x3b8] sm:$0xff]
        %v3646 = vld [vmem:[%s3525 + $0x3c0] sm:$0xff]
        %v3647 = vld [vmem:[%s3525 + $0x3c8] sm:$0xff]
        %v3648 = vld [vmem:[%s3525 + $0x3d0] sm:$0xff]
        %v3649 = vld [vmem:[%s3525 + $0x3d8] sm:$0xff]
        %v3650 = vld [vmem:[%s3525 + $0x3e0] sm:$0xff]
        %v3651 = vld [vmem:[%s3525 + $0x3e8] sm:$0xff]
        %v3652 = vld [vmem:[%s3525 + $0x3f0] sm:$0xff]
        %v3653 = vld [vmem:[%s3525 + $0x3f8] sm:$0xff]
        %v3654 = vld [vmem:[%s3525 + $0x400] sm:$0xff]
        %v3655 = vld [vmem:[%s3525 + $0x408] sm:$0xff]
        %v3656 = vld [vmem:[%s3525 + $0x410] sm:$0xff]
        %v3657 = vld [vmem:[%s3525 + $0x418] sm:$0xff]
        %v3658 = vld [vmem:[%s3525 + $0x420] sm:$0xff]
        %v3659 = vld [vmem:[%s3525 + $0x428] sm:$0xff]
        %v3660 = vld [vmem:[%s3525 + $0x430] sm:$0xff]
        %v3661 = vld [vmem:[%s3525 + $0x438] sm:$0xff]
        %v3662 = vld [vmem:[%s3525 + $0x440] sm:$0xff]
        %v3663 = vld [vmem:[%s3525 + $0x448] sm:$0xff]
        %v3664 = vld [vmem:[%s3525 + $0x450] sm:$0xff]
        %v3665 = vld [vmem:[%s3525 + $0x458] sm:$0xff]
        %v3666 = vld [vmem:[%s3525 + $0x460] sm:$0xff]
        %v3667 = vld [vmem:[%s3525 + $0x468] sm:$0xff]
        %v3668 = vld [vmem:[%s3525 + $0x470] sm:$0xff]
        %v3669 = vld [vmem:[%s3525 + $0x478] sm:$0xff]
        %v3670 = vld [vmem:[%s3525 + $0x480] sm:$0xff]
        %v3671 = vld [vmem:[%s3525 + $0x488] sm:$0xff]
        %v3672 = vld [vmem:[%s3525 + $0x490] sm:$0xff]
        %v3673 = vld [vmem:[%s3525 + $0x498] sm:$0xff]
        %v3674 = vld [vmem:[%s3525 + $0x4a0] sm:$0xff]
        %v3675 = vld [vmem:[%s3525 + $0x4a8] sm:$0xff]
        %v3676 = vld [vmem:[%s3525 + $0x4b0] sm:$0xff]
        %v3677 = vld [vmem:[%s3525 + $0x4b8] sm:$0xff]
        %v3678 = vld [vmem:[%s3525 + $0x4c0] sm:$0xff]
        %v3679 = vld [vmem:[%s3525 + $0x4c8] sm:$0xff]
        %v3680 = vld [vmem:[%s3525 + $0x4d0] sm:$0xff]
        %v3681 = vld [vmem:[%s3525 + $0x4d8] sm:$0xff]
        %v3682 = vld [vmem:[%s3525 + $0x4e0] sm:$0xff]
        %v3683 = vld [vmem:[%s3525 + $0x4e8] sm:$0xff]
        %v3684 = vld [vmem:[%s3525 + $0x4f0] sm:$0xff]
        %v3685 = vld [vmem:[%s3525 + $0x4f8] sm:$0xff]
        %s3686 = scalar_lea.vmem [#allocation9], 4
        %v3687 = vld [vmem:[%s3686] sm:$0x3]
        %v3689 = vlaneseq
        %v3690 = vshrl.u32 %v3689, 7
        %v3691 = vsub.s32 0, %v3690
        %v3692 = vrot.slane %v3687, %v3691
        %v3693 = vlaneseq
        %v3694 = vshrl.u32 %v3693, 7
        %v3695 = vsub.s32 1, %v3694
        %v3696 = vrot.slane %v3687, %v3695
        %v3709 = vunpack.c.l.b16 %v3515
        %v3710 = vunpack.c.h.b16 %v3515
        %v3711 = vunpack.c.l.b16 %v3516
        %v3712 = vunpack.c.h.b16 %v3516
        %v3713 = vunpack.c.l.b16 %v3517
        %v3714 = vunpack.c.h.b16 %v3517
        %v3715 = vunpack.c.l.b16 %v3518
        %v3716 = vunpack.c.h.b16 %v3518
        %v3717 = vunpack.c.l.b16 %v3519
        %v3718 = vunpack.c.h.b16 %v3519
        %v3719 = vunpack.c.l.b16 %v3520
        %v3720 = vunpack.c.h.b16 %v3520
        %v3721 = vunpack.c.l.b16 %v3521
        %v3722 = vunpack.c.h.b16 %v3521
        %v3723 = vunpack.c.l.b16 %v3522
        %v3724 = vunpack.c.h.b16 %v3522
        %v3725 = vunpack.c.l.b16 %v3523
        %v3726 = vunpack.c.h.b16 %v3523
        %v3727 = vunpack.c.l.b16 %v3524
        %v3728 = vunpack.c.h.b16 %v3524
        %v3729 = vpack.c.b16 %v3719, %v3709
        %v3730 = vpack.c.b16 %v3720, %v3710
        %v3731 = vpack.c.b16 %v3721, %v3711
        %v3732 = vpack.c.b16 %v3722, %v3712
        %v3733 = vpack.c.b16 %v3723, %v3713
        %v3734 = vpack.c.b16 %v3724, %v3714
        %v3735 = vpack.c.b16 %v3725, %v3715
        %v3736 = vpack.c.b16 %v3726, %v3716
        %v3737 = vpack.c.b16 %v3727, %v3717
        %v3738 = vpack.c.b16 %v3728, %v3718
        %v3909 = vunpack.c.l.b16 %v3526
        %v3910 = vunpack.c.h.b16 %v3526
        %v3911 = vunpack.c.l.b16 %v3527
        %v3912 = vunpack.c.h.b16 %v3527
        %v3913 = vunpack.c.l.b16 %v3528
        %v3914 = vunpack.c.h.b16 %v3528
        %v3915 = vunpack.c.l.b16 %v3529
        %v3916 = vunpack.c.h.b16 %v3529
        %v3917 = vunpack.c.l.b16 %v3530
        %v3918 = vunpack.c.h.b16 %v3530
        %v3919 = vunpack.c.l.b16 %v3531
        %v3920 = vunpack.c.h.b16 %v3531
        %v3921 = vunpack.c.l.b16 %v3532
        %v3922 = vunpack.c.h.b16 %v3532
        %v3923 = vunpack.c.l.b16 %v3533
        %v3924 = vunpack.c.h.b16 %v3533
        %v3925 = vunpack.c.l.b16 %v3534
        %v3926 = vunpack.c.h.b16 %v3534
        %v3927 = vunpack.c.l.b16 %v3535
        %v3928 = vunpack.c.h.b16 %v3535
        %v3929 = vunpack.c.l.b16 %v3536
        %v3930 = vunpack.c.h.b16 %v3536
        %v3931 = vunpack.c.l.b16 %v3537
        %v3932 = vunpack.c.h.b16 %v3537
        %v3933 = vunpack.c.l.b16 %v3538
        %v3934 = vunpack.c.h.b16 %v3538
        %v3935 = vunpack.c.l.b16 %v3539
        %v3936 = vunpack.c.h.b16 %v3539
        %v3937 = vunpack.c.l.b16 %v3540
        %v3938 = vunpack.c.h.b16 %v3540
        %v3939 = vunpack.c.l.b16 %v3541
        %v3940 = vunpack.c.h.b16 %v3541
        %v3941 = vunpack.c.l.b16 %v3542
        %v3942 = vunpack.c.h.b16 %v3542
        %v3943 = vunpack.c.l.b16 %v3543
        %v3944 = vunpack.c.h.b16 %v3543
        %v3945 = vunpack.c.l.b16 %v3544
        %v3946 = vunpack.c.h.b16 %v3544
        %v3947 = vunpack.c.l.b16 %v3545
        %v3948 = vunpack.c.h.b16 %v3545
        %v3949 = vunpack.c.l.b16 %v3546
        %v3950 = vunpack.c.h.b16 %v3546
        %v3951 = vunpack.c.l.b16 %v3547
        %v3952 = vunpack.c.h.b16 %v3547
        %v3953 = vunpack.c.l.b16 %v3548
        %v3954 = vunpack.c.h.b16 %v3548
        %v3955 = vunpack.c.l.b16 %v3549
        %v3956 = vunpack.c.h.b16 %v3549
        %v3957 = vunpack.c.l.b16 %v3550
        %v3958 = vunpack.c.h.b16 %v3550
        %v3959 = vunpack.c.l.b16 %v3551
        %v3960 = vunpack.c.h.b16 %v3551
        %v3961 = vunpack.c.l.b16 %v3552
        %v3962 = vunpack.c.h.b16 %v3552
        %v3963 = vunpack.c.l.b16 %v3553
        %v3964 = vunpack.c.h.b16 %v3553
        %v3965 = vunpack.c.l.b16 %v3554
        %v3966 = vunpack.c.h.b16 %v3554
        %v3967 = vunpack.c.l.b16 %v3555
        %v3968 = vunpack.c.h.b16 %v3555
        %v3969 = vunpack.c.l.b16 %v3556
        %v3970 = vunpack.c.h.b16 %v3556
        %v3971 = vunpack.c.l.b16 %v3557
        %v3972 = vunpack.c.h.b16 %v3557
        %v3973 = vunpack.c.l.b16 %v3558
        %v3974 = vunpack.c.h.b16 %v3558
        %v3975 = vunpack.c.l.b16 %v3559
        %v3976 = vunpack.c.h.b16 %v3559
        %v3977 = vunpack.c.l.b16 %v3560
        %v3978 = vunpack.c.h.b16 %v3560
        %v3979 = vunpack.c.l.b16 %v3561
        %v3980 = vunpack.c.h.b16 %v3561
        %v3981 = vunpack.c.l.b16 %v3562
        %v3982 = vunpack.c.h.b16 %v3562
        %v3983 = vunpack.c.l.b16 %v3563
        %v3984 = vunpack.c.h.b16 %v3563
        %v3985 = vunpack.c.l.b16 %v3564
        %v3986 = vunpack.c.h.b16 %v3564
        %v3987 = vunpack.c.l.b16 %v3565
        %v3988 = vunpack.c.h.b16 %v3565
        %v3989 = vunpack.c.l.b16 %v3566
        %v3990 = vunpack.c.h.b16 %v3566
        %v3991 = vunpack.c.l.b16 %v3567
        %v3992 = vunpack.c.h.b16 %v3567
        %v3993 = vunpack.c.l.b16 %v3568
        %v3994 = vunpack.c.h.b16 %v3568
        %v3995 = vunpack.c.l.b16 %v3569
        %v3996 = vunpack.c.h.b16 %v3569
        %v3997 = vunpack.c.l.b16 %v3570
        %v3998 = vunpack.c.h.b16 %v3570
        %v3999 = vunpack.c.l.b16 %v3571
        %v4000 = vunpack.c.h.b16 %v3571
        %v4001 = vunpack.c.l.b16 %v3572
        %v4002 = vunpack.c.h.b16 %v3572
        %v4003 = vunpack.c.l.b16 %v3573
        %v4004 = vunpack.c.h.b16 %v3573
        %v4005 = vunpack.c.l.b16 %v3574
        %v4006 = vunpack.c.h.b16 %v3574
        %v4007 = vunpack.c.l.b16 %v3575
        %v4008 = vunpack.c.h.b16 %v3575
        %v4009 = vunpack.c.l.b16 %v3576
        %v4010 = vunpack.c.h.b16 %v3576
        %v4011 = vunpack.c.l.b16 %v3577
        %v4012 = vunpack.c.h.b16 %v3577
        %v4013 = vunpack.c.l.b16 %v3578
        %v4014 = vunpack.c.h.b16 %v3578
        %v4015 = vunpack.c.l.b16 %v3579
        %v4016 = vunpack.c.h.b16 %v3579
        %v4017 = vunpack.c.l.b16 %v3580
        %v4018 = vunpack.c.h.b16 %v3580
        %v4019 = vunpack.c.l.b16 %v3581
        %v4020 = vunpack.c.h.b16 %v3581
        %v4021 = vunpack.c.l.b16 %v3582
        %v4022 = vunpack.c.h.b16 %v3582
        %v4023 = vunpack.c.l.b16 %v3583
        %v4024 = vunpack.c.h.b16 %v3583
        %v4025 = vunpack.c.l.b16 %v3584
        %v4026 = vunpack.c.h.b16 %v3584
        %v4027 = vunpack.c.l.b16 %v3585
        %v4028 = vunpack.c.h.b16 %v3585
        %v4029 = vunpack.c.l.b16 %v3586
        %v4030 = vunpack.c.h.b16 %v3586
        %v4031 = vunpack.c.l.b16 %v3587
        %v4032 = vunpack.c.h.b16 %v3587
        %v4033 = vunpack.c.l.b16 %v3588
        %v4034 = vunpack.c.h.b16 %v3588
        %v4035 = vunpack.c.l.b16 %v3589
        %v4036 = vunpack.c.h.b16 %v3589
        %v4037 = vunpack.c.l.b16 %v3590
        %v4038 = vunpack.c.h.b16 %v3590
        %v4039 = vunpack.c.l.b16 %v3591
        %v4040 = vunpack.c.h.b16 %v3591
        %v4041 = vunpack.c.l.b16 %v3592
        %v4042 = vunpack.c.h.b16 %v3592
        %v4043 = vunpack.c.l.b16 %v3593
        %v4044 = vunpack.c.h.b16 %v3593
        %v4045 = vunpack.c.l.b16 %v3594
        %v4046 = vunpack.c.h.b16 %v3594
        %v4047 = vunpack.c.l.b16 %v3595
        %v4048 = vunpack.c.h.b16 %v3595
        %v4049 = vunpack.c.l.b16 %v3596
        %v4050 = vunpack.c.h.b16 %v3596
        %v4051 = vunpack.c.l.b16 %v3597
        %v4052 = vunpack.c.h.b16 %v3597
        %v4053 = vunpack.c.l.b16 %v3598
        %v4054 = vunpack.c.h.b16 %v3598
        %v4055 = vunpack.c.l.b16 %v3599
        %v4056 = vunpack.c.h.b16 %v3599
        %v4057 = vunpack.c.l.b16 %v3600
        %v4058 = vunpack.c.h.b16 %v3600
        %v4059 = vunpack.c.l.b16 %v3601
        %v4060 = vunpack.c.h.b16 %v3601
        %v4061 = vunpack.c.l.b16 %v3602
        %v4062 = vunpack.c.h.b16 %v3602
        %v4063 = vunpack.c.l.b16 %v3603
        %v4064 = vunpack.c.h.b16 %v3603
        %v4065 = vunpack.c.l.b16 %v3604
        %v4066 = vunpack.c.h.b16 %v3604
        %v4067 = vunpack.c.l.b16 %v3605
        %v4068 = vunpack.c.h.b16 %v3605
        %v4069 = vunpack.c.l.b16 %v3606
        %v4070 = vunpack.c.h.b16 %v3606
        %v4071 = vunpack.c.l.b16 %v3607
        %v4072 = vunpack.c.h.b16 %v3607
        %v4073 = vunpack.c.l.b16 %v3608
        %v4074 = vunpack.c.h.b16 %v3608
        %v4075 = vunpack.c.l.b16 %v3609
        %v4076 = vunpack.c.h.b16 %v3609
        %v4077 = vunpack.c.l.b16 %v3610
        %v4078 = vunpack.c.h.b16 %v3610
        %v4079 = vunpack.c.l.b16 %v3611
        %v4080 = vunpack.c.h.b16 %v3611
        %v4081 = vunpack.c.l.b16 %v3612
        %v4082 = vunpack.c.h.b16 %v3612
        %v4083 = vunpack.c.l.b16 %v3613
        %v4084 = vunpack.c.h.b16 %v3613
        %v4085 = vunpack.c.l.b16 %v3614
        %v4086 = vunpack.c.h.b16 %v3614
        %v4087 = vunpack.c.l.b16 %v3615
        %v4088 = vunpack.c.h.b16 %v3615
        %v4089 = vunpack.c.l.b16 %v3616
        %v4090 = vunpack.c.h.b16 %v3616
        %v4091 = vunpack.c.l.b16 %v3617
        %v4092 = vunpack.c.h.b16 %v3617
        %v4093 = vunpack.c.l.b16 %v3618
        %v4094 = vunpack.c.h.b16 %v3618
        %v4095 = vunpack.c.l.b16 %v3619
        %v4096 = vunpack.c.h.b16 %v3619
        %v4097 = vunpack.c.l.b16 %v3620
        %v4098 = vunpack.c.h.b16 %v3620
        %v4099 = vunpack.c.l.b16 %v3621
        %v4100 = vunpack.c.h.b16 %v3621
        %v4101 = vunpack.c.l.b16 %v3622
        %v4102 = vunpack.c.h.b16 %v3622
        %v4103 = vunpack.c.l.b16 %v3623
        %v4104 = vunpack.c.h.b16 %v3623
        %v4105 = vunpack.c.l.b16 %v3624
        %v4106 = vunpack.c.h.b16 %v3624
        %v4107 = vunpack.c.l.b16 %v3625
        %v4108 = vunpack.c.h.b16 %v3625
        %v4109 = vunpack.c.l.b16 %v3626
        %v4110 = vunpack.c.h.b16 %v3626
        %v4111 = vunpack.c.l.b16 %v3627
        %v4112 = vunpack.c.h.b16 %v3627
        %v4113 = vunpack.c.l.b16 %v3628
        %v4114 = vunpack.c.h.b16 %v3628
        %v4115 = vunpack.c.l.b16 %v3629
        %v4116 = vunpack.c.h.b16 %v3629
        %v4117 = vunpack.c.l.b16 %v3630
        %v4118 = vunpack.c.h.b16 %v3630
        %v4119 = vunpack.c.l.b16 %v3631
        %v4120 = vunpack.c.h.b16 %v3631
        %v4121 = vunpack.c.l.b16 %v3632
        %v4122 = vunpack.c.h.b16 %v3632
        %v4123 = vunpack.c.l.b16 %v3633
        %v4124 = vunpack.c.h.b16 %v3633
        %v4125 = vunpack.c.l.b16 %v3634
        %v4126 = vunpack.c.h.b16 %v3634
        %v4127 = vunpack.c.l.b16 %v3635
        %v4128 = vunpack.c.h.b16 %v3635
        %v4129 = vunpack.c.l.b16 %v3636
        %v4130 = vunpack.c.h.b16 %v3636
        %v4131 = vunpack.c.l.b16 %v3637
        %v4132 = vunpack.c.h.b16 %v3637
        %v4133 = vunpack.c.l.b16 %v3638
        %v4134 = vunpack.c.h.b16 %v3638
        %v4135 = vunpack.c.l.b16 %v3639
        %v4136 = vunpack.c.h.b16 %v3639
        %v4137 = vunpack.c.l.b16 %v3640
        %v4138 = vunpack.c.h.b16 %v3640
        %v4139 = vunpack.c.l.b16 %v3641
        %v4140 = vunpack.c.h.b16 %v3641
        %v4141 = vunpack.c.l.b16 %v3642
        %v4142 = vunpack.c.h.b16 %v3642
        %v4143 = vunpack.c.l.b16 %v3643
        %v4144 = vunpack.c.h.b16 %v3643
        %v4145 = vunpack.c.l.b16 %v3644
        %v4146 = vunpack.c.h.b16 %v3644
        %v4147 = vunpack.c.l.b16 %v3645
        %v4148 = vunpack.c.h.b16 %v3645
        %v4149 = vunpack.c.l.b16 %v3646
        %v4150 = vunpack.c.h.b16 %v3646
        %v4151 = vunpack.c.l.b16 %v3647
        %v4152 = vunpack.c.h.b16 %v3647
        %v4153 = vunpack.c.l.b16 %v3648
        %v4154 = vunpack.c.h.b16 %v3648
        %v4155 = vunpack.c.l.b16 %v3649
        %v4156 = vunpack.c.h.b16 %v3649
        %v4157 = vunpack.c.l.b16 %v3650
        %v4158 = vunpack.c.h.b16 %v3650
        %v4159 = vunpack.c.l.b16 %v3651
        %v4160 = vunpack.c.h.b16 %v3651
        %v4161 = vunpack.c.l.b16 %v3652
        %v4162 = vunpack.c.h.b16 %v3652
        %v4163 = vunpack.c.l.b16 %v3653
        %v4164 = vunpack.c.h.b16 %v3653
        %v4165 = vunpack.c.l.b16 %v3654
        %v4166 = vunpack.c.h.b16 %v3654
        %v4167 = vunpack.c.l.b16 %v3655
        %v4168 = vunpack.c.h.b16 %v3655
        %v4169 = vunpack.c.l.b16 %v3656
        %v4170 = vunpack.c.h.b16 %v3656
        %v4171 = vunpack.c.l.b16 %v3657
        %v4172 = vunpack.c.h.b16 %v3657
        %v4173 = vunpack.c.l.b16 %v3658
        %v4174 = vunpack.c.h.b16 %v3658
        %v4175 = vunpack.c.l.b16 %v3659
        %v4176 = vunpack.c.h.b16 %v3659
        %v4177 = vunpack.c.l.b16 %v3660
        %v4178 = vunpack.c.h.b16 %v3660
        %v4179 = vunpack.c.l.b16 %v3661
        %v4180 = vunpack.c.h.b16 %v3661
        %v4181 = vunpack.c.l.b16 %v3662
        %v4182 = vunpack.c.h.b16 %v3662
        %v4183 = vunpack.c.l.b16 %v3663
        %v4184 = vunpack.c.h.b16 %v3663
        %v4185 = vunpack.c.l.b16 %v3664
        %v4186 = vunpack.c.h.b16 %v3664
        %v4187 = vunpack.c.l.b16 %v3665
        %v4188 = vunpack.c.h.b16 %v3665
        %v4189 = vunpack.c.l.b16 %v3666
        %v4190 = vunpack.c.h.b16 %v3666
        %v4191 = vunpack.c.l.b16 %v3667
        %v4192 = vunpack.c.h.b16 %v3667
        %v4193 = vunpack.c.l.b16 %v3668
        %v4194 = vunpack.c.h.b16 %v3668
        %v4195 = vunpack.c.l.b16 %v3669
        %v4196 = vunpack.c.h.b16 %v3669
        %v4197 = vunpack.c.l.b16 %v3670
        %v4198 = vunpack.c.h.b16 %v3670
        %v4199 = vunpack.c.l.b16 %v3671
        %v4200 = vunpack.c.h.b16 %v3671
        %v4201 = vunpack.c.l.b16 %v3672
        %v4202 = vunpack.c.h.b16 %v3672
        %v4203 = vunpack.c.l.b16 %v3673
        %v4204 = vunpack.c.h.b16 %v3673
        %v4205 = vunpack.c.l.b16 %v3674
        %v4206 = vunpack.c.h.b16 %v3674
        %v4207 = vunpack.c.l.b16 %v3675
        %v4208 = vunpack.c.h.b16 %v3675
        %v4209 = vunpack.c.l.b16 %v3676
        %v4210 = vunpack.c.h.b16 %v3676
        %v4211 = vunpack.c.l.b16 %v3677
        %v4212 = vunpack.c.h.b16 %v3677
        %v4213 = vunpack.c.l.b16 %v3678
        %v4214 = vunpack.c.h.b16 %v3678
        %v4215 = vunpack.c.l.b16 %v3679
        %v4216 = vunpack.c.h.b16 %v3679
        %v4217 = vunpack.c.l.b16 %v3680
        %v4218 = vunpack.c.h.b16 %v3680
        %v4219 = vunpack.c.l.b16 %v3681
        %v4220 = vunpack.c.h.b16 %v3681
        %v4221 = vunpack.c.l.b16 %v3682
        %v4222 = vunpack.c.h.b16 %v3682
        %v4223 = vunpack.c.l.b16 %v3683
        %v4224 = vunpack.c.h.b16 %v3683
        %v4225 = vunpack.c.l.b16 %v3684
        %v4226 = vunpack.c.h.b16 %v3684
        %v4227 = vunpack.c.l.b16 %v3685
        %v4228 = vunpack.c.h.b16 %v3685
        %v4229 = vpack.c.b16 %v3911, %v3909
        %v4230 = vpack.c.b16 %v3912, %v3910
        %v4231 = vpack.c.b16 %v3915, %v3913
        %v4232 = vpack.c.b16 %v3916, %v3914
        %v4233 = vpack.c.b16 %v3919, %v3917
        %v4234 = vpack.c.b16 %v3920, %v3918
        %v4235 = vpack.c.b16 %v3923, %v3921
        %v4236 = vpack.c.b16 %v3924, %v3922
        %v4237 = vpack.c.b16 %v3927, %v3925
        %v4238 = vpack.c.b16 %v3928, %v3926
        %v4239 = vpack.c.b16 %v3931, %v3929
        %v4240 = vpack.c.b16 %v3932, %v3930
        %v4241 = vpack.c.b16 %v3935, %v3933
        %v4242 = vpack.c.b16 %v3936, %v3934
        %v4243 = vpack.c.b16 %v3939, %v3937
        %v4244 = vpack.c.b16 %v3940, %v3938
        %v4245 = vpack.c.b16 %v3943, %v3941
        %v4246 = vpack.c.b16 %v3944, %v3942
        %v4247 = vpack.c.b16 %v3947, %v3945
        %v4248 = vpack.c.b16 %v3948, %v3946
        %v4249 = vpack.c.b16 %v3951, %v3949
        %v4250 = vpack.c.b16 %v3952, %v3950
        %v4251 = vpack.c.b16 %v3955, %v3953
        %v4252 = vpack.c.b16 %v3956, %v3954
        %v4253 = vpack.c.b16 %v3959, %v3957
        %v4254 = vpack.c.b16 %v3960, %v3958
        %v4255 = vpack.c.b16 %v3963, %v3961
        %v4256 = vpack.c.b16 %v3964, %v3962
        %v4257 = vpack.c.b16 %v3967, %v3965
        %v4258 = vpack.c.b16 %v3968, %v3966
        %v4259 = vpack.c.b16 %v3971, %v3969
        %v4260 = vpack.c.b16 %v3972, %v3970
        %v4261 = vpack.c.b16 %v3975, %v3973
        %v4262 = vpack.c.b16 %v3976, %v3974
        %v4263 = vpack.c.b16 %v3979, %v3977
        %v4264 = vpack.c.b16 %v3980, %v3978
        %v4265 = vpack.c.b16 %v3983, %v3981
        %v4266 = vpack.c.b16 %v3984, %v3982
        %v4267 = vpack.c.b16 %v3987, %v3985
        %v4268 = vpack.c.b16 %v3988, %v3986
        %v4269 = vpack.c.b16 %v3991, %v3989
        %v4270 = vpack.c.b16 %v3992, %v3990
        %v4271 = vpack.c.b16 %v3995, %v3993
        %v4272 = vpack.c.b16 %v3996, %v3994
        %v4273 = vpack.c.b16 %v3999, %v3997
        %v4274 = vpack.c.b16 %v4000, %v3998
        %v4275 = vpack.c.b16 %v4003, %v4001
        %v4276 = vpack.c.b16 %v4004, %v4002
        %v4277 = vpack.c.b16 %v4007, %v4005
        %v4278 = vpack.c.b16 %v4008, %v4006
        %v4279 = vpack.c.b16 %v4011, %v4009
        %v4280 = vpack.c.b16 %v4012, %v4010
        %v4281 = vpack.c.b16 %v4015, %v4013
        %v4282 = vpack.c.b16 %v4016, %v4014
        %v4283 = vpack.c.b16 %v4019, %v4017
        %v4284 = vpack.c.b16 %v4020, %v4018
        %v4285 = vpack.c.b16 %v4023, %v4021
        %v4286 = vpack.c.b16 %v4024, %v4022
        %v4287 = vpack.c.b16 %v4027, %v4025
        %v4288 = vpack.c.b16 %v4028, %v4026
        %v4289 = vpack.c.b16 %v4031, %v4029
        %v4290 = vpack.c.b16 %v4032, %v4030
        %v4291 = vpack.c.b16 %v4035, %v4033
        %v4292 = vpack.c.b16 %v4036, %v4034
        %v4293 = vpack.c.b16 %v4039, %v4037
        %v4294 = vpack.c.b16 %v4040, %v4038
        %v4295 = vpack.c.b16 %v4043, %v4041
        %v4296 = vpack.c.b16 %v4044, %v4042
        %v4297 = vpack.c.b16 %v4047, %v4045
        %v4298 = vpack.c.b16 %v4048, %v4046
        %v4299 = vpack.c.b16 %v4051, %v4049
        %v4300 = vpack.c.b16 %v4052, %v4050
        %v4301 = vpack.c.b16 %v4055, %v4053
        %v4302 = vpack.c.b16 %v4056, %v4054
        %v4303 = vpack.c.b16 %v4059, %v4057
        %v4304 = vpack.c.b16 %v4060, %v4058
        %v4305 = vpack.c.b16 %v4063, %v4061
        %v4306 = vpack.c.b16 %v4064, %v4062
        %v4307 = vpack.c.b16 %v4067, %v4065
        %v4308 = vpack.c.b16 %v4068, %v4066
        %v4309 = vpack.c.b16 %v4071, %v4069
        %v4310 = vpack.c.b16 %v4072, %v4070
        %v4311 = vpack.c.b16 %v4075, %v4073
        %v4312 = vpack.c.b16 %v4076, %v4074
        %v4313 = vpack.c.b16 %v4079, %v4077
        %v4314 = vpack.c.b16 %v4080, %v4078
        %v4315 = vpack.c.b16 %v4083, %v4081
        %v4316 = vpack.c.b16 %v4084, %v4082
        %v4317 = vpack.c.b16 %v4087, %v4085
        %v4318 = vpack.c.b16 %v4088, %v4086
        %v4319 = vpack.c.b16 %v4091, %v4089
        %v4320 = vpack.c.b16 %v4092, %v4090
        %v4321 = vpack.c.b16 %v4095, %v4093
        %v4322 = vpack.c.b16 %v4096, %v4094
        %v4323 = vpack.c.b16 %v4099, %v4097
        %v4324 = vpack.c.b16 %v4100, %v4098
        %v4325 = vpack.c.b16 %v4103, %v4101
        %v4326 = vpack.c.b16 %v4104, %v4102
        %v4327 = vpack.c.b16 %v4107, %v4105
        %v4328 = vpack.c.b16 %v4108, %v4106
        %v4329 = vpack.c.b16 %v4111, %v4109
        %v4330 = vpack.c.b16 %v4112, %v4110
        %v4331 = vpack.c.b16 %v4115, %v4113
        %v4332 = vpack.c.b16 %v4116, %v4114
        %v4333 = vpack.c.b16 %v4119, %v4117
        %v4334 = vpack.c.b16 %v4120, %v4118
        %v4335 = vpack.c.b16 %v4123, %v4121
        %v4336 = vpack.c.b16 %v4124, %v4122
        %v4337 = vpack.c.b16 %v4127, %v4125
        %v4338 = vpack.c.b16 %v4128, %v4126
        %v4339 = vpack.c.b16 %v4131, %v4129
        %v4340 = vpack.c.b16 %v4132, %v4130
        %v4341 = vpack.c.b16 %v4135, %v4133
        %v4342 = vpack.c.b16 %v4136, %v4134
        %v4343 = vpack.c.b16 %v4139, %v4137
        %v4344 = vpack.c.b16 %v4140, %v4138
        %v4345 = vpack.c.b16 %v4143, %v4141
        %v4346 = vpack.c.b16 %v4144, %v4142
        %v4347 = vpack.c.b16 %v4147, %v4145
        %v4348 = vpack.c.b16 %v4148, %v4146
        %v4349 = vpack.c.b16 %v4151, %v4149
        %v4350 = vpack.c.b16 %v4152, %v4150
        %v4351 = vpack.c.b16 %v4155, %v4153
        %v4352 = vpack.c.b16 %v4156, %v4154
        %v4353 = vpack.c.b16 %v4159, %v4157
        %v4354 = vpack.c.b16 %v4160, %v4158
        %v4355 = vpack.c.b16 %v4163, %v4161
        %v4356 = vpack.c.b16 %v4164, %v4162
        %v4357 = vpack.c.b16 %v4167, %v4165
        %v4358 = vpack.c.b16 %v4168, %v4166
        %v4359 = vpack.c.b16 %v4171, %v4169
        %v4360 = vpack.c.b16 %v4172, %v4170
        %v4361 = vpack.c.b16 %v4175, %v4173
        %v4362 = vpack.c.b16 %v4176, %v4174
        %v4363 = vpack.c.b16 %v4179, %v4177
        %v4364 = vpack.c.b16 %v4180, %v4178
        %v4365 = vpack.c.b16 %v4183, %v4181
        %v4366 = vpack.c.b16 %v4184, %v4182
        %v4367 = vpack.c.b16 %v4187, %v4185
        %v4368 = vpack.c.b16 %v4188, %v4186
        %v4369 = vpack.c.b16 %v4191, %v4189
        %v4370 = vpack.c.b16 %v4192, %v4190
        %v4371 = vpack.c.b16 %v4195, %v4193
        %v4372 = vpack.c.b16 %v4196, %v4194
        %v4373 = vpack.c.b16 %v4199, %v4197
        %v4374 = vpack.c.b16 %v4200, %v4198
        %v4375 = vpack.c.b16 %v4203, %v4201
        %v4376 = vpack.c.b16 %v4204, %v4202
        %v4377 = vpack.c.b16 %v4207, %v4205
        %v4378 = vpack.c.b16 %v4208, %v4206
        %v4379 = vpack.c.b16 %v4211, %v4209
        %v4380 = vpack.c.b16 %v4212, %v4210
        %v4381 = vpack.c.b16 %v4215, %v4213
        %v4382 = vpack.c.b16 %v4216, %v4214
        %v4383 = vpack.c.b16 %v4219, %v4217
        %v4384 = vpack.c.b16 %v4220, %v4218
        %v4385 = vpack.c.b16 %v4223, %v4221
        %v4386 = vpack.c.b16 %v4224, %v4222
        %v4387 = vpack.c.b16 %v4227, %v4225
        %v4388 = vpack.c.b16 %v4228, %v4226
        %4549 = vmatprep.subr.bf16.mxu0 %v4244
        %4550 = vmatpush1.bf16.msra.mxu0 %v4243
        %4551 = vmatprep.subr.bf16.mxu0 %v4242
        %4552 = vmatpush1.bf16.msra.mxu0 %v4241
        %4553 = vmatprep.subr.bf16.mxu0 %v4240
        %4554 = vmatpush1.bf16.msra.mxu0 %v4239
        %4555 = vmatprep.subr.bf16.mxu0 %v4238
        %4556 = vmatpush1.bf16.msra.mxu0 %v4237
        %4557 = vmatprep.subr.bf16.mxu0 %v4236
        %4558 = vmatpush1.bf16.msra.mxu0 %v4235
        %4559 = vmatprep.subr.bf16.mxu0 %v4234
        %4560 = vmatpush1.bf16.msra.mxu0 %v4233
        %4561 = vmatprep.subr.bf16.mxu0 %v4232
        %4562 = vmatpush1.bf16.msra.mxu0 %v4231
        %4563 = vmatprep.subr.bf16.mxu0 %v4230
        %4564 = vmatpush1.bf16.msra.mxu0 %v4229
        %4565 = vmatprep.subr.bf16.mxu0 %v4260
        %4566 = vmatpush2.bf16.msra.mxu0 %v4259
        %4567 = vmatprep.subr.bf16.mxu0 %v4258
        %4568 = vmatpush2.bf16.msra.mxu0 %v4257
        %4569 = vmatprep.subr.bf16.mxu0 %v4256
        %4570 = vmatpush2.bf16.msra.mxu0 %v4255
        %4571 = vmatprep.subr.bf16.mxu0 %v4254
        %4572 = vmatpush2.bf16.msra.mxu0 %v4253
        %4573 = vmatprep.subr.bf16.mxu0 %v4252
        %4574 = vmatpush2.bf16.msra.mxu0 %v4251
        %4575 = vmatprep.subr.bf16.mxu0 %v4250
        %4576 = vmatpush2.bf16.msra.mxu0 %v4249
        %4577 = vmatprep.subr.bf16.mxu0 %v4248
        %4578 = vmatpush2.bf16.msra.mxu0 %v4247
        %4579 = vmatprep.subr.bf16.mxu0 %v4246
        %4580 = vmatpush2.bf16.msra.mxu0 %v4245
        %4581 = vmatprep.mubr.bf16.mxu0 %v3730
        %4582 = vmatmul.mubr.bf16.gmra.mxu0 %v3729
        %v4583 = vpop.f32.mrf.mxu0
        %v4584 = vadd.f32 %v3692, %v4583
        %v4585 = vpop.f32.mrf.mxu0
        %v4586 = vadd.f32 %v3696, %v4585
        %v4587 = vpop.f32.mrf.mxu0
        %v4588 = vadd.f32 %v3692, %v4587
        %v4589 = vpop.f32.mrf.mxu0
        %v4590 = vadd.f32 %v3696, %v4589
        %4591 = vdwg.mxu0
        %4592 = vmatprep.subr.bf16.mxu0 %v4276
        %4593 = vmatpush1.bf16.msra.mxu0 %v4275
        %4594 = vmatprep.subr.bf16.mxu0 %v4274
        %4595 = vmatpush1.bf16.msra.mxu0 %v4273
        %4596 = vmatprep.subr.bf16.mxu0 %v4272
        %4597 = vmatpush1.bf16.msra.mxu0 %v4271
        %4598 = vmatprep.subr.bf16.mxu0 %v4270
        %4599 = vmatpush1.bf16.msra.mxu0 %v4269
        %4600 = vmatprep.subr.bf16.mxu0 %v4268
        %4601 = vmatpush1.bf16.msra.mxu0 %v4267
        %4602 = vmatprep.subr.bf16.mxu0 %v4266
        %4603 = vmatpush1.bf16.msra.mxu0 %v4265
        %4604 = vmatprep.subr.bf16.mxu0 %v4264
        %4605 = vmatpush1.bf16.msra.mxu0 %v4263
        %4606 = vmatprep.subr.bf16.mxu0 %v4262
        %4607 = vmatpush1.bf16.msra.mxu0 %v4261
        %4608 = vmatprep.subr.bf16.mxu0 %v4292
        %4609 = vmatpush2.bf16.msra.mxu0 %v4291
        %4610 = vmatprep.subr.bf16.mxu0 %v4290
        %4611 = vmatpush2.bf16.msra.mxu0 %v4289
        %4612 = vmatprep.subr.bf16.mxu0 %v4288
        %4613 = vmatpush2.bf16.msra.mxu0 %v4287
        %4614 = vmatprep.subr.bf16.mxu0 %v4286
        %4615 = vmatpush2.bf16.msra.mxu0 %v4285
        %4616 = vmatprep.subr.bf16.mxu0 %v4284
        %4617 = vmatpush2.bf16.msra.mxu0 %v4283
        %4618 = vmatprep.subr.bf16.mxu0 %v4282
        %4619 = vmatpush2.bf16.msra.mxu0 %v4281
        %4620 = vmatprep.subr.bf16.mxu0 %v4280
        %4621 = vmatpush2.bf16.msra.mxu0 %v4279
        %4622 = vmatprep.subr.bf16.mxu0 %v4278
        %4623 = vmatpush2.bf16.msra.mxu0 %v4277
        %4624 = vmatprep.mubr.bf16.mxu0 %v3732
        %4625 = vmatmul.mubr.bf16.gmra.mxu0 %v3731
        %v4626 = vpop.f32.mrf.mxu0
        %v4627 = vadd.f32 %v4584, %v4626
        %v4628 = vpop.f32.mrf.mxu0
        %v4629 = vadd.f32 %v4586, %v4628
        %v4630 = vpop.f32.mrf.mxu0
        %v4631 = vadd.f32 %v4588, %v4630
        %v4632 = vpop.f32.mrf.mxu0
        %v4633 = vadd.f32 %v4590, %v4632
        %4634 = vdwg.mxu0
        %4635 = vmatprep.subr.bf16.mxu0 %v4308
        %4636 = vmatpush1.bf16.msra.mxu0 %v4307
        %4637 = vmatprep.subr.bf16.mxu0 %v4306
        %4638 = vmatpush1.bf16.msra.mxu0 %v4305
        %4639 = vmatprep.subr.bf16.mxu0 %v4304
        %4640 = vmatpush1.bf16.msra.mxu0 %v4303
        %4641 = vmatprep.subr.bf16.mxu0 %v4302
        %4642 = vmatpush1.bf16.msra.mxu0 %v4301
        %4643 = vmatprep.subr.bf16.mxu0 %v4300
        %4644 = vmatpush1.bf16.msra.mxu0 %v4299
        %4645 = vmatprep.subr.bf16.mxu0 %v4298
        %4646 = vmatpush1.bf16.msra.mxu0 %v4297
        %4647 = vmatprep.subr.bf16.mxu0 %v4296
        %4648 = vmatpush1.bf16.msra.mxu0 %v4295
        %4649 = vmatprep.subr.bf16.mxu0 %v4294
        %4650 = vmatpush1.bf16.msra.mxu0 %v4293
        %4651 = vmatprep.subr.bf16.mxu0 %v4324
        %4652 = vmatpush2.bf16.msra.mxu0 %v4323
        %4653 = vmatprep.subr.bf16.mxu0 %v4322
        %4654 = vmatpush2.bf16.msra.mxu0 %v4321
        %4655 = vmatprep.subr.bf16.mxu0 %v4320
        %4656 = vmatpush2.bf16.msra.mxu0 %v4319
        %4657 = vmatprep.subr.bf16.mxu0 %v4318
        %4658 = vmatpush2.bf16.msra.mxu0 %v4317
        %4659 = vmatprep.subr.bf16.mxu0 %v4316
        %4660 = vmatpush2.bf16.msra.mxu0 %v4315
        %4661 = vmatprep.subr.bf16.mxu0 %v4314
        %4662 = vmatpush2.bf16.msra.mxu0 %v4313
        %4663 = vmatprep.subr.bf16.mxu0 %v4312
        %4664 = vmatpush2.bf16.msra.mxu0 %v4311
        %4665 = vmatprep.subr.bf16.mxu0 %v4310
        %4666 = vmatpush2.bf16.msra.mxu0 %v4309
        %4667 = vmatprep.mubr.bf16.mxu0 %v3734
        %4668 = vmatmul.mubr.bf16.gmra.mxu0 %v3733
        %v4669 = vpop.f32.mrf.mxu0
        %v4670 = vadd.f32 %v4627, %v4669
        %v4671 = vpop.f32.mrf.mxu0
        %v4672 = vadd.f32 %v4629, %v4671
        %v4673 = vpop.f32.mrf.mxu0
        %v4674 = vadd.f32 %v4631, %v4673
        %v4675 = vpop.f32.mrf.mxu0
        %v4676 = vadd.f32 %v4633, %v4675
        %4677 = vdwg.mxu0
        %4678 = vmatprep.subr.bf16.mxu0 %v4340
        %4679 = vmatpush1.bf16.msra.mxu0 %v4339
        %4680 = vmatprep.subr.bf16.mxu0 %v4338
        %4681 = vmatpush1.bf16.msra.mxu0 %v4337
        %4682 = vmatprep.subr.bf16.mxu0 %v4336
        %4683 = vmatpush1.bf16.msra.mxu0 %v4335
        %4684 = vmatprep.subr.bf16.mxu0 %v4334
        %4685 = vmatpush1.bf16.msra.mxu0 %v4333
        %4686 = vmatprep.subr.bf16.mxu0 %v4332
        %4687 = vmatpush1.bf16.msra.mxu0 %v4331
        %4688 = vmatprep.subr.bf16.mxu0 %v4330
        %4689 = vmatpush1.bf16.msra.mxu0 %v4329
        %4690 = vmatprep.subr.bf16.mxu0 %v4328
        %4691 = vmatpush1.bf16.msra.mxu0 %v4327
        %4692 = vmatprep.subr.bf16.mxu0 %v4326
        %4693 = vmatpush1.bf16.msra.mxu0 %v4325
        %4694 = vmatprep.subr.bf16.mxu0 %v4356
        %4695 = vmatpush2.bf16.msra.mxu0 %v4355
        %4696 = vmatprep.subr.bf16.mxu0 %v4354
        %4697 = vmatpush2.bf16.msra.mxu0 %v4353
        %4698 = vmatprep.subr.bf16.mxu0 %v4352
        %4699 = vmatpush2.bf16.msra.mxu0 %v4351
        %4700 = vmatprep.subr.bf16.mxu0 %v4350
        %4701 = vmatpush2.bf16.msra.mxu0 %v4349
        %4702 = vmatprep.subr.bf16.mxu0 %v4348
        %4703 = vmatpush2.bf16.msra.mxu0 %v4347
        %4704 = vmatprep.subr.bf16.mxu0 %v4346
        %4705 = vmatpush2.bf16.msra.mxu0 %v4345
        %4706 = vmatprep.subr.bf16.mxu0 %v4344
        %4707 = vmatpush2.bf16.msra.mxu0 %v4343
        %4708 = vmatprep.subr.bf16.mxu0 %v4342
        %4709 = vmatpush2.bf16.msra.mxu0 %v4341
        %4710 = vmatprep.mubr.bf16.mxu0 %v3736
        %4711 = vmatmul.mubr.bf16.gmra.mxu0 %v3735
        %v4712 = vpop.f32.mrf.mxu0
        %v4713 = vadd.f32 %v4670, %v4712
        %v4714 = vpop.f32.mrf.mxu0
        %v4715 = vadd.f32 %v4672, %v4714
        %v4716 = vpop.f32.mrf.mxu0
        %v4717 = vadd.f32 %v4674, %v4716
        %v4718 = vpop.f32.mrf.mxu0
        %v4719 = vadd.f32 %v4676, %v4718
        %4720 = vdwg.mxu0
        %4721 = vmatprep.subr.bf16.mxu0 %v4372
        %4722 = vmatpush1.bf16.msra.mxu0 %v4371
        %4723 = vmatprep.subr.bf16.mxu0 %v4370
        %4724 = vmatpush1.bf16.msra.mxu0 %v4369
        %4725 = vmatprep.subr.bf16.mxu0 %v4368
        %4726 = vmatpush1.bf16.msra.mxu0 %v4367
        %4727 = vmatprep.subr.bf16.mxu0 %v4366
        %4728 = vmatpush1.bf16.msra.mxu0 %v4365
        %4729 = vmatprep.subr.bf16.mxu0 %v4364
        %4730 = vmatpush1.bf16.msra.mxu0 %v4363
        %4731 = vmatprep.subr.bf16.mxu0 %v4362
        %4732 = vmatpush1.bf16.msra.mxu0 %v4361
        %4733 = vmatprep.subr.bf16.mxu0 %v4360
        %4734 = vmatpush1.bf16.msra.mxu0 %v4359
        %4735 = vmatprep.subr.bf16.mxu0 %v4358
        %4736 = vmatpush1.bf16.msra.mxu0 %v4357
        %4737 = vmatprep.subr.bf16.mxu0 %v4388
        %4738 = vmatpush2.bf16.msra.mxu0 %v4387
        %4739 = vmatprep.subr.bf16.mxu0 %v4386
        %4740 = vmatpush2.bf16.msra.mxu0 %v4385
        %4741 = vmatprep.subr.bf16.mxu0 %v4384
        %4742 = vmatpush2.bf16.msra.mxu0 %v4383
        %4743 = vmatprep.subr.bf16.mxu0 %v4382
        %4744 = vmatpush2.bf16.msra.mxu0 %v4381
        %4745 = vmatprep.subr.bf16.mxu0 %v4380
        %4746 = vmatpush2.bf16.msra.mxu0 %v4379
        %4747 = vmatprep.subr.bf16.mxu0 %v4378
        %4748 = vmatpush2.bf16.msra.mxu0 %v4377
        %4749 = vmatprep.subr.bf16.mxu0 %v4376
        %4750 = vmatpush2.bf16.msra.mxu0 %v4375
        %4751 = vmatprep.subr.bf16.mxu0 %v4374
        %4752 = vmatpush2.bf16.msra.mxu0 %v4373
        %4753 = vmatprep.mubr.bf16.mxu0 %v3738
        %4754 = vmatmul.mubr.bf16.gmra.mxu0 %v3737
        %v4755 = vpop.f32.mrf.mxu0
        %v4756 = vadd.f32 %v4713, %v4755
        %v4757 = vpop.f32.mrf.mxu0
        %v4758 = vadd.f32 %v4715, %v4757
        %v4759 = vpop.f32.mrf.mxu0
        %v4760 = vadd.f32 %v4717, %v4759
        %v4761 = vpop.f32.mrf.mxu0
        %v4762 = vadd.f32 %v4719, %v4761
        %4763 = vdwg.mxu0
        %v4764 = vmax.f32 %v4756, 0.0
        %v4765 = vmax.f32 %v4758, 0.0
        %v4766 = vmax.f32 %v4760, 0.0
        %v4767 = vmax.f32 %v4762, 0.0
        %v4772 = vrot.slane %v4764, 6
        %v4773 = vrot.slane %v4765, 6
        %v4774 = vrot.slane %v4766, 6
        %v4775 = vsel %vm360, %v4772, %v4774
        %v4776 = vrot.slane %v4767, 6
        %v4777 = vsel %vm360, %v4773, %v4776
        %4784 = vst [vmem:[#allocation2] sm:$0xfc] %v4772
        %4785 = vst [vmem:[#allocation2 + $0x8] sm:$0xfc] %v4773
        %4786 = vst [vmem:[#allocation2 + $0x10] sm:$0xff] %v4775
        %4787 = vst [vmem:[#allocation2 + $0x18] sm:$0xff] %v4777
        %4788 = vst [vmem:[#allocation2 + $0x20] sm:$0x3] %v4774
        %4789 = vst [vmem:[#allocation2 + $0x28] sm:$0x3] %v4776
        %v4790 = vld [vmem:[#allocation2] sm:$0xff]
        %v4791 = vld [vmem:[#allocation2 + $0x8] sm:$0xff]
        %v4792 = vld [vmem:[#allocation2 + $0x10] sm:$0xff]
        %v4793 = vld [vmem:[#allocation2 + $0x18] sm:$0xff]
        %v4794 = vpack.c.bf16 %v4792, %v4790
        %v4795 = vpack.c.bf16 %v4793, %v4791
        %v4798 = vunpack.c.l.b16 %v4794
        %v4799 = vunpack.c.l.b16 %v4795
        %v4800 = vunpack.c.h.b16 %v4794
        %v4801 = vunpack.c.h.b16 %v4795
        %v4802 = vpack.c.b16 %v4799, %v4798
        %v4803 = vpack.c.b16 %v4801, %v4800
        %4806 = vst [vmem:[#allocation3] sm:$0xff] %v4802
        %4807 = vst [vmem:[#allocation3 + $0x28] sm:$0xff] %v4803
        %v4808 = vld [vmem:[#allocation2] sm:$0xfe]
        %v4809 = vld [vmem:[#allocation2 + $0x8] sm:$0xfe]
        %v4810 = vld [vmem:[#allocation2 + $0x10] sm:$0xff]
        %v4811 = vld [vmem:[#allocation2 + $0x18] sm:$0xff]
        %v4812 = vld [vmem:[#allocation2 + $0x20] sm:$0x1]
        %v4813 = vld [vmem:[#allocation2 + $0x28] sm:$0x1]
        %v4814 = vpack.c.bf16 %v4810, %v4808
        %v4815 = vpack.c.bf16 %v4811, %v4809
        %v4816 = vpack.c.bf16 %v4812, %v4812
        %v4817 = vpack.c.bf16 %v4813, %v4813
        %v4822 = vunpack.c.l.b16 %v4814
        %v4823 = vunpack.c.l.b16 %v4815
        %v4824 = vunpack.c.h.b16 %v4814
        %v4825 = vunpack.c.h.b16 %v4815
        %v4826 = vunpack.c.l.b16 %v4816
        %v4827 = vunpack.c.l.b16 %v4817
        %v4828 = vpack.c.b16 %v4823, %v4822
        %v4829 = vpack.c.b16 %v4825, %v4824
        %v4830 = vpack.c.b16 %v4827, %v4826
        %v4832 = vshrl.u32 %v4828, 16
        %v4834 = vrot.slane %v4832, 4
        %v4835 = vshll.u32 %v4828, 16
        %v4837 = vrot.slane %v4835, 5
        %v4838 = vor.u32 %v4834, %v4837
        %v4839 = vrot.slane %v4838, 4
        %v4841 = vshll.u32 %v4829, 16
        %v4843 = vrot.slane %v4841, 5
        %v4844 = vsel %vm422, %v4839, %v4843
        %v4845 = vshrl.u32 %v4829, 16
        %v4847 = vrot.slane %v4845, 4
        %v4848 = vor.u32 %v4847, %v4843
        %v4849 = vrot.slane %v4848, 4
        %v4851 = vshll.u32 %v4830, 16
        %v4853 = vrot.slane %v4851, 5
        %v4854 = vsel %vm422, %v4849, %v4853
        %4857 = vst [vmem:[#allocation3 + $0x8] sm:$0xff] %v4844
        %4858 = vst [vmem:[#allocation3 + $0x30] sm:$0xff] %v4854
        %v4859 = vld [vmem:[#allocation2] sm:$0xfc]
        %v4860 = vld [vmem:[#allocation2 + $0x8] sm:$0xfc]
        %v4861 = vld [vmem:[#allocation2 + $0x10] sm:$0xff]
        %v4862 = vld [vmem:[#allocation2 + $0x18] sm:$0xff]
        %v4863 = vld [vmem:[#allocation2 + $0x20] sm:$0x3]
        %v4864 = vld [vmem:[#allocation2 + $0x28] sm:$0x3]
        %v4865 = vpack.c.bf16 %v4861, %v4859
        %v4866 = vpack.c.bf16 %v4862, %v4860
        %v4867 = vpack.c.bf16 %v4863, %v4863
        %v4868 = vpack.c.bf16 %v4864, %v4864
        %v4873 = vunpack.c.l.b16 %v4865
        %v4874 = vunpack.c.l.b16 %v4866
        %v4875 = vunpack.c.h.b16 %v4865
        %v4876 = vunpack.c.h.b16 %v4866
        %v4877 = vunpack.c.l.b16 %v4867
        %v4878 = vunpack.c.l.b16 %v4868
        %v4879 = vpack.c.b16 %v4874, %v4873
        %v4880 = vpack.c.b16 %v4876, %v4875
        %v4881 = vpack.c.b16 %v4878, %v4877
        %v4882 = vrot.slane %v4879, 5
        %v4883 = vrot.slane %v4882, 4
        %v4884 = vrot.slane %v4880, 5
        %v4885 = vsel %vm476, %v4883, %v4884
        %v4886 = vrot.slane %v4884, 4
        %v4887 = vrot.slane %v4881, 5
        %v4888 = vsel %vm476, %v4886, %v4887
        %4891 = vst [vmem:[#allocation3 + $0x10] sm:$0xff] %v4885
        %4892 = vst [vmem:[#allocation3 + $0x38] sm:$0xff] %v4888
        %v4893 = vld [vmem:[#allocation2] sm:$0xf8]
        %v4894 = vld [vmem:[#allocation2 + $0x8] sm:$0xf8]
        %v4895 = vld [vmem:[#allocation2 + $0x10] sm:$0xff]
        %v4896 = vld [vmem:[#allocation2 + $0x18] sm:$0xff]
        %v4897 = vld [vmem:[#allocation2 + $0x20] sm:$0x7]
        %v4898 = vld [vmem:[#allocation2 + $0x28] sm:$0x7]
        %v4899 = vpack.c.bf16 %v4895, %v4893
        %v4900 = vpack.c.bf16 %v4896, %v4894
        %v4901 = vpack.c.bf16 %v4897, %v4897
        %v4902 = vpack.c.bf16 %v4898, %v4898
        %v4907 = vunpack.c.l.b16 %v4899
        %v4908 = vunpack.c.l.b16 %v4900
        %v4909 = vunpack.c.h.b16 %v4899
        %v4910 = vunpack.c.h.b16 %v4900
        %v4911 = vunpack.c.l.b16 %v4901
        %v4912 = vunpack.c.l.b16 %v4902
        %v4913 = vpack.c.b16 %v4908, %v4907
        %v4914 = vpack.c.b16 %v4910, %v4909
        %v4915 = vpack.c.b16 %v4912, %v4911
        %v4917 = vshrl.u32 %v4913, 16
        %v4919 = vrot.slane %v4917, 5
        %v4920 = vshll.u32 %v4913, 16
        %v4922 = vrot.slane %v4920, 6
        %v4923 = vor.u32 %v4919, %v4922
        %v4924 = vrot.slane %v4923, 4
        %v4926 = vshrl.u32 %v4914, 16
        %v4928 = vrot.slane %v4926, 5
        %v4929 = vshll.u32 %v4914, 16
        %v4931 = vrot.slane %v4929, 6
        %v4932 = vor.u32 %v4928, %v4931
        %v4933 = vsel %vm513, %v4924, %v4932
        %v4934 = vrot.slane %v4932, 4
        %v4936 = vshrl.u32 %v4915, 16
        %v4938 = vrot.slane %v4936, 5
        %v4939 = vshll.u32 %v4915, 16
        %v4941 = vrot.slane %v4939, 6
        %v4942 = vor.u32 %v4938, %v4941
        %v4943 = vsel %vm513, %v4934, %v4942
        %4946 = vst [vmem:[#allocation3 + $0x18] sm:$0xff] %v4933
        %4947 = vst [vmem:[#allocation3 + $0x40] sm:$0xff] %v4943
        %v4948 = vld [vmem:[#allocation2] sm:$0xf0]
        %v4949 = vld [vmem:[#allocation2 + $0x8] sm:$0xf0]
        %v4950 = vld [vmem:[#allocation2 + $0x10] sm:$0xff]
        %v4951 = vld [vmem:[#allocation2 + $0x18] sm:$0xff]
        %v4952 = vld [vmem:[#allocation2 + $0x20] sm:$0xf]
        %v4953 = vld [vmem:[#allocation2 + $0x28] sm:$0xf]
        %v4954 = vpack.c.bf16 %v4950, %v4948
        %v4955 = vpack.c.bf16 %v4951, %v4949
        %v4956 = vpack.c.bf16 %v4952, %v4952
        %v4957 = vpack.c.bf16 %v4953, %v4953
        %v4962 = vunpack.c.l.b16 %v4954
        %v4963 = vunpack.c.l.b16 %v4955
        %v4964 = vunpack.c.h.b16 %v4954
        %v4965 = vunpack.c.h.b16 %v4955
        %v4966 = vunpack.c.l.b16 %v4956
        %v4967 = vunpack.c.l.b16 %v4957
        %v4968 = vpack.c.b16 %v4963, %v4962
        %v4969 = vpack.c.b16 %v4965, %v4964
        %v4970 = vpack.c.b16 %v4967, %v4966
        %v4971 = vrot.slane %v4968, 6
        %v4972 = vrot.slane %v4971, 4
        %v4973 = vrot.slane %v4969, 6
        %v4974 = vsel %vm571, %v4972, %v4973
        %v4975 = vrot.slane %v4973, 4
        %v4976 = vrot.slane %v4970, 6
        %v4977 = vsel %vm571, %v4975, %v4976
        %4980 = vst [vmem:[#allocation3 + $0x20] sm:$0xff] %v4974
        %4981 = vst [vmem:[#allocation3 + $0x48] sm:$0xff] %v4977
        %v4982 = vld [vmem:[#allocation3] sm:$0xff]
        %v4983 = vld [vmem:[#allocation3 + $0x8] sm:$0xff]
        %v4984 = vld [vmem:[#allocation3 + $0x10] sm:$0xff]
        %v4985 = vld [vmem:[#allocation3 + $0x18] sm:$0xff]
        %v4986 = vld [vmem:[#allocation3 + $0x20] sm:$0xff]
        %v4987 = vld [vmem:[#allocation3 + $0x28] sm:$0xff]
        %v4988 = vld [vmem:[#allocation3 + $0x30] sm:$0xff]
        %v4989 = vld [vmem:[#allocation3 + $0x38] sm:$0xff]
        %v4990 = vld [vmem:[#allocation3 + $0x40] sm:$0xff]
        %v4991 = vld [vmem:[#allocation3 + $0x48] sm:$0xff]
        %s4992 = scalar_lea.vmem [#allocation8], 3840
        %v4993 = vld [vmem:[%s4992] sm:$0xff]
        %v4994 = vld [vmem:[%s4992 + $0x8] sm:$0xff]
        %v4995 = vld [vmem:[%s4992 + $0x10] sm:$0xff]
        %v4996 = vld [vmem:[%s4992 + $0x18] sm:$0xff]
        %v4997 = vld [vmem:[%s4992 + $0x20] sm:$0xff]
        %v4998 = vld [vmem:[%s4992 + $0x28] sm:$0xff]
        %v4999 = vld [vmem:[%s4992 + $0x30] sm:$0xff]
        %v5000 = vld [vmem:[%s4992 + $0x38] sm:$0xff]
        %v5001 = vld [vmem:[%s4992 + $0x40] sm:$0xff]
        %v5002 = vld [vmem:[%s4992 + $0x48] sm:$0xff]
        %v5003 = vld [vmem:[%s4992 + $0x50] sm:$0xff]
        %v5004 = vld [vmem:[%s4992 + $0x58] sm:$0xff]
        %v5005 = vld [vmem:[%s4992 + $0x60] sm:$0xff]
        %v5006 = vld [vmem:[%s4992 + $0x68] sm:$0xff]
        %v5007 = vld [vmem:[%s4992 + $0x70] sm:$0xff]
        %v5008 = vld [vmem:[%s4992 + $0x78] sm:$0xff]
        %v5009 = vld [vmem:[%s4992 + $0x80] sm:$0xff]
        %v5010 = vld [vmem:[%s4992 + $0x88] sm:$0xff]
        %v5011 = vld [vmem:[%s4992 + $0x90] sm:$0xff]
        %v5012 = vld [vmem:[%s4992 + $0x98] sm:$0xff]
        %v5013 = vld [vmem:[%s4992 + $0xa0] sm:$0xff]
        %v5014 = vld [vmem:[%s4992 + $0xa8] sm:$0xff]
        %v5015 = vld [vmem:[%s4992 + $0xb0] sm:$0xff]
        %v5016 = vld [vmem:[%s4992 + $0xb8] sm:$0xff]
        %v5017 = vld [vmem:[%s4992 + $0xc0] sm:$0xff]
        %v5018 = vld [vmem:[%s4992 + $0xc8] sm:$0xff]
        %v5019 = vld [vmem:[%s4992 + $0xd0] sm:$0xff]
        %v5020 = vld [vmem:[%s4992 + $0xd8] sm:$0xff]
        %v5021 = vld [vmem:[%s4992 + $0xe0] sm:$0xff]
        %v5022 = vld [vmem:[%s4992 + $0xe8] sm:$0xff]
        %v5023 = vld [vmem:[%s4992 + $0xf0] sm:$0xff]
        %v5024 = vld [vmem:[%s4992 + $0xf8] sm:$0xff]
        %v5025 = vld [vmem:[%s4992 + $0x100] sm:$0xff]
        %v5026 = vld [vmem:[%s4992 + $0x108] sm:$0xff]
        %v5027 = vld [vmem:[%s4992 + $0x110] sm:$0xff]
        %v5028 = vld [vmem:[%s4992 + $0x118] sm:$0xff]
        %v5029 = vld [vmem:[%s4992 + $0x120] sm:$0xff]
        %v5030 = vld [vmem:[%s4992 + $0x128] sm:$0xff]
        %v5031 = vld [vmem:[%s4992 + $0x130] sm:$0xff]
        %v5032 = vld [vmem:[%s4992 + $0x138] sm:$0xff]
        %v5033 = vld [vmem:[%s4992 + $0x140] sm:$0xff]
        %v5034 = vld [vmem:[%s4992 + $0x148] sm:$0xff]
        %v5035 = vld [vmem:[%s4992 + $0x150] sm:$0xff]
        %v5036 = vld [vmem:[%s4992 + $0x158] sm:$0xff]
        %v5037 = vld [vmem:[%s4992 + $0x160] sm:$0xff]
        %v5038 = vld [vmem:[%s4992 + $0x168] sm:$0xff]
        %v5039 = vld [vmem:[%s4992 + $0x170] sm:$0xff]
        %v5040 = vld [vmem:[%s4992 + $0x178] sm:$0xff]
        %v5041 = vld [vmem:[%s4992 + $0x180] sm:$0xff]
        %v5042 = vld [vmem:[%s4992 + $0x188] sm:$0xff]
        %v5043 = vld [vmem:[%s4992 + $0x190] sm:$0xff]
        %v5044 = vld [vmem:[%s4992 + $0x198] sm:$0xff]
        %v5045 = vld [vmem:[%s4992 + $0x1a0] sm:$0xff]
        %v5046 = vld [vmem:[%s4992 + $0x1a8] sm:$0xff]
        %v5047 = vld [vmem:[%s4992 + $0x1b0] sm:$0xff]
        %v5048 = vld [vmem:[%s4992 + $0x1b8] sm:$0xff]
        %v5049 = vld [vmem:[%s4992 + $0x1c0] sm:$0xff]
        %v5050 = vld [vmem:[%s4992 + $0x1c8] sm:$0xff]
        %v5051 = vld [vmem:[%s4992 + $0x1d0] sm:$0xff]
        %v5052 = vld [vmem:[%s4992 + $0x1d8] sm:$0xff]
        %v5053 = vld [vmem:[%s4992 + $0x1e0] sm:$0xff]
        %v5054 = vld [vmem:[%s4992 + $0x1e8] sm:$0xff]
        %v5055 = vld [vmem:[%s4992 + $0x1f0] sm:$0xff]
        %v5056 = vld [vmem:[%s4992 + $0x1f8] sm:$0xff]
        %v5057 = vld [vmem:[%s4992 + $0x200] sm:$0xff]
        %v5058 = vld [vmem:[%s4992 + $0x208] sm:$0xff]
        %v5059 = vld [vmem:[%s4992 + $0x210] sm:$0xff]
        %v5060 = vld [vmem:[%s4992 + $0x218] sm:$0xff]
        %v5061 = vld [vmem:[%s4992 + $0x220] sm:$0xff]
        %v5062 = vld [vmem:[%s4992 + $0x228] sm:$0xff]
        %v5063 = vld [vmem:[%s4992 + $0x230] sm:$0xff]
        %v5064 = vld [vmem:[%s4992 + $0x238] sm:$0xff]
        %v5065 = vld [vmem:[%s4992 + $0x240] sm:$0xff]
        %v5066 = vld [vmem:[%s4992 + $0x248] sm:$0xff]
        %v5067 = vld [vmem:[%s4992 + $0x250] sm:$0xff]
        %v5068 = vld [vmem:[%s4992 + $0x258] sm:$0xff]
        %v5069 = vld [vmem:[%s4992 + $0x260] sm:$0xff]
        %v5070 = vld [vmem:[%s4992 + $0x268] sm:$0xff]
        %v5071 = vld [vmem:[%s4992 + $0x270] sm:$0xff]
        %v5072 = vld [vmem:[%s4992 + $0x278] sm:$0xff]
        %v5073 = vld [vmem:[%s4992 + $0x280] sm:$0xff]
        %v5074 = vld [vmem:[%s4992 + $0x288] sm:$0xff]
        %v5075 = vld [vmem:[%s4992 + $0x290] sm:$0xff]
        %v5076 = vld [vmem:[%s4992 + $0x298] sm:$0xff]
        %v5077 = vld [vmem:[%s4992 + $0x2a0] sm:$0xff]
        %v5078 = vld [vmem:[%s4992 + $0x2a8] sm:$0xff]
        %v5079 = vld [vmem:[%s4992 + $0x2b0] sm:$0xff]
        %v5080 = vld [vmem:[%s4992 + $0x2b8] sm:$0xff]
        %v5081 = vld [vmem:[%s4992 + $0x2c0] sm:$0xff]
        %v5082 = vld [vmem:[%s4992 + $0x2c8] sm:$0xff]
        %v5083 = vld [vmem:[%s4992 + $0x2d0] sm:$0xff]
        %v5084 = vld [vmem:[%s4992 + $0x2d8] sm:$0xff]
        %v5085 = vld [vmem:[%s4992 + $0x2e0] sm:$0xff]
        %v5086 = vld [vmem:[%s4992 + $0x2e8] sm:$0xff]
        %v5087 = vld [vmem:[%s4992 + $0x2f0] sm:$0xff]
        %v5088 = vld [vmem:[%s4992 + $0x2f8] sm:$0xff]
        %v5089 = vld [vmem:[%s4992 + $0x300] sm:$0xff]
        %v5090 = vld [vmem:[%s4992 + $0x308] sm:$0xff]
        %v5091 = vld [vmem:[%s4992 + $0x310] sm:$0xff]
        %v5092 = vld [vmem:[%s4992 + $0x318] sm:$0xff]
        %v5093 = vld [vmem:[%s4992 + $0x320] sm:$0xff]
        %v5094 = vld [vmem:[%s4992 + $0x328] sm:$0xff]
        %v5095 = vld [vmem:[%s4992 + $0x330] sm:$0xff]
        %v5096 = vld [vmem:[%s4992 + $0x338] sm:$0xff]
        %v5097 = vld [vmem:[%s4992 + $0x340] sm:$0xff]
        %v5098 = vld [vmem:[%s4992 + $0x348] sm:$0xff]
        %v5099 = vld [vmem:[%s4992 + $0x350] sm:$0xff]
        %v5100 = vld [vmem:[%s4992 + $0x358] sm:$0xff]
        %v5101 = vld [vmem:[%s4992 + $0x360] sm:$0xff]
        %v5102 = vld [vmem:[%s4992 + $0x368] sm:$0xff]
        %v5103 = vld [vmem:[%s4992 + $0x370] sm:$0xff]
        %v5104 = vld [vmem:[%s4992 + $0x378] sm:$0xff]
        %v5105 = vld [vmem:[%s4992 + $0x380] sm:$0xff]
        %v5106 = vld [vmem:[%s4992 + $0x388] sm:$0xff]
        %v5107 = vld [vmem:[%s4992 + $0x390] sm:$0xff]
        %v5108 = vld [vmem:[%s4992 + $0x398] sm:$0xff]
        %v5109 = vld [vmem:[%s4992 + $0x3a0] sm:$0xff]
        %v5110 = vld [vmem:[%s4992 + $0x3a8] sm:$0xff]
        %v5111 = vld [vmem:[%s4992 + $0x3b0] sm:$0xff]
        %v5112 = vld [vmem:[%s4992 + $0x3b8] sm:$0xff]
        %v5113 = vld [vmem:[%s4992 + $0x3c0] sm:$0xff]
        %v5114 = vld [vmem:[%s4992 + $0x3c8] sm:$0xff]
        %v5115 = vld [vmem:[%s4992 + $0x3d0] sm:$0xff]
        %v5116 = vld [vmem:[%s4992 + $0x3d8] sm:$0xff]
        %v5117 = vld [vmem:[%s4992 + $0x3e0] sm:$0xff]
        %v5118 = vld [vmem:[%s4992 + $0x3e8] sm:$0xff]
        %v5119 = vld [vmem:[%s4992 + $0x3f0] sm:$0xff]
        %v5120 = vld [vmem:[%s4992 + $0x3f8] sm:$0xff]
        %v5121 = vld [vmem:[%s4992 + $0x400] sm:$0xff]
        %v5122 = vld [vmem:[%s4992 + $0x408] sm:$0xff]
        %v5123 = vld [vmem:[%s4992 + $0x410] sm:$0xff]
        %v5124 = vld [vmem:[%s4992 + $0x418] sm:$0xff]
        %v5125 = vld [vmem:[%s4992 + $0x420] sm:$0xff]
        %v5126 = vld [vmem:[%s4992 + $0x428] sm:$0xff]
        %v5127 = vld [vmem:[%s4992 + $0x430] sm:$0xff]
        %v5128 = vld [vmem:[%s4992 + $0x438] sm:$0xff]
        %v5129 = vld [vmem:[%s4992 + $0x440] sm:$0xff]
        %v5130 = vld [vmem:[%s4992 + $0x448] sm:$0xff]
        %v5131 = vld [vmem:[%s4992 + $0x450] sm:$0xff]
        %v5132 = vld [vmem:[%s4992 + $0x458] sm:$0xff]
        %v5133 = vld [vmem:[%s4992 + $0x460] sm:$0xff]
        %v5134 = vld [vmem:[%s4992 + $0x468] sm:$0xff]
        %v5135 = vld [vmem:[%s4992 + $0x470] sm:$0xff]
        %v5136 = vld [vmem:[%s4992 + $0x478] sm:$0xff]
        %v5137 = vld [vmem:[%s4992 + $0x480] sm:$0xff]
        %v5138 = vld [vmem:[%s4992 + $0x488] sm:$0xff]
        %v5139 = vld [vmem:[%s4992 + $0x490] sm:$0xff]
        %v5140 = vld [vmem:[%s4992 + $0x498] sm:$0xff]
        %v5141 = vld [vmem:[%s4992 + $0x4a0] sm:$0xff]
        %v5142 = vld [vmem:[%s4992 + $0x4a8] sm:$0xff]
        %v5143 = vld [vmem:[%s4992 + $0x4b0] sm:$0xff]
        %v5144 = vld [vmem:[%s4992 + $0x4b8] sm:$0xff]
        %v5145 = vld [vmem:[%s4992 + $0x4c0] sm:$0xff]
        %v5146 = vld [vmem:[%s4992 + $0x4c8] sm:$0xff]
        %v5147 = vld [vmem:[%s4992 + $0x4d0] sm:$0xff]
        %v5148 = vld [vmem:[%s4992 + $0x4d8] sm:$0xff]
        %v5149 = vld [vmem:[%s4992 + $0x4e0] sm:$0xff]
        %v5150 = vld [vmem:[%s4992 + $0x4e8] sm:$0xff]
        %v5151 = vld [vmem:[%s4992 + $0x4f0] sm:$0xff]
        %v5152 = vld [vmem:[%s4992 + $0x4f8] sm:$0xff]
        %s5153 = scalar_lea.vmem [#allocation9], 6
        %v5154 = vld [vmem:[%s5153] sm:$0x3]
        %v5156 = vlaneseq
        %v5157 = vshrl.u32 %v5156, 7
        %v5158 = vsub.s32 0, %v5157
        %v5159 = vrot.slane %v5154, %v5158
        %v5160 = vlaneseq
        %v5161 = vshrl.u32 %v5160, 7
        %v5162 = vsub.s32 1, %v5161
        %v5163 = vrot.slane %v5154, %v5162
        %v5176 = vunpack.c.l.b16 %v4982
        %v5177 = vunpack.c.h.b16 %v4982
        %v5178 = vunpack.c.l.b16 %v4983
        %v5179 = vunpack.c.h.b16 %v4983
        %v5180 = vunpack.c.l.b16 %v4984
        %v5181 = vunpack.c.h.b16 %v4984
        %v5182 = vunpack.c.l.b16 %v4985
        %v5183 = vunpack.c.h.b16 %v4985
        %v5184 = vunpack.c.l.b16 %v4986
        %v5185 = vunpack.c.h.b16 %v4986
        %v5186 = vunpack.c.l.b16 %v4987
        %v5187 = vunpack.c.h.b16 %v4987
        %v5188 = vunpack.c.l.b16 %v4988
        %v5189 = vunpack.c.h.b16 %v4988
        %v5190 = vunpack.c.l.b16 %v4989
        %v5191 = vunpack.c.h.b16 %v4989
        %v5192 = vunpack.c.l.b16 %v4990
        %v5193 = vunpack.c.h.b16 %v4990
        %v5194 = vunpack.c.l.b16 %v4991
        %v5195 = vunpack.c.h.b16 %v4991
        %v5196 = vpack.c.b16 %v5186, %v5176
        %v5197 = vpack.c.b16 %v5187, %v5177
        %v5198 = vpack.c.b16 %v5188, %v5178
        %v5199 = vpack.c.b16 %v5189, %v5179
        %v5200 = vpack.c.b16 %v5190, %v5180
        %v5201 = vpack.c.b16 %v5191, %v5181
        %v5202 = vpack.c.b16 %v5192, %v5182
        %v5203 = vpack.c.b16 %v5193, %v5183
        %v5204 = vpack.c.b16 %v5194, %v5184
        %v5205 = vpack.c.b16 %v5195, %v5185
        %v5376 = vunpack.c.l.b16 %v4993
        %v5377 = vunpack.c.h.b16 %v4993
        %v5378 = vunpack.c.l.b16 %v4994
        %v5379 = vunpack.c.h.b16 %v4994
        %v5380 = vunpack.c.l.b16 %v4995
        %v5381 = vunpack.c.h.b16 %v4995
        %v5382 = vunpack.c.l.b16 %v4996
        %v5383 = vunpack.c.h.b16 %v4996
        %v5384 = vunpack.c.l.b16 %v4997
        %v5385 = vunpack.c.h.b16 %v4997
        %v5386 = vunpack.c.l.b16 %v4998
        %v5387 = vunpack.c.h.b16 %v4998
        %v5388 = vunpack.c.l.b16 %v4999
        %v5389 = vunpack.c.h.b16 %v4999
        %v5390 = vunpack.c.l.b16 %v5000
        %v5391 = vunpack.c.h.b16 %v5000
        %v5392 = vunpack.c.l.b16 %v5001
        %v5393 = vunpack.c.h.b16 %v5001
        %v5394 = vunpack.c.l.b16 %v5002
        %v5395 = vunpack.c.h.b16 %v5002
        %v5396 = vunpack.c.l.b16 %v5003
        %v5397 = vunpack.c.h.b16 %v5003
        %v5398 = vunpack.c.l.b16 %v5004
        %v5399 = vunpack.c.h.b16 %v5004
        %v5400 = vunpack.c.l.b16 %v5005
        %v5401 = vunpack.c.h.b16 %v5005
        %v5402 = vunpack.c.l.b16 %v5006
        %v5403 = vunpack.c.h.b16 %v5006
        %v5404 = vunpack.c.l.b16 %v5007
        %v5405 = vunpack.c.h.b16 %v5007
        %v5406 = vunpack.c.l.b16 %v5008
        %v5407 = vunpack.c.h.b16 %v5008
        %v5408 = vunpack.c.l.b16 %v5009
        %v5409 = vunpack.c.h.b16 %v5009
        %v5410 = vunpack.c.l.b16 %v5010
        %v5411 = vunpack.c.h.b16 %v5010
        %v5412 = vunpack.c.l.b16 %v5011
        %v5413 = vunpack.c.h.b16 %v5011
        %v5414 = vunpack.c.l.b16 %v5012
        %v5415 = vunpack.c.h.b16 %v5012
        %v5416 = vunpack.c.l.b16 %v5013
        %v5417 = vunpack.c.h.b16 %v5013
        %v5418 = vunpack.c.l.b16 %v5014
        %v5419 = vunpack.c.h.b16 %v5014
        %v5420 = vunpack.c.l.b16 %v5015
        %v5421 = vunpack.c.h.b16 %v5015
        %v5422 = vunpack.c.l.b16 %v5016
        %v5423 = vunpack.c.h.b16 %v5016
        %v5424 = vunpack.c.l.b16 %v5017
        %v5425 = vunpack.c.h.b16 %v5017
        %v5426 = vunpack.c.l.b16 %v5018
        %v5427 = vunpack.c.h.b16 %v5018
        %v5428 = vunpack.c.l.b16 %v5019
        %v5429 = vunpack.c.h.b16 %v5019
        %v5430 = vunpack.c.l.b16 %v5020
        %v5431 = vunpack.c.h.b16 %v5020
        %v5432 = vunpack.c.l.b16 %v5021
        %v5433 = vunpack.c.h.b16 %v5021
        %v5434 = vunpack.c.l.b16 %v5022
        %v5435 = vunpack.c.h.b16 %v5022
        %v5436 = vunpack.c.l.b16 %v5023
        %v5437 = vunpack.c.h.b16 %v5023
        %v5438 = vunpack.c.l.b16 %v5024
        %v5439 = vunpack.c.h.b16 %v5024
        %v5440 = vunpack.c.l.b16 %v5025
        %v5441 = vunpack.c.h.b16 %v5025
        %v5442 = vunpack.c.l.b16 %v5026
        %v5443 = vunpack.c.h.b16 %v5026
        %v5444 = vunpack.c.l.b16 %v5027
        %v5445 = vunpack.c.h.b16 %v5027
        %v5446 = vunpack.c.l.b16 %v5028
        %v5447 = vunpack.c.h.b16 %v5028
        %v5448 = vunpack.c.l.b16 %v5029
        %v5449 = vunpack.c.h.b16 %v5029
        %v5450 = vunpack.c.l.b16 %v5030
        %v5451 = vunpack.c.h.b16 %v5030
        %v5452 = vunpack.c.l.b16 %v5031
        %v5453 = vunpack.c.h.b16 %v5031
        %v5454 = vunpack.c.l.b16 %v5032
        %v5455 = vunpack.c.h.b16 %v5032
        %v5456 = vunpack.c.l.b16 %v5033
        %v5457 = vunpack.c.h.b16 %v5033
        %v5458 = vunpack.c.l.b16 %v5034
        %v5459 = vunpack.c.h.b16 %v5034
        %v5460 = vunpack.c.l.b16 %v5035
        %v5461 = vunpack.c.h.b16 %v5035
        %v5462 = vunpack.c.l.b16 %v5036
        %v5463 = vunpack.c.h.b16 %v5036
        %v5464 = vunpack.c.l.b16 %v5037
        %v5465 = vunpack.c.h.b16 %v5037
        %v5466 = vunpack.c.l.b16 %v5038
        %v5467 = vunpack.c.h.b16 %v5038
        %v5468 = vunpack.c.l.b16 %v5039
        %v5469 = vunpack.c.h.b16 %v5039
        %v5470 = vunpack.c.l.b16 %v5040
        %v5471 = vunpack.c.h.b16 %v5040
        %v5472 = vunpack.c.l.b16 %v5041
        %v5473 = vunpack.c.h.b16 %v5041
        %v5474 = vunpack.c.l.b16 %v5042
        %v5475 = vunpack.c.h.b16 %v5042
        %v5476 = vunpack.c.l.b16 %v5043
        %v5477 = vunpack.c.h.b16 %v5043
        %v5478 = vunpack.c.l.b16 %v5044
        %v5479 = vunpack.c.h.b16 %v5044
        %v5480 = vunpack.c.l.b16 %v5045
        %v5481 = vunpack.c.h.b16 %v5045
        %v5482 = vunpack.c.l.b16 %v5046
        %v5483 = vunpack.c.h.b16 %v5046
        %v5484 = vunpack.c.l.b16 %v5047
        %v5485 = vunpack.c.h.b16 %v5047
        %v5486 = vunpack.c.l.b16 %v5048
        %v5487 = vunpack.c.h.b16 %v5048
        %v5488 = vunpack.c.l.b16 %v5049
        %v5489 = vunpack.c.h.b16 %v5049
        %v5490 = vunpack.c.l.b16 %v5050
        %v5491 = vunpack.c.h.b16 %v5050
        %v5492 = vunpack.c.l.b16 %v5051
        %v5493 = vunpack.c.h.b16 %v5051
        %v5494 = vunpack.c.l.b16 %v5052
        %v5495 = vunpack.c.h.b16 %v5052
        %v5496 = vunpack.c.l.b16 %v5053
        %v5497 = vunpack.c.h.b16 %v5053
        %v5498 = vunpack.c.l.b16 %v5054
        %v5499 = vunpack.c.h.b16 %v5054
        %v5500 = vunpack.c.l.b16 %v5055
        %v5501 = vunpack.c.h.b16 %v5055
        %v5502 = vunpack.c.l.b16 %v5056
        %v5503 = vunpack.c.h.b16 %v5056
        %v5504 = vunpack.c.l.b16 %v5057
        %v5505 = vunpack.c.h.b16 %v5057
        %v5506 = vunpack.c.l.b16 %v5058
        %v5507 = vunpack.c.h.b16 %v5058
        %v5508 = vunpack.c.l.b16 %v5059
        %v5509 = vunpack.c.h.b16 %v5059
        %v5510 = vunpack.c.l.b16 %v5060
        %v5511 = vunpack.c.h.b16 %v5060
        %v5512 = vunpack.c.l.b16 %v5061
        %v5513 = vunpack.c.h.b16 %v5061
        %v5514 = vunpack.c.l.b16 %v5062
        %v5515 = vunpack.c.h.b16 %v5062
        %v5516 = vunpack.c.l.b16 %v5063
        %v5517 = vunpack.c.h.b16 %v5063
        %v5518 = vunpack.c.l.b16 %v5064
        %v5519 = vunpack.c.h.b16 %v5064
        %v5520 = vunpack.c.l.b16 %v5065
        %v5521 = vunpack.c.h.b16 %v5065
        %v5522 = vunpack.c.l.b16 %v5066
        %v5523 = vunpack.c.h.b16 %v5066
        %v5524 = vunpack.c.l.b16 %v5067
        %v5525 = vunpack.c.h.b16 %v5067
        %v5526 = vunpack.c.l.b16 %v5068
        %v5527 = vunpack.c.h.b16 %v5068
        %v5528 = vunpack.c.l.b16 %v5069
        %v5529 = vunpack.c.h.b16 %v5069
        %v5530 = vunpack.c.l.b16 %v5070
        %v5531 = vunpack.c.h.b16 %v5070
        %v5532 = vunpack.c.l.b16 %v5071
        %v5533 = vunpack.c.h.b16 %v5071
        %v5534 = vunpack.c.l.b16 %v5072
        %v5535 = vunpack.c.h.b16 %v5072
        %v5536 = vunpack.c.l.b16 %v5073
        %v5537 = vunpack.c.h.b16 %v5073
        %v5538 = vunpack.c.l.b16 %v5074
        %v5539 = vunpack.c.h.b16 %v5074
        %v5540 = vunpack.c.l.b16 %v5075
        %v5541 = vunpack.c.h.b16 %v5075
        %v5542 = vunpack.c.l.b16 %v5076
        %v5543 = vunpack.c.h.b16 %v5076
        %v5544 = vunpack.c.l.b16 %v5077
        %v5545 = vunpack.c.h.b16 %v5077
        %v5546 = vunpack.c.l.b16 %v5078
        %v5547 = vunpack.c.h.b16 %v5078
        %v5548 = vunpack.c.l.b16 %v5079
        %v5549 = vunpack.c.h.b16 %v5079
        %v5550 = vunpack.c.l.b16 %v5080
        %v5551 = vunpack.c.h.b16 %v5080
        %v5552 = vunpack.c.l.b16 %v5081
        %v5553 = vunpack.c.h.b16 %v5081
        %v5554 = vunpack.c.l.b16 %v5082
        %v5555 = vunpack.c.h.b16 %v5082
        %v5556 = vunpack.c.l.b16 %v5083
        %v5557 = vunpack.c.h.b16 %v5083
        %v5558 = vunpack.c.l.b16 %v5084
        %v5559 = vunpack.c.h.b16 %v5084
        %v5560 = vunpack.c.l.b16 %v5085
        %v5561 = vunpack.c.h.b16 %v5085
        %v5562 = vunpack.c.l.b16 %v5086
        %v5563 = vunpack.c.h.b16 %v5086
        %v5564 = vunpack.c.l.b16 %v5087
        %v5565 = vunpack.c.h.b16 %v5087
        %v5566 = vunpack.c.l.b16 %v5088
        %v5567 = vunpack.c.h.b16 %v5088
        %v5568 = vunpack.c.l.b16 %v5089
        %v5569 = vunpack.c.h.b16 %v5089
        %v5570 = vunpack.c.l.b16 %v5090
        %v5571 = vunpack.c.h.b16 %v5090
        %v5572 = vunpack.c.l.b16 %v5091
        %v5573 = vunpack.c.h.b16 %v5091
        %v5574 = vunpack.c.l.b16 %v5092
        %v5575 = vunpack.c.h.b16 %v5092
        %v5576 = vunpack.c.l.b16 %v5093
        %v5577 = vunpack.c.h.b16 %v5093
        %v5578 = vunpack.c.l.b16 %v5094
        %v5579 = vunpack.c.h.b16 %v5094
        %v5580 = vunpack.c.l.b16 %v5095
        %v5581 = vunpack.c.h.b16 %v5095
        %v5582 = vunpack.c.l.b16 %v5096
        %v5583 = vunpack.c.h.b16 %v5096
        %v5584 = vunpack.c.l.b16 %v5097
        %v5585 = vunpack.c.h.b16 %v5097
        %v5586 = vunpack.c.l.b16 %v5098
        %v5587 = vunpack.c.h.b16 %v5098
        %v5588 = vunpack.c.l.b16 %v5099
        %v5589 = vunpack.c.h.b16 %v5099
        %v5590 = vunpack.c.l.b16 %v5100
        %v5591 = vunpack.c.h.b16 %v5100
        %v5592 = vunpack.c.l.b16 %v5101
        %v5593 = vunpack.c.h.b16 %v5101
        %v5594 = vunpack.c.l.b16 %v5102
        %v5595 = vunpack.c.h.b16 %v5102
        %v5596 = vunpack.c.l.b16 %v5103
        %v5597 = vunpack.c.h.b16 %v5103
        %v5598 = vunpack.c.l.b16 %v5104
        %v5599 = vunpack.c.h.b16 %v5104
        %v5600 = vunpack.c.l.b16 %v5105
        %v5601 = vunpack.c.h.b16 %v5105
        %v5602 = vunpack.c.l.b16 %v5106
        %v5603 = vunpack.c.h.b16 %v5106
        %v5604 = vunpack.c.l.b16 %v5107
        %v5605 = vunpack.c.h.b16 %v5107
        %v5606 = vunpack.c.l.b16 %v5108
        %v5607 = vunpack.c.h.b16 %v5108
        %v5608 = vunpack.c.l.b16 %v5109
        %v5609 = vunpack.c.h.b16 %v5109
        %v5610 = vunpack.c.l.b16 %v5110
        %v5611 = vunpack.c.h.b16 %v5110
        %v5612 = vunpack.c.l.b16 %v5111
        %v5613 = vunpack.c.h.b16 %v5111
        %v5614 = vunpack.c.l.b16 %v5112
        %v5615 = vunpack.c.h.b16 %v5112
        %v5616 = vunpack.c.l.b16 %v5113
        %v5617 = vunpack.c.h.b16 %v5113
        %v5618 = vunpack.c.l.b16 %v5114
        %v5619 = vunpack.c.h.b16 %v5114
        %v5620 = vunpack.c.l.b16 %v5115
        %v5621 = vunpack.c.h.b16 %v5115
        %v5622 = vunpack.c.l.b16 %v5116
        %v5623 = vunpack.c.h.b16 %v5116
        %v5624 = vunpack.c.l.b16 %v5117
        %v5625 = vunpack.c.h.b16 %v5117
        %v5626 = vunpack.c.l.b16 %v5118
        %v5627 = vunpack.c.h.b16 %v5118
        %v5628 = vunpack.c.l.b16 %v5119
        %v5629 = vunpack.c.h.b16 %v5119
        %v5630 = vunpack.c.l.b16 %v5120
        %v5631 = vunpack.c.h.b16 %v5120
        %v5632 = vunpack.c.l.b16 %v5121
        %v5633 = vunpack.c.h.b16 %v5121
        %v5634 = vunpack.c.l.b16 %v5122
        %v5635 = vunpack.c.h.b16 %v5122
        %v5636 = vunpack.c.l.b16 %v5123
        %v5637 = vunpack.c.h.b16 %v5123
        %v5638 = vunpack.c.l.b16 %v5124
        %v5639 = vunpack.c.h.b16 %v5124
        %v5640 = vunpack.c.l.b16 %v5125
        %v5641 = vunpack.c.h.b16 %v5125
        %v5642 = vunpack.c.l.b16 %v5126
        %v5643 = vunpack.c.h.b16 %v5126
        %v5644 = vunpack.c.l.b16 %v5127
        %v5645 = vunpack.c.h.b16 %v5127
        %v5646 = vunpack.c.l.b16 %v5128
        %v5647 = vunpack.c.h.b16 %v5128
        %v5648 = vunpack.c.l.b16 %v5129
        %v5649 = vunpack.c.h.b16 %v5129
        %v5650 = vunpack.c.l.b16 %v5130
        %v5651 = vunpack.c.h.b16 %v5130
        %v5652 = vunpack.c.l.b16 %v5131
        %v5653 = vunpack.c.h.b16 %v5131
        %v5654 = vunpack.c.l.b16 %v5132
        %v5655 = vunpack.c.h.b16 %v5132
        %v5656 = vunpack.c.l.b16 %v5133
        %v5657 = vunpack.c.h.b16 %v5133
        %v5658 = vunpack.c.l.b16 %v5134
        %v5659 = vunpack.c.h.b16 %v5134
        %v5660 = vunpack.c.l.b16 %v5135
        %v5661 = vunpack.c.h.b16 %v5135
        %v5662 = vunpack.c.l.b16 %v5136
        %v5663 = vunpack.c.h.b16 %v5136
        %v5664 = vunpack.c.l.b16 %v5137
        %v5665 = vunpack.c.h.b16 %v5137
        %v5666 = vunpack.c.l.b16 %v5138
        %v5667 = vunpack.c.h.b16 %v5138
        %v5668 = vunpack.c.l.b16 %v5139
        %v5669 = vunpack.c.h.b16 %v5139
        %v5670 = vunpack.c.l.b16 %v5140
        %v5671 = vunpack.c.h.b16 %v5140
        %v5672 = vunpack.c.l.b16 %v5141
        %v5673 = vunpack.c.h.b16 %v5141
        %v5674 = vunpack.c.l.b16 %v5142
        %v5675 = vunpack.c.h.b16 %v5142
        %v5676 = vunpack.c.l.b16 %v5143
        %v5677 = vunpack.c.h.b16 %v5143
        %v5678 = vunpack.c.l.b16 %v5144
        %v5679 = vunpack.c.h.b16 %v5144
        %v5680 = vunpack.c.l.b16 %v5145
        %v5681 = vunpack.c.h.b16 %v5145
        %v5682 = vunpack.c.l.b16 %v5146
        %v5683 = vunpack.c.h.b16 %v5146
        %v5684 = vunpack.c.l.b16 %v5147
        %v5685 = vunpack.c.h.b16 %v5147
        %v5686 = vunpack.c.l.b16 %v5148
        %v5687 = vunpack.c.h.b16 %v5148
        %v5688 = vunpack.c.l.b16 %v5149
        %v5689 = vunpack.c.h.b16 %v5149
        %v5690 = vunpack.c.l.b16 %v5150
        %v5691 = vunpack.c.h.b16 %v5150
        %v5692 = vunpack.c.l.b16 %v5151
        %v5693 = vunpack.c.h.b16 %v5151
        %v5694 = vunpack.c.l.b16 %v5152
        %v5695 = vunpack.c.h.b16 %v5152
        %v5696 = vpack.c.b16 %v5378, %v5376
        %v5697 = vpack.c.b16 %v5379, %v5377
        %v5698 = vpack.c.b16 %v5382, %v5380
        %v5699 = vpack.c.b16 %v5383, %v5381
        %v5700 = vpack.c.b16 %v5386, %v5384
        %v5701 = vpack.c.b16 %v5387, %v5385
        %v5702 = vpack.c.b16 %v5390, %v5388
        %v5703 = vpack.c.b16 %v5391, %v5389
        %v5704 = vpack.c.b16 %v5394, %v5392
        %v5705 = vpack.c.b16 %v5395, %v5393
        %v5706 = vpack.c.b16 %v5398, %v5396
        %v5707 = vpack.c.b16 %v5399, %v5397
        %v5708 = vpack.c.b16 %v5402, %v5400
        %v5709 = vpack.c.b16 %v5403, %v5401
        %v5710 = vpack.c.b16 %v5406, %v5404
        %v5711 = vpack.c.b16 %v5407, %v5405
        %v5712 = vpack.c.b16 %v5410, %v5408
        %v5713 = vpack.c.b16 %v5411, %v5409
        %v5714 = vpack.c.b16 %v5414, %v5412
        %v5715 = vpack.c.b16 %v5415, %v5413
        %v5716 = vpack.c.b16 %v5418, %v5416
        %v5717 = vpack.c.b16 %v5419, %v5417
        %v5718 = vpack.c.b16 %v5422, %v5420
        %v5719 = vpack.c.b16 %v5423, %v5421
        %v5720 = vpack.c.b16 %v5426, %v5424
        %v5721 = vpack.c.b16 %v5427, %v5425
        %v5722 = vpack.c.b16 %v5430, %v5428
        %v5723 = vpack.c.b16 %v5431, %v5429
        %v5724 = vpack.c.b16 %v5434, %v5432
        %v5725 = vpack.c.b16 %v5435, %v5433
        %v5726 = vpack.c.b16 %v5438, %v5436
        %v5727 = vpack.c.b16 %v5439, %v5437
        %v5728 = vpack.c.b16 %v5442, %v5440
        %v5729 = vpack.c.b16 %v5443, %v5441
        %v5730 = vpack.c.b16 %v5446, %v5444
        %v5731 = vpack.c.b16 %v5447, %v5445
        %v5732 = vpack.c.b16 %v5450, %v5448
        %v5733 = vpack.c.b16 %v5451, %v5449
        %v5734 = vpack.c.b16 %v5454, %v5452
        %v5735 = vpack.c.b16 %v5455, %v5453
        %v5736 = vpack.c.b16 %v5458, %v5456
        %v5737 = vpack.c.b16 %v5459, %v5457
        %v5738 = vpack.c.b16 %v5462, %v5460
        %v5739 = vpack.c.b16 %v5463, %v5461
        %v5740 = vpack.c.b16 %v5466, %v5464
        %v5741 = vpack.c.b16 %v5467, %v5465
        %v5742 = vpack.c.b16 %v5470, %v5468
        %v5743 = vpack.c.b16 %v5471, %v5469
        %v5744 = vpack.c.b16 %v5474, %v5472
        %v5745 = vpack.c.b16 %v5475, %v5473
        %v5746 = vpack.c.b16 %v5478, %v5476
        %v5747 = vpack.c.b16 %v5479, %v5477
        %v5748 = vpack.c.b16 %v5482, %v5480
        %v5749 = vpack.c.b16 %v5483, %v5481
        %v5750 = vpack.c.b16 %v5486, %v5484
        %v5751 = vpack.c.b16 %v5487, %v5485
        %v5752 = vpack.c.b16 %v5490, %v5488
        %v5753 = vpack.c.b16 %v5491, %v5489
        %v5754 = vpack.c.b16 %v5494, %v5492
        %v5755 = vpack.c.b16 %v5495, %v5493
        %v5756 = vpack.c.b16 %v5498, %v5496
        %v5757 = vpack.c.b16 %v5499, %v5497
        %v5758 = vpack.c.b16 %v5502, %v5500
        %v5759 = vpack.c.b16 %v5503, %v5501
        %v5760 = vpack.c.b16 %v5506, %v5504
        %v5761 = vpack.c.b16 %v5507, %v5505
        %v5762 = vpack.c.b16 %v5510, %v5508
        %v5763 = vpack.c.b16 %v5511, %v5509
        %v5764 = vpack.c.b16 %v5514, %v5512
        %v5765 = vpack.c.b16 %v5515, %v5513
        %v5766 = vpack.c.b16 %v5518, %v5516
        %v5767 = vpack.c.b16 %v5519, %v5517
        %v5768 = vpack.c.b16 %v5522, %v5520
        %v5769 = vpack.c.b16 %v5523, %v5521
        %v5770 = vpack.c.b16 %v5526, %v5524
        %v5771 = vpack.c.b16 %v5527, %v5525
        %v5772 = vpack.c.b16 %v5530, %v5528
        %v5773 = vpack.c.b16 %v5531, %v5529
        %v5774 = vpack.c.b16 %v5534, %v5532
        %v5775 = vpack.c.b16 %v5535, %v5533
        %v5776 = vpack.c.b16 %v5538, %v5536
        %v5777 = vpack.c.b16 %v5539, %v5537
        %v5778 = vpack.c.b16 %v5542, %v5540
        %v5779 = vpack.c.b16 %v5543, %v5541
        %v5780 = vpack.c.b16 %v5546, %v5544
        %v5781 = vpack.c.b16 %v5547, %v5545
        %v5782 = vpack.c.b16 %v5550, %v5548
        %v5783 = vpack.c.b16 %v5551, %v5549
        %v5784 = vpack.c.b16 %v5554, %v5552
        %v5785 = vpack.c.b16 %v5555, %v5553
        %v5786 = vpack.c.b16 %v5558, %v5556
        %v5787 = vpack.c.b16 %v5559, %v5557
        %v5788 = vpack.c.b16 %v5562, %v5560
        %v5789 = vpack.c.b16 %v5563, %v5561
        %v5790 = vpack.c.b16 %v5566, %v5564
        %v5791 = vpack.c.b16 %v5567, %v5565
        %v5792 = vpack.c.b16 %v5570, %v5568
        %v5793 = vpack.c.b16 %v5571, %v5569
        %v5794 = vpack.c.b16 %v5574, %v5572
        %v5795 = vpack.c.b16 %v5575, %v5573
        %v5796 = vpack.c.b16 %v5578, %v5576
        %v5797 = vpack.c.b16 %v5579, %v5577
        %v5798 = vpack.c.b16 %v5582, %v5580
        %v5799 = vpack.c.b16 %v5583, %v5581
        %v5800 = vpack.c.b16 %v5586, %v5584
        %v5801 = vpack.c.b16 %v5587, %v5585
        %v5802 = vpack.c.b16 %v5590, %v5588
        %v5803 = vpack.c.b16 %v5591, %v5589
        %v5804 = vpack.c.b16 %v5594, %v5592
        %v5805 = vpack.c.b16 %v5595, %v5593
        %v5806 = vpack.c.b16 %v5598, %v5596
        %v5807 = vpack.c.b16 %v5599, %v5597
        %v5808 = vpack.c.b16 %v5602, %v5600
        %v5809 = vpack.c.b16 %v5603, %v5601
        %v5810 = vpack.c.b16 %v5606, %v5604
        %v5811 = vpack.c.b16 %v5607, %v5605
        %v5812 = vpack.c.b16 %v5610, %v5608
        %v5813 = vpack.c.b16 %v5611, %v5609
        %v5814 = vpack.c.b16 %v5614, %v5612
        %v5815 = vpack.c.b16 %v5615, %v5613
        %v5816 = vpack.c.b16 %v5618, %v5616
        %v5817 = vpack.c.b16 %v5619, %v5617
        %v5818 = vpack.c.b16 %v5622, %v5620
        %v5819 = vpack.c.b16 %v5623, %v5621
        %v5820 = vpack.c.b16 %v5626, %v5624
        %v5821 = vpack.c.b16 %v5627, %v5625
        %v5822 = vpack.c.b16 %v5630, %v5628
        %v5823 = vpack.c.b16 %v5631, %v5629
        %v5824 = vpack.c.b16 %v5634, %v5632
        %v5825 = vpack.c.b16 %v5635, %v5633
        %v5826 = vpack.c.b16 %v5638, %v5636
        %v5827 = vpack.c.b16 %v5639, %v5637
        %v5828 = vpack.c.b16 %v5642, %v5640
        %v5829 = vpack.c.b16 %v5643, %v5641
        %v5830 = vpack.c.b16 %v5646, %v5644
        %v5831 = vpack.c.b16 %v5647, %v5645
        %v5832 = vpack.c.b16 %v5650, %v5648
        %v5833 = vpack.c.b16 %v5651, %v5649
        %v5834 = vpack.c.b16 %v5654, %v5652
        %v5835 = vpack.c.b16 %v5655, %v5653
        %v5836 = vpack.c.b16 %v5658, %v5656
        %v5837 = vpack.c.b16 %v5659, %v5657
        %v5838 = vpack.c.b16 %v5662, %v5660
        %v5839 = vpack.c.b16 %v5663, %v5661
        %v5840 = vpack.c.b16 %v5666, %v5664
        %v5841 = vpack.c.b16 %v5667, %v5665
        %v5842 = vpack.c.b16 %v5670, %v5668
        %v5843 = vpack.c.b16 %v5671, %v5669
        %v5844 = vpack.c.b16 %v5674, %v5672
        %v5845 = vpack.c.b16 %v5675, %v5673
        %v5846 = vpack.c.b16 %v5678, %v5676
        %v5847 = vpack.c.b16 %v5679, %v5677
        %v5848 = vpack.c.b16 %v5682, %v5680
        %v5849 = vpack.c.b16 %v5683, %v5681
        %v5850 = vpack.c.b16 %v5686, %v5684
        %v5851 = vpack.c.b16 %v5687, %v5685
        %v5852 = vpack.c.b16 %v5690, %v5688
        %v5853 = vpack.c.b16 %v5691, %v5689
        %v5854 = vpack.c.b16 %v5694, %v5692
        %v5855 = vpack.c.b16 %v5695, %v5693
        %6016 = vmatprep.subr.bf16.mxu0 %v5711
        %6017 = vmatpush1.bf16.msra.mxu0 %v5710
        %6018 = vmatprep.subr.bf16.mxu0 %v5709
        %6019 = vmatpush1.bf16.msra.mxu0 %v5708
        %6020 = vmatprep.subr.bf16.mxu0 %v5707
        %6021 = vmatpush1.bf16.msra.mxu0 %v5706
        %6022 = vmatprep.subr.bf16.mxu0 %v5705
        %6023 = vmatpush1.bf16.msra.mxu0 %v5704
        %6024 = vmatprep.subr.bf16.mxu0 %v5703
        %6025 = vmatpush1.bf16.msra.mxu0 %v5702
        %6026 = vmatprep.subr.bf16.mxu0 %v5701
        %6027 = vmatpush1.bf16.msra.mxu0 %v5700
        %6028 = vmatprep.subr.bf16.mxu0 %v5699
        %6029 = vmatpush1.bf16.msra.mxu0 %v5698
        %6030 = vmatprep.subr.bf16.mxu0 %v5697
        %6031 = vmatpush1.bf16.msra.mxu0 %v5696
        %6032 = vmatprep.subr.bf16.mxu0 %v5727
        %6033 = vmatpush2.bf16.msra.mxu0 %v5726
        %6034 = vmatprep.subr.bf16.mxu0 %v5725
        %6035 = vmatpush2.bf16.msra.mxu0 %v5724
        %6036 = vmatprep.subr.bf16.mxu0 %v5723
        %6037 = vmatpush2.bf16.msra.mxu0 %v5722
        %6038 = vmatprep.subr.bf16.mxu0 %v5721
        %6039 = vmatpush2.bf16.msra.mxu0 %v5720
        %6040 = vmatprep.subr.bf16.mxu0 %v5719
        %6041 = vmatpush2.bf16.msra.mxu0 %v5718
        %6042 = vmatprep.subr.bf16.mxu0 %v5717
        %6043 = vmatpush2.bf16.msra.mxu0 %v5716
        %6044 = vmatprep.subr.bf16.mxu0 %v5715
        %6045 = vmatpush2.bf16.msra.mxu0 %v5714
        %6046 = vmatprep.subr.bf16.mxu0 %v5713
        %6047 = vmatpush2.bf16.msra.mxu0 %v5712
        %6048 = vmatprep.mubr.bf16.mxu0 %v5197
        %6049 = vmatmul.mubr.bf16.gmra.mxu0 %v5196
        %v6050 = vpop.f32.mrf.mxu0
        %v6051 = vadd.f32 %v5159, %v6050
        %v6052 = vpop.f32.mrf.mxu0
        %v6053 = vadd.f32 %v5163, %v6052
        %v6054 = vpop.f32.mrf.mxu0
        %v6055 = vadd.f32 %v5159, %v6054
        %v6056 = vpop.f32.mrf.mxu0
        %v6057 = vadd.f32 %v5163, %v6056
        %6058 = vdwg.mxu0
        %6059 = vmatprep.subr.bf16.mxu0 %v5743
        %6060 = vmatpush1.bf16.msra.mxu0 %v5742
        %6061 = vmatprep.subr.bf16.mxu0 %v5741
        %6062 = vmatpush1.bf16.msra.mxu0 %v5740
        %6063 = vmatprep.subr.bf16.mxu0 %v5739
        %6064 = vmatpush1.bf16.msra.mxu0 %v5738
        %6065 = vmatprep.subr.bf16.mxu0 %v5737
        %6066 = vmatpush1.bf16.msra.mxu0 %v5736
        %6067 = vmatprep.subr.bf16.mxu0 %v5735
        %6068 = vmatpush1.bf16.msra.mxu0 %v5734
        %6069 = vmatprep.subr.bf16.mxu0 %v5733
        %6070 = vmatpush1.bf16.msra.mxu0 %v5732
        %6071 = vmatprep.subr.bf16.mxu0 %v5731
        %6072 = vmatpush1.bf16.msra.mxu0 %v5730
        %6073 = vmatprep.subr.bf16.mxu0 %v5729
        %6074 = vmatpush1.bf16.msra.mxu0 %v5728
        %6075 = vmatprep.subr.bf16.mxu0 %v5759
        %6076 = vmatpush2.bf16.msra.mxu0 %v5758
        %6077 = vmatprep.subr.bf16.mxu0 %v5757
        %6078 = vmatpush2.bf16.msra.mxu0 %v5756
        %6079 = vmatprep.subr.bf16.mxu0 %v5755
        %6080 = vmatpush2.bf16.msra.mxu0 %v5754
        %6081 = vmatprep.subr.bf16.mxu0 %v5753
        %6082 = vmatpush2.bf16.msra.mxu0 %v5752
        %6083 = vmatprep.subr.bf16.mxu0 %v5751
        %6084 = vmatpush2.bf16.msra.mxu0 %v5750
        %6085 = vmatprep.subr.bf16.mxu0 %v5749
        %6086 = vmatpush2.bf16.msra.mxu0 %v5748
        %6087 = vmatprep.subr.bf16.mxu0 %v5747
        %6088 = vmatpush2.bf16.msra.mxu0 %v5746
        %6089 = vmatprep.subr.bf16.mxu0 %v5745
        %6090 = vmatpush2.bf16.msra.mxu0 %v5744
        %6091 = vmatprep.mubr.bf16.mxu0 %v5199
        %6092 = vmatmul.mubr.bf16.gmra.mxu0 %v5198
        %v6093 = vpop.f32.mrf.mxu0
        %v6094 = vadd.f32 %v6051, %v6093
        %v6095 = vpop.f32.mrf.mxu0
        %v6096 = vadd.f32 %v6053, %v6095
        %v6097 = vpop.f32.mrf.mxu0
        %v6098 = vadd.f32 %v6055, %v6097
        %v6099 = vpop.f32.mrf.mxu0
        %v6100 = vadd.f32 %v6057, %v6099
        %6101 = vdwg.mxu0
        %6102 = vmatprep.subr.bf16.mxu0 %v5775
        %6103 = vmatpush1.bf16.msra.mxu0 %v5774
        %6104 = vmatprep.subr.bf16.mxu0 %v5773
        %6105 = vmatpush1.bf16.msra.mxu0 %v5772
        %6106 = vmatprep.subr.bf16.mxu0 %v5771
        %6107 = vmatpush1.bf16.msra.mxu0 %v5770
        %6108 = vmatprep.subr.bf16.mxu0 %v5769
        %6109 = vmatpush1.bf16.msra.mxu0 %v5768
        %6110 = vmatprep.subr.bf16.mxu0 %v5767
        %6111 = vmatpush1.bf16.msra.mxu0 %v5766
        %6112 = vmatprep.subr.bf16.mxu0 %v5765
        %6113 = vmatpush1.bf16.msra.mxu0 %v5764
        %6114 = vmatprep.subr.bf16.mxu0 %v5763
        %6115 = vmatpush1.bf16.msra.mxu0 %v5762
        %6116 = vmatprep.subr.bf16.mxu0 %v5761
        %6117 = vmatpush1.bf16.msra.mxu0 %v5760
        %6118 = vmatprep.subr.bf16.mxu0 %v5791
        %6119 = vmatpush2.bf16.msra.mxu0 %v5790
        %6120 = vmatprep.subr.bf16.mxu0 %v5789
        %6121 = vmatpush2.bf16.msra.mxu0 %v5788
        %6122 = vmatprep.subr.bf16.mxu0 %v5787
        %6123 = vmatpush2.bf16.msra.mxu0 %v5786
        %6124 = vmatprep.subr.bf16.mxu0 %v5785
        %6125 = vmatpush2.bf16.msra.mxu0 %v5784
        %6126 = vmatprep.subr.bf16.mxu0 %v5783
        %6127 = vmatpush2.bf16.msra.mxu0 %v5782
        %6128 = vmatprep.subr.bf16.mxu0 %v5781
        %6129 = vmatpush2.bf16.msra.mxu0 %v5780
        %6130 = vmatprep.subr.bf16.mxu0 %v5779
        %6131 = vmatpush2.bf16.msra.mxu0 %v5778
        %6132 = vmatprep.subr.bf16.mxu0 %v5777
        %6133 = vmatpush2.bf16.msra.mxu0 %v5776
        %6134 = vmatprep.mubr.bf16.mxu0 %v5201
        %6135 = vmatmul.mubr.bf16.gmra.mxu0 %v5200
        %v6136 = vpop.f32.mrf.mxu0
        %v6137 = vadd.f32 %v6094, %v6136
        %v6138 = vpop.f32.mrf.mxu0
        %v6139 = vadd.f32 %v6096, %v6138
        %v6140 = vpop.f32.mrf.mxu0
        %v6141 = vadd.f32 %v6098, %v6140
        %v6142 = vpop.f32.mrf.mxu0
        %v6143 = vadd.f32 %v6100, %v6142
        %6144 = vdwg.mxu0
        %6145 = vmatprep.subr.bf16.mxu0 %v5807
        %6146 = vmatpush1.bf16.msra.mxu0 %v5806
        %6147 = vmatprep.subr.bf16.mxu0 %v5805
        %6148 = vmatpush1.bf16.msra.mxu0 %v5804
        %6149 = vmatprep.subr.bf16.mxu0 %v5803
        %6150 = vmatpush1.bf16.msra.mxu0 %v5802
        %6151 = vmatprep.subr.bf16.mxu0 %v5801
        %6152 = vmatpush1.bf16.msra.mxu0 %v5800
        %6153 = vmatprep.subr.bf16.mxu0 %v5799
        %6154 = vmatpush1.bf16.msra.mxu0 %v5798
        %6155 = vmatprep.subr.bf16.mxu0 %v5797
        %6156 = vmatpush1.bf16.msra.mxu0 %v5796
        %6157 = vmatprep.subr.bf16.mxu0 %v5795
        %6158 = vmatpush1.bf16.msra.mxu0 %v5794
        %6159 = vmatprep.subr.bf16.mxu0 %v5793
        %6160 = vmatpush1.bf16.msra.mxu0 %v5792
        %6161 = vmatprep.subr.bf16.mxu0 %v5823
        %6162 = vmatpush2.bf16.msra.mxu0 %v5822
        %6163 = vmatprep.subr.bf16.mxu0 %v5821
        %6164 = vmatpush2.bf16.msra.mxu0 %v5820
        %6165 = vmatprep.subr.bf16.mxu0 %v5819
        %6166 = vmatpush2.bf16.msra.mxu0 %v5818
        %6167 = vmatprep.subr.bf16.mxu0 %v5817
        %6168 = vmatpush2.bf16.msra.mxu0 %v5816
        %6169 = vmatprep.subr.bf16.mxu0 %v5815
        %6170 = vmatpush2.bf16.msra.mxu0 %v5814
        %6171 = vmatprep.subr.bf16.mxu0 %v5813
        %6172 = vmatpush2.bf16.msra.mxu0 %v5812
        %6173 = vmatprep.subr.bf16.mxu0 %v5811
        %6174 = vmatpush2.bf16.msra.mxu0 %v5810
        %6175 = vmatprep.subr.bf16.mxu0 %v5809
        %6176 = vmatpush2.bf16.msra.mxu0 %v5808
        %6177 = vmatprep.mubr.bf16.mxu0 %v5203
        %6178 = vmatmul.mubr.bf16.gmra.mxu0 %v5202
        %v6179 = vpop.f32.mrf.mxu0
        %v6180 = vadd.f32 %v6137, %v6179
        %v6181 = vpop.f32.mrf.mxu0
        %v6182 = vadd.f32 %v6139, %v6181
        %v6183 = vpop.f32.mrf.mxu0
        %v6184 = vadd.f32 %v6141, %v6183
        %v6185 = vpop.f32.mrf.mxu0
        %v6186 = vadd.f32 %v6143, %v6185
        %6187 = vdwg.mxu0
        %6188 = vmatprep.subr.bf16.mxu0 %v5839
        %6189 = vmatpush1.bf16.msra.mxu0 %v5838
        %6190 = vmatprep.subr.bf16.mxu0 %v5837
        %6191 = vmatpush1.bf16.msra.mxu0 %v5836
        %6192 = vmatprep.subr.bf16.mxu0 %v5835
        %6193 = vmatpush1.bf16.msra.mxu0 %v5834
        %6194 = vmatprep.subr.bf16.mxu0 %v5833
        %6195 = vmatpush1.bf16.msra.mxu0 %v5832
        %6196 = vmatprep.subr.bf16.mxu0 %v5831
        %6197 = vmatpush1.bf16.msra.mxu0 %v5830
        %6198 = vmatprep.subr.bf16.mxu0 %v5829
        %6199 = vmatpush1.bf16.msra.mxu0 %v5828
        %6200 = vmatprep.subr.bf16.mxu0 %v5827
        %6201 = vmatpush1.bf16.msra.mxu0 %v5826
        %6202 = vmatprep.subr.bf16.mxu0 %v5825
        %6203 = vmatpush1.bf16.msra.mxu0 %v5824
        %6204 = vmatprep.subr.bf16.mxu0 %v5855
        %6205 = vmatpush2.bf16.msra.mxu0 %v5854
        %6206 = vmatprep.subr.bf16.mxu0 %v5853
        %6207 = vmatpush2.bf16.msra.mxu0 %v5852
        %6208 = vmatprep.subr.bf16.mxu0 %v5851
        %6209 = vmatpush2.bf16.msra.mxu0 %v5850
        %6210 = vmatprep.subr.bf16.mxu0 %v5849
        %6211 = vmatpush2.bf16.msra.mxu0 %v5848
        %6212 = vmatprep.subr.bf16.mxu0 %v5847
        %6213 = vmatpush2.bf16.msra.mxu0 %v5846
        %6214 = vmatprep.subr.bf16.mxu0 %v5845
        %6215 = vmatpush2.bf16.msra.mxu0 %v5844
        %6216 = vmatprep.subr.bf16.mxu0 %v5843
        %6217 = vmatpush2.bf16.msra.mxu0 %v5842
        %6218 = vmatprep.subr.bf16.mxu0 %v5841
        %6219 = vmatpush2.bf16.msra.mxu0 %v5840
        %6220 = vmatprep.mubr.bf16.mxu0 %v5205
        %6221 = vmatmul.mubr.bf16.gmra.mxu0 %v5204
        %v6222 = vpop.f32.mrf.mxu0
        %v6223 = vadd.f32 %v6180, %v6222
        %v6224 = vpop.f32.mrf.mxu0
        %v6225 = vadd.f32 %v6182, %v6224
        %v6226 = vpop.f32.mrf.mxu0
        %v6227 = vadd.f32 %v6184, %v6226
        %v6228 = vpop.f32.mrf.mxu0
        %v6229 = vadd.f32 %v6186, %v6228
        %6230 = vdwg.mxu0
        %v6231 = vadd.f32 %v6223, %v342
        %v6232 = vadd.f32 %v6225, %v344
        %v6233 = vadd.f32 %v6227, %v348
        %v6234 = vadd.f32 %v6229, %v350
        %6235 = vst [vmem:[%s261] sm:$0xff] %v6231
        %6236 = vst [vmem:[%s261 + $0x8] sm:$0xff] %v6232
        %6237 = vst [vmem:[%s261 + $0x10] sm:$0xff] %v6233
        %6238 = vst [vmem:[%s261 + $0x18] sm:$0xff] %v6234
        %p6239 = scmp.lt.s32.totalorder %s20, 1
        %s6240 = scalar_select %p6239, %s20, 1
        %s6241 = smul.addr %s6240, 4
        %s6242 = smul.addr %s6241, 8
        %s6243 = scalar_lea.vmem %s4, %s6242
        // Predicated region
        $region53: #{convnet3_forward.1} parent=35 // pred_check
          %p6244 = pneg %p127
        $region54: #{convnet3_forward.1} parent=35 // pred_check_branch
          %6246 = sbr.rel (%p6244) target = $region56
        $region55: #{convnet3_forward.1} parent=35 // pred_region
          _
        $region56: #{convnet3_forward.1} parent=35 // pred_fallthru
          _
      $region36: #{convnet3_forward.1} parent=5 // pred_fallthru
        _
      %p6247 = scmp.le.s32.totalorder 2, %s15
      // Predicated region
      $region57: #{convnet3_forward.1} parent=5 // pred_check
        %p6248 = pneg %p6247
      $region58: #{convnet3_forward.1} parent=5 // pred_check_branch
        %6250 = sbr.rel (%p6248) target = $region60
      $region59: #{convnet3_forward.1} parent=5 // pred_region
        %s6251 = ssub.s32 %s15, 2
        // Predicated region
        $region61: #{convnet3_forward.1} parent=59 // pred_check
          %p6252 = pneg %p133
        $region62: #{convnet3_forward.1} parent=59 // pred_check_branch
          %6254 = sbr.rel (%p6252) target = $region64
        $region63: #{convnet3_forward.1} parent=59 // pred_region
          %p6255 = scmp.lt.s32.totalorder %s21, 1
          %s6256 = scalar_select %p6255, %s21, 1
          %s6257 = smul.addr %s6256, 4
          %s6258 = smul.addr %s6257, 8
          %s6259 = scalar_lea.vmem %s4, %s6258
        $region64: #{convnet3_forward.1} parent=59 // pred_fallthru
          _
      $region60: #{convnet3_forward.1} parent=5 // pred_fallthru
        _
    $region6: #{convnet3_forward.1} parent=1 // loop_footer
      %s19 = sadd.s32 1, %s15
    $region7: #{convnet3_forward.1} parent=1 // loop_footer_branch
      %14 = sbr.rel target = $region3
    $region8: #{convnet3_forward.1} parent=1 // loop_exit
      _
    %6260 = vsyncpa [#allocation5], 1
    %s6261 = scalar_lea.sflag [#allocation5], 1
    %6262 = vsyncpa %s6261, 1
    %6263 = vsyncpa [#allocation7], 1
    %6264 = vsyncpa [#allocation10], 1

</llo_original>
